<compile_context>
chip_gen: v7x
topology: tpu7x:2x2x1
jax: 0.10.0
libtpu: 0.0.40
codegen_flags: <defaults>
</compile_context>

<pallas_src>
import jax
import jax.numpy as jnp
from jax.experimental import pallas as pl
from jax.experimental.pallas import tpu as pltpu

N, C, H, W = 1, 1152, 7, 7
KH, KW = 3, 3
EPS = 1e-5

CB = 384                 # in-kernel channel sub-block (3 lane tiles; 1152 = 3*384)
PAD_OFF = 1              # interior starts at sublane 1
WP = PAD_OFF + W + 1     # padded scratch width (9): halo at columns 0 and 8


def dwconv_bn_kernel(x_ref, w_ref, gamma_ref, beta_ref, o_ref, xp_ref):
    """x_ref:     (H, W, C)      channels-last input (VMEM)
       w_ref:     (KH*KW, C)     depthwise taps, k = kh*KW + kw
       gamma_ref: (1, C)
       beta_ref:  (1, C)
       o_ref:     (H, W, C)      output (lane-dense)
       xp_ref:    (H+2, WP, CB)  zero-padded scratch, reused per channel block
    """
    # Zero the small scratch ONCE; the halo stays zero for every channel
    # sub-block because only the interior is overwritten below.
    xp_ref[...] = jnp.zeros_like(xp_ref)

    inv_cnt = 1.0 / float(N * H * W)

    for cb in range(C // CB):
        c0 = cb * CB

        # fused zero padding: copy the interior as one slab (halo already 0)
        xp_ref[1:H + 1, PAD_OFF:PAD_OFF + W, :] = x_ref[:, :, c0:c0 + CB]

        # depthwise 3x3 conv; keep all H row accumulators live (~21 vregs)
        accs = [jnp.zeros((W, CB), jnp.float32) for _ in range(H)]
        for kh in range(KH):
            for kw in range(KW):
                k = kh * KW + kw
                tap = jnp.broadcast_to(w_ref[k:k + 1, c0:c0 + CB], (W, CB))
                for h in range(H):
                    accs[h] = accs[h] + xp_ref[h + kh, kw:kw + W, :] * tap

        # BatchNorm2d stats (training mode: biased batch variance).
        # Accumulate elementwise partials; one sublane reduce at the end.
        s1 = accs[0]
        s2 = accs[0] * accs[0]
        for h in range(1, H):
            s1 = s1 + accs[h]
            s2 = s2 + accs[h] * accs[h]
        sum1 = jnp.sum(s1, axis=0, keepdims=True)           # (1, CB)
        sum2 = jnp.sum(s2, axis=0, keepdims=True)           # (1, CB)
        mean = sum1 * inv_cnt
        var = sum2 * inv_cnt - mean * mean
        inv = jax.lax.rsqrt(var + EPS)
        scale = gamma_ref[:, c0:c0 + CB] * inv              # (1, CB)
        shift = beta_ref[:, c0:c0 + CB] - mean * scale      # (1, CB)
        scale_b = jnp.broadcast_to(scale, (W, CB))
        shift_b = jnp.broadcast_to(shift, (W, CB))

        # single output sweep: store the normalized result exactly once
        for h in range(H):
            o_ref[h, :, c0:c0 + CB] = accs[h] * scale_b + shift_b

    # TODO(synk): PyTorch BatchNorm2d(training) also updates running_mean /
    # running_var; only the forward output is produced here.


def dwconv_bn_hwc(x_hwc, w_taps, gamma, beta):
    """Channels-last core: (H, W, C) -> (H, W, C), one grid step."""
    return pl.pallas_call(
        dwconv_bn_kernel,
        out_shape=jax.ShapeDtypeStruct((H, W, C), jnp.float32),
        grid_spec=pltpu.PrefetchScalarGridSpec(
            num_scalar_prefetch=0,
            grid=(1,),
            in_specs=[
                pl.BlockSpec((H, W, C), lambda i: (0, 0, 0)),
                pl.BlockSpec((KH * KW, C), lambda i: (0, 0)),
                pl.BlockSpec((1, C), lambda i: (0, 0)),
                pl.BlockSpec((1, C), lambda i: (0, 0)),
            ],
            out_specs=pl.BlockSpec((H, W, C), lambda i: (0, 0, 0)),
            scratch_shapes=[pltpu.VMEM((H + 2, WP, CB), jnp.float32)],
        ),
        compiler_params=pltpu.CompilerParams(
            dimension_semantics=("arbitrary",)),
    )(x_hwc, w_taps, gamma, beta)


@jax.jit
def dwconv_bn(x_nchw, w_oihw, gamma, beta):
    # NCHW <-> channels-last glue only to match the PyTorch module interface.
    # TODO(synk): keep the surrounding graph NHWC and call dwconv_bn_hwc
    # directly to avoid these two full-tensor transposes.
    x_hwc = jnp.transpose(x_nchw[0], (1, 2, 0)).astype(jnp.float32)      # (H, W, C)
    w_taps = jnp.transpose(w_oihw.reshape(C, KH * KW), (1, 0)).astype(jnp.float32)
    out_hwc = dwconv_bn_hwc(x_hwc, w_taps,
                            gamma.reshape(1, C).astype(jnp.float32),
                            beta.reshape(1, C).astype(jnp.float32))
    return jnp.transpose(out_hwc, (2, 0, 1))[None]                       # (1, C, H, W)


def reference(x_nchw, w_oihw, gamma, beta):
    # pure-JAX reference: depthwise conv + training-mode batchnorm
    y = jax.lax.conv_general_dilated(
        x_nchw, w_oihw,
        window_strides=(1, 1), padding=((1, 1), (1, 1)),
        feature_group_count=C,
        dimension_numbers=("NCHW", "OIHW", "NCHW"))
    mean = jnp.mean(y, axis=(0, 2, 3), keepdims=True)
    var = jnp.mean((y - mean) ** 2, axis=(0, 2, 3), keepdims=True)
    g = gamma.reshape(1, C, 1, 1)
    b = beta.reshape(1, C, 1, 1)
    return (y - mean) * jax.lax.rsqrt(var + EPS) * g + b


if __name__ == "__main__":
    key = jax.random.PRNGKey(0)
    kx, kw, kg, kb = jax.random.split(key, 4)

    # input matching the module: (1, 1152, 7, 7)
    x = jax.random.normal(kx, (N, C, H, W), dtype=jnp.float32)
    # depthwise conv weight, PyTorch shape (out=1152, in/groups=1, 3, 3)
    w = jax.random.normal(kw, (C, 1, KH, KW), dtype=jnp.float32) * 0.1
    # BatchNorm affine params
    gamma = 1.0 + 0.1 * jax.random.normal(kg, (C,), dtype=jnp.float32)
    beta = 0.1 * jax.random.normal(kb, (C,), dtype=jnp.float32)

    out = dwconv_bn(x, w, gamma, beta)
    out = jax.block_until_ready(out)

    ref = reference(x, w, gamma, beta)
    assert out.shape == (N, C, H, W)
    err = float(jnp.max(jnp.abs(out - ref)))
    assert jnp.allclose(out, ref, rtol=1e-4, atol=1e-4), err

    print("KERNEL_OK")
</pallas_src>

<mosaic_0001>
module attributes {stable_mosaic.version = 11 : i64} {
  func.func @dwconv_bn_kernel(%arg0: i32, %arg1: memref<7x7x1152xf32, #tpu.memory_space<vmem>>, %arg2: memref<9x1152xf32, #tpu.memory_space<vmem>>, %arg3: memref<1x1152xf32, #tpu.memory_space<vmem>>, %arg4: memref<1x1152xf32, #tpu.memory_space<vmem>>, %arg5: memref<7x7x1152xf32, #tpu.memory_space<vmem>>, %arg6: memref<9x9x384xf32, #tpu.memory_space<vmem>>) attributes {dimension_semantics = [#tpu.dimension_semantics<arbitrary>], iteration_bounds = array<i64: 1>, scalar_prefetch = 0 : i64, scratch_operands = 1 : i64, tpu.core_type = #tpu.core_type<tc>, window_params = [{pipeline_mode = #tpu.pipeline_mode<synchronous>, transform_indices = @transform_0, window_bounds = array<i64: 7, 7, 1152>}, {pipeline_mode = #tpu.pipeline_mode<synchronous>, transform_indices = @transform_1, window_bounds = array<i64: 9, 1152>}, {pipeline_mode = #tpu.pipeline_mode<synchronous>, transform_indices = @transform_2, window_bounds = array<i64: 1, 1152>}, {pipeline_mode = #tpu.pipeline_mode<synchronous>, transform_indices = @transform_3, window_bounds = array<i64: 1, 1152>}, {pipeline_mode = #tpu.pipeline_mode<synchronous>, transform_indices = @transform_4, window_bounds = array<i64: 7, 7, 1152>}]} {
    %cst = arith.constant 0.000000e+00 : f32
    %0 = vector.broadcast %cst : f32 to vector<9x9x384xf32>
    %c0 = arith.constant 0 : index
    %c0_0 = arith.constant 0 : index
    %c0_1 = arith.constant 0 : index
    %1 = vector.load %arg6[%c0, %c0_0, %c0_1] : memref<9x9x384xf32, #tpu.memory_space<vmem>>, vector<9x9x384xf32>
    tpu.vector_store %arg6[%c0, %c0_0, %c0_1], %0 {strides = array<i32>} : memref<9x9x384xf32, #tpu.memory_space<vmem>>, vector<9x9x384xf32>,
    %c0_2 = arith.constant 0 : index
    %c0_3 = arith.constant 0 : index
    %c0_4 = arith.constant 0 : index
    %2 = vector.load %arg1[%c0_2, %c0_3, %c0_4] : memref<7x7x1152xf32, #tpu.memory_space<vmem>>, vector<7x7x384xf32>
    %c1 = arith.constant 1 : index
    %c1_5 = arith.constant 1 : index
    %c0_6 = arith.constant 0 : index
    %3 = vector.load %arg6[%c1, %c1_5, %c0_6] : memref<9x9x384xf32, #tpu.memory_space<vmem>>, vector<7x7x384xf32>
    tpu.vector_store %arg6[%c1, %c1_5, %c0_6], %2 {strides = array<i32>} : memref<9x9x384xf32, #tpu.memory_space<vmem>>, vector<7x7x384xf32>,
    %cst_7 = arith.constant 0.000000e+00 : f32
    %4 = vector.broadcast %cst_7 : f32 to vector<7x384xf32>
    %cst_8 = arith.constant 0.000000e+00 : f32
    %5 = vector.broadcast %cst_8 : f32 to vector<7x384xf32>
    %cst_9 = arith.constant 0.000000e+00 : f32
    %6 = vector.broadcast %cst_9 : f32 to vector<7x384xf32>
    %cst_10 = arith.constant 0.000000e+00 : f32
    %7 = vector.broadcast %cst_10 : f32 to vector<7x384xf32>
    %cst_11 = arith.constant 0.000000e+00 : f32
    %8 = vector.broadcast %cst_11 : f32 to vector<7x384xf32>
    %cst_12 = arith.constant 0.000000e+00 : f32
    %9 = vector.broadcast %cst_12 : f32 to vector<7x384xf32>
    %cst_13 = arith.constant 0.000000e+00 : f32
    %10 = vector.broadcast %cst_13 : f32 to vector<7x384xf32>
    %c0_14 = arith.constant 0 : index
    %c0_15 = arith.constant 0 : index
    %11 = vector.load %arg2[%c0_14, %c0_15] : memref<9x1152xf32, #tpu.memory_space<vmem>>, vector<1x384xf32>
    %12 = vector.shape_cast %11 : vector<1x384xf32> to vector<1x384xf32>
    %13 = vector.broadcast %12 : vector<1x384xf32> to vector<7x384xf32>
    %c0_16 = arith.constant 0 : index
    %c0_17 = arith.constant 0 : index
    %c0_18 = arith.constant 0 : index
    %14 = vector.load %arg6[%c0_16, %c0_17, %c0_18] : memref<9x9x384xf32, #tpu.memory_space<vmem>>, vector<1x7x384xf32>
    %15 = vector.shape_cast %14 : vector<1x7x384xf32> to vector<7x384xf32>
    %16 = arith.mulf %15, %13 : vector<7x384xf32>
    %17 = arith.addf %4, %16 : vector<7x384xf32>
    %c1_19 = arith.constant 1 : index
    %c0_20 = arith.constant 0 : index
    %c0_21 = arith.constant 0 : index
    %18 = vector.load %arg6[%c1_19, %c0_20, %c0_21] : memref<9x9x384xf32, #tpu.memory_space<vmem>>, vector<1x7x384xf32>
    %19 = vector.shape_cast %18 : vector<1x7x384xf32> to vector<7x384xf32>
    %20 = arith.mulf %19, %13 : vector<7x384xf32>
    %21 = arith.addf %5, %20 : vector<7x384xf32>
    %c2 = arith.constant 2 : index
    %c0_22 = arith.constant 0 : index
    %c0_23 = arith.constant 0 : index
    %22 = vector.load %arg6[%c2, %c0_22, %c0_23] : memref<9x9x384xf32, #tpu.memory_space<vmem>>, vector<1x7x384xf32>
    %23 = vector.shape_cast %22 : vector<1x7x384xf32> to vector<7x384xf32>
    %24 = arith.mulf %23, %13 : vector<7x384xf32>
    %25 = arith.addf %6, %24 : vector<7x384xf32>
    %c3 = arith.constant 3 : index
    %c0_24 = arith.constant 0 : index
    %c0_25 = arith.constant 0 : index
    %26 = vector.load %arg6[%c3, %c0_24, %c0_25] : memref<9x9x384xf32, #tpu.memory_space<vmem>>, vector<1x7x384xf32>
    %27 = vector.shape_cast %26 : vector<1x7x384xf32> to vector<7x384xf32>
    %28 = arith.mulf %27, %13 : vector<7x384xf32>
    %29 = arith.addf %7, %28 : vector<7x384xf32>
    %c4 = arith.constant 4 : index
    %c0_26 = arith.constant 0 : index
    %c0_27 = arith.constant 0 : index
    %30 = vector.load %arg6[%c4, %c0_26, %c0_27] : memref<9x9x384xf32, #tpu.memory_space<vmem>>, vector<1x7x384xf32>
    %31 = vector.shape_cast %30 : vector<1x7x384xf32> to vector<7x384xf32>
    %32 = arith.mulf %31, %13 : vector<7x384xf32>
    %33 = arith.addf %8, %32 : vector<7x384xf32>
    %c5 = arith.constant 5 : index
    %c0_28 = arith.constant 0 : index
    %c0_29 = arith.constant 0 : index
    %34 = vector.load %arg6[%c5, %c0_28, %c0_29] : memref<9x9x384xf32, #tpu.memory_space<vmem>>, vector<1x7x384xf32>
    %35 = vector.shape_cast %34 : vector<1x7x384xf32> to vector<7x384xf32>
    %36 = arith.mulf %35, %13 : vector<7x384xf32>
    %37 = arith.addf %9, %36 : vector<7x384xf32>
    %c6 = arith.constant 6 : index
    %c0_30 = arith.constant 0 : index
    %c0_31 = arith.constant 0 : index
    %38 = vector.load %arg6[%c6, %c0_30, %c0_31] : memref<9x9x384xf32, #tpu.memory_space<vmem>>, vector<1x7x384xf32>
    %39 = vector.shape_cast %38 : vector<1x7x384xf32> to vector<7x384xf32>
    %40 = arith.mulf %39, %13 : vector<7x384xf32>
    %41 = arith.addf %10, %40 : vector<7x384xf32>
    %c1_32 = arith.constant 1 : index
    %c0_33 = arith.constant 0 : index
    %42 = vector.load %arg2[%c1_32, %c0_33] : memref<9x1152xf32, #tpu.memory_space<vmem>>, vector<1x384xf32>
    %43 = vector.shape_cast %42 : vector<1x384xf32> to vector<1x384xf32>
    %44 = vector.broadcast %43 : vector<1x384xf32> to vector<7x384xf32>
    %c0_34 = arith.constant 0 : index
    %c1_35 = arith.constant 1 : index
    %c0_36 = arith.constant 0 : index
    %45 = vector.load %arg6[%c0_34, %c1_35, %c0_36] : memref<9x9x384xf32, #tpu.memory_space<vmem>>, vector<1x7x384xf32>
    %46 = vector.shape_cast %45 : vector<1x7x384xf32> to vector<7x384xf32>
    %47 = arith.mulf %46, %44 : vector<7x384xf32>
    %48 = arith.addf %17, %47 : vector<7x384xf32>
    %c1_37 = arith.constant 1 : index
    %c1_38 = arith.constant 1 : index
    %c0_39 = arith.constant 0 : index
    %49 = vector.load %arg6[%c1_37, %c1_38, %c0_39] : memref<9x9x384xf32, #tpu.memory_space<vmem>>, vector<1x7x384xf32>
    %50 = vector.shape_cast %49 : vector<1x7x384xf32> to vector<7x384xf32>
    %51 = arith.mulf %50, %44 : vector<7x384xf32>
    %52 = arith.addf %21, %51 : vector<7x384xf32>
    %c2_40 = arith.constant 2 : index
    %c1_41 = arith.constant 1 : index
    %c0_42 = arith.constant 0 : index
    %53 = vector.load %arg6[%c2_40, %c1_41, %c0_42] : memref<9x9x384xf32, #tpu.memory_space<vmem>>, vector<1x7x384xf32>
    %54 = vector.shape_cast %53 : vector<1x7x384xf32> to vector<7x384xf32>
    %55 = arith.mulf %54, %44 : vector<7x384xf32>
    %56 = arith.addf %25, %55 : vector<7x384xf32>
    %c3_43 = arith.constant 3 : index
    %c1_44 = arith.constant 1 : index
    %c0_45 = arith.constant 0 : index
    %57 = vector.load %arg6[%c3_43, %c1_44, %c0_45] : memref<9x9x384xf32, #tpu.memory_space<vmem>>, vector<1x7x384xf32>
    %58 = vector.shape_cast %57 : vector<1x7x384xf32> to vector<7x384xf32>
    %59 = arith.mulf %58, %44 : vector<7x384xf32>
    %60 = arith.addf %29, %59 : vector<7x384xf32>
    %c4_46 = arith.constant 4 : index
    %c1_47 = arith.constant 1 : index
    %c0_48 = arith.constant 0 : index
    %61 = vector.load %arg6[%c4_46, %c1_47, %c0_48] : memref<9x9x384xf32, #tpu.memory_space<vmem>>, vector<1x7x384xf32>
    %62 = vector.shape_cast %61 : vector<1x7x384xf32> to vector<7x384xf32>
    %63 = arith.mulf %62, %44 : vector<7x384xf32>
    %64 = arith.addf %33, %63 : vector<7x384xf32>
    %c5_49 = arith.constant 5 : index
    %c1_50 = arith.constant 1 : index
    %c0_51 = arith.constant 0 : index
    %65 = vector.load %arg6[%c5_49, %c1_50, %c0_51] : memref<9x9x384xf32, #tpu.memory_space<vmem>>, vector<1x7x384xf32>
    %66 = vector.shape_cast %65 : vector<1x7x384xf32> to vector<7x384xf32>
    %67 = arith.mulf %66, %44 : vector<7x384xf32>
    %68 = arith.addf %37, %67 : vector<7x384xf32>
    %c6_52 = arith.constant 6 : index
    %c1_53 = arith.constant 1 : index
    %c0_54 = arith.constant 0 : index
    %69 = vector.load %arg6[%c6_52, %c1_53, %c0_54] : memref<9x9x384xf32, #tpu.memory_space<vmem>>, vector<1x7x384xf32>
    %70 = vector.shape_cast %69 : vector<1x7x384xf32> to vector<7x384xf32>
    %71 = arith.mulf %70, %44 : vector<7x384xf32>
    %72 = arith.addf %41, %71 : vector<7x384xf32>
    %c2_55 = arith.constant 2 : index
    %c0_56 = arith.constant 0 : index
    %73 = vector.load %arg2[%c2_55, %c0_56] : memref<9x1152xf32, #tpu.memory_space<vmem>>, vector<1x384xf32>
    %74 = vector.shape_cast %73 : vector<1x384xf32> to vector<1x384xf32>
    %75 = vector.broadcast %74 : vector<1x384xf32> to vector<7x384xf32>
    %c0_57 = arith.constant 0 : index
    %c2_58 = arith.constant 2 : index
    %c0_59 = arith.constant 0 : index
    %76 = vector.load %arg6[%c0_57, %c2_58, %c0_59] : memref<9x9x384xf32, #tpu.memory_space<vmem>>, vector<1x7x384xf32>
    %77 = vector.shape_cast %76 : vector<1x7x384xf32> to vector<7x384xf32>
    %78 = arith.mulf %77, %75 : vector<7x384xf32>
    %79 = arith.addf %48, %78 : vector<7x384xf32>
    %c1_60 = arith.constant 1 : index
    %c2_61 = arith.constant 2 : index
    %c0_62 = arith.constant 0 : index
    %80 = vector.load %arg6[%c1_60, %c2_61, %c0_62] : memref<9x9x384xf32, #tpu.memory_space<vmem>>, vector<1x7x384xf32>
    %81 = vector.shape_cast %80 : vector<1x7x384xf32> to vector<7x384xf32>
    %82 = arith.mulf %81, %75 : vector<7x384xf32>
    %83 = arith.addf %52, %82 : vector<7x384xf32>
    %c2_63 = arith.constant 2 : index
    %c2_64 = arith.constant 2 : index
    %c0_65 = arith.constant 0 : index
    %84 = vector.load %arg6[%c2_63, %c2_64, %c0_65] : memref<9x9x384xf32, #tpu.memory_space<vmem>>, vector<1x7x384xf32>
    %85 = vector.shape_cast %84 : vector<1x7x384xf32> to vector<7x384xf32>
    %86 = arith.mulf %85, %75 : vector<7x384xf32>
    %87 = arith.addf %56, %86 : vector<7x384xf32>
    %c3_66 = arith.constant 3 : index
    %c2_67 = arith.constant 2 : index
    %c0_68 = arith.constant 0 : index
    %88 = vector.load %arg6[%c3_66, %c2_67, %c0_68] : memref<9x9x384xf32, #tpu.memory_space<vmem>>, vector<1x7x384xf32>
    %89 = vector.shape_cast %88 : vector<1x7x384xf32> to vector<7x384xf32>
    %90 = arith.mulf %89, %75 : vector<7x384xf32>
    %91 = arith.addf %60, %90 : vector<7x384xf32>
    %c4_69 = arith.constant 4 : index
    %c2_70 = arith.constant 2 : index
    %c0_71 = arith.constant 0 : index
    %92 = vector.load %arg6[%c4_69, %c2_70, %c0_71] : memref<9x9x384xf32, #tpu.memory_space<vmem>>, vector<1x7x384xf32>
    %93 = vector.shape_cast %92 : vector<1x7x384xf32> to vector<7x384xf32>
    %94 = arith.mulf %93, %75 : vector<7x384xf32>
    %95 = arith.addf %64, %94 : vector<7x384xf32>
    %c5_72 = arith.constant 5 : index
    %c2_73 = arith.constant 2 : index
    %c0_74 = arith.constant 0 : index
    %96 = vector.load %arg6[%c5_72, %c2_73, %c0_74] : memref<9x9x384xf32, #tpu.memory_space<vmem>>, vector<1x7x384xf32>
    %97 = vector.shape_cast %96 : vector<1x7x384xf32> to vector<7x384xf32>
    %98 = arith.mulf %97, %75 : vector<7x384xf32>
    %99 = arith.addf %68, %98 : vector<7x384xf32>
    %c6_75 = arith.constant 6 : index
    %c2_76 = arith.constant 2 : index
    %c0_77 = arith.constant 0 : index
    %100 = vector.load %arg6[%c6_75, %c2_76, %c0_77] : memref<9x9x384xf32, #tpu.memory_space<vmem>>, vector<1x7x384xf32>
    %101 = vector.shape_cast %100 : vector<1x7x384xf32> to vector<7x384xf32>
    %102 = arith.mulf %101, %75 : vector<7x384xf32>
    %103 = arith.addf %72, %102 : vector<7x384xf32>
    %c3_78 = arith.constant 3 : index
    %c0_79 = arith.constant 0 : index
    %104 = vector.load %arg2[%c3_78, %c0_79] : memref<9x1152xf32, #tpu.memory_space<vmem>>, vector<1x384xf32>
    %105 = vector.shape_cast %104 : vector<1x384xf32> to vector<1x384xf32>
    %106 = vector.broadcast %105 : vector<1x384xf32> to vector<7x384xf32>
    %c1_80 = arith.constant 1 : index
    %c0_81 = arith.constant 0 : index
    %c0_82 = arith.constant 0 : index
    %107 = vector.load %arg6[%c1_80, %c0_81, %c0_82] : memref<9x9x384xf32, #tpu.memory_space<vmem>>, vector<1x7x384xf32>
    %108 = vector.shape_cast %107 : vector<1x7x384xf32> to vector<7x384xf32>
    %109 = arith.mulf %108, %106 : vector<7x384xf32>
    %110 = arith.addf %79, %109 : vector<7x384xf32>
    %c2_83 = arith.constant 2 : index
    %c0_84 = arith.constant 0 : index
    %c0_85 = arith.constant 0 : index
    %111 = vector.load %arg6[%c2_83, %c0_84, %c0_85] : memref<9x9x384xf32, #tpu.memory_space<vmem>>, vector<1x7x384xf32>
    %112 = vector.shape_cast %111 : vector<1x7x384xf32> to vector<7x384xf32>
    %113 = arith.mulf %112, %106 : vector<7x384xf32>
    %114 = arith.addf %83, %113 : vector<7x384xf32>
    %c3_86 = arith.constant 3 : index
    %c0_87 = arith.constant 0 : index
    %c0_88 = arith.constant 0 : index
    %115 = vector.load %arg6[%c3_86, %c0_87, %c0_88] : memref<9x9x384xf32, #tpu.memory_space<vmem>>, vector<1x7x384xf32>
    %116 = vector.shape_cast %115 : vector<1x7x384xf32> to vector<7x384xf32>
    %117 = arith.mulf %116, %106 : vector<7x384xf32>
    %118 = arith.addf %87, %117 : vector<7x384xf32>
    %c4_89 = arith.constant 4 : index
    %c0_90 = arith.constant 0 : index
    %c0_91 = arith.constant 0 : index
    %119 = vector.load %arg6[%c4_89, %c0_90, %c0_91] : memref<9x9x384xf32, #tpu.memory_space<vmem>>, vector<1x7x384xf32>
    %120 = vector.shape_cast %119 : vector<1x7x384xf32> to vector<7x384xf32>
    %121 = arith.mulf %120, %106 : vector<7x384xf32>
    %122 = arith.addf %91, %121 : vector<7x384xf32>
    %c5_92 = arith.constant 5 : index
    %c0_93 = arith.constant 0 : index
    %c0_94 = arith.constant 0 : index
    %123 = vector.load %arg6[%c5_92, %c0_93, %c0_94] : memref<9x9x384xf32, #tpu.memory_space<vmem>>, vector<1x7x384xf32>
    %124 = vector.shape_cast %123 : vector<1x7x384xf32> to vector<7x384xf32>
    %125 = arith.mulf %124, %106 : vector<7x384xf32>
    %126 = arith.addf %95, %125 : vector<7x384xf32>
    %c6_95 = arith.constant 6 : index
    %c0_96 = arith.constant 0 : index
    %c0_97 = arith.constant 0 : index
    %127 = vector.load %arg6[%c6_95, %c0_96, %c0_97] : memref<9x9x384xf32, #tpu.memory_space<vmem>>, vector<1x7x384xf32>
    %128 = vector.shape_cast %127 : vector<1x7x384xf32> to vector<7x384xf32>
    %129 = arith.mulf %128, %106 : vector<7x384xf32>
    %130 = arith.addf %99, %129 : vector<7x384xf32>
    %c7 = arith.constant 7 : index
    %c0_98 = arith.constant 0 : index
    %c0_99 = arith.constant 0 : index
    %131 = vector.load %arg6[%c7, %c0_98, %c0_99] : memref<9x9x384xf32, #tpu.memory_space<vmem>>, vector<1x7x384xf32>
    %132 = vector.shape_cast %131 : vector<1x7x384xf32> to vector<7x384xf32>
    %133 = arith.mulf %132, %106 : vector<7x384xf32>
    %134 = arith.addf %103, %133 : vector<7x384xf32>
    %c4_100 = arith.constant 4 : index
    %c0_101 = arith.constant 0 : index
    %135 = vector.load %arg2[%c4_100, %c0_101] : memref<9x1152xf32, #tpu.memory_space<vmem>>, vector<1x384xf32>
    %136 = vector.shape_cast %135 : vector<1x384xf32> to vector<1x384xf32>
    %137 = vector.broadcast %136 : vector<1x384xf32> to vector<7x384xf32>
    %c1_102 = arith.constant 1 : index
    %c1_103 = arith.constant 1 : index
    %c0_104 = arith.constant 0 : index
    %138 = vector.load %arg6[%c1_102, %c1_103, %c0_104] : memref<9x9x384xf32, #tpu.memory_space<vmem>>, vector<1x7x384xf32>
    %139 = vector.shape_cast %138 : vector<1x7x384xf32> to vector<7x384xf32>
    %140 = arith.mulf %139, %137 : vector<7x384xf32>
    %141 = arith.addf %110, %140 : vector<7x384xf32>
    %c2_105 = arith.constant 2 : index
    %c1_106 = arith.constant 1 : index
    %c0_107 = arith.constant 0 : index
    %142 = vector.load %arg6[%c2_105, %c1_106, %c0_107] : memref<9x9x384xf32, #tpu.memory_space<vmem>>, vector<1x7x384xf32>
    %143 = vector.shape_cast %142 : vector<1x7x384xf32> to vector<7x384xf32>
    %144 = arith.mulf %143, %137 : vector<7x384xf32>
    %145 = arith.addf %114, %144 : vector<7x384xf32>
    %c3_108 = arith.constant 3 : index
    %c1_109 = arith.constant 1 : index
    %c0_110 = arith.constant 0 : index
    %146 = vector.load %arg6[%c3_108, %c1_109, %c0_110] : memref<9x9x384xf32, #tpu.memory_space<vmem>>, vector<1x7x384xf32>
    %147 = vector.shape_cast %146 : vector<1x7x384xf32> to vector<7x384xf32>
    %148 = arith.mulf %147, %137 : vector<7x384xf32>
    %149 = arith.addf %118, %148 : vector<7x384xf32>
    %c4_111 = arith.constant 4 : index
    %c1_112 = arith.constant 1 : index
    %c0_113 = arith.constant 0 : index
    %150 = vector.load %arg6[%c4_111, %c1_112, %c0_113] : memref<9x9x384xf32, #tpu.memory_space<vmem>>, vector<1x7x384xf32>
    %151 = vector.shape_cast %150 : vector<1x7x384xf32> to vector<7x384xf32>
    %152 = arith.mulf %151, %137 : vector<7x384xf32>
    %153 = arith.addf %122, %152 : vector<7x384xf32>
    %c5_114 = arith.constant 5 : index
    %c1_115 = arith.constant 1 : index
    %c0_116 = arith.constant 0 : index
    %154 = vector.load %arg6[%c5_114, %c1_115, %c0_116] : memref<9x9x384xf32, #tpu.memory_space<vmem>>, vector<1x7x384xf32>
    %155 = vector.shape_cast %154 : vector<1x7x384xf32> to vector<7x384xf32>
    %156 = arith.mulf %155, %137 : vector<7x384xf32>
    %157 = arith.addf %126, %156 : vector<7x384xf32>
    %c6_117 = arith.constant 6 : index
    %c1_118 = arith.constant 1 : index
    %c0_119 = arith.constant 0 : index
    %158 = vector.load %arg6[%c6_117, %c1_118, %c0_119] : memref<9x9x384xf32, #tpu.memory_space<vmem>>, vector<1x7x384xf32>
    %159 = vector.shape_cast %158 : vector<1x7x384xf32> to vector<7x384xf32>
    %160 = arith.mulf %159, %137 : vector<7x384xf32>
    %161 = arith.addf %130, %160 : vector<7x384xf32>
    %c7_120 = arith.constant 7 : index
    %c1_121 = arith.constant 1 : index
    %c0_122 = arith.constant 0 : index
    %162 = vector.load %arg6[%c7_120, %c1_121, %c0_122] : memref<9x9x384xf32, #tpu.memory_space<vmem>>, vector<1x7x384xf32>
    %163 = vector.shape_cast %162 : vector<1x7x384xf32> to vector<7x384xf32>
    %164 = arith.mulf %163, %137 : vector<7x384xf32>
    %165 = arith.addf %134, %164 : vector<7x384xf32>
    %c5_123 = arith.constant 5 : index
    %c0_124 = arith.constant 0 : index
    %166 = vector.load %arg2[%c5_123, %c0_124] : memref<9x1152xf32, #tpu.memory_space<vmem>>, vector<1x384xf32>
    %167 = vector.shape_cast %166 : vector<1x384xf32> to vector<1x384xf32>
    %168 = vector.broadcast %167 : vector<1x384xf32> to vector<7x384xf32>
    %c1_125 = arith.constant 1 : index
    %c2_126 = arith.constant 2 : index
    %c0_127 = arith.constant 0 : index
    %169 = vector.load %arg6[%c1_125, %c2_126, %c0_127] : memref<9x9x384xf32, #tpu.memory_space<vmem>>, vector<1x7x384xf32>
    %170 = vector.shape_cast %169 : vector<1x7x384xf32> to vector<7x384xf32>
    %171 = arith.mulf %170, %168 : vector<7x384xf32>
    %172 = arith.addf %141, %171 : vector<7x384xf32>
    %c2_128 = arith.constant 2 : index
    %c2_129 = arith.constant 2 : index
    %c0_130 = arith.constant 0 : index
    %173 = vector.load %arg6[%c2_128, %c2_129, %c0_130] : memref<9x9x384xf32, #tpu.memory_space<vmem>>, vector<1x7x384xf32>
    %174 = vector.shape_cast %173 : vector<1x7x384xf32> to vector<7x384xf32>
    %175 = arith.mulf %174, %168 : vector<7x384xf32>
    %176 = arith.addf %145, %175 : vector<7x384xf32>
    %c3_131 = arith.constant 3 : index
    %c2_132 = arith.constant 2 : index
    %c0_133 = arith.constant 0 : index
    %177 = vector.load %arg6[%c3_131, %c2_132, %c0_133] : memref<9x9x384xf32, #tpu.memory_space<vmem>>, vector<1x7x384xf32>
    %178 = vector.shape_cast %177 : vector<1x7x384xf32> to vector<7x384xf32>
    %179 = arith.mulf %178, %168 : vector<7x384xf32>
    %180 = arith.addf %149, %179 : vector<7x384xf32>
    %c4_134 = arith.constant 4 : index
    %c2_135 = arith.constant 2 : index
    %c0_136 = arith.constant 0 : index
    %181 = vector.load %arg6[%c4_134, %c2_135, %c0_136] : memref<9x9x384xf32, #tpu.memory_space<vmem>>, vector<1x7x384xf32>
    %182 = vector.shape_cast %181 : vector<1x7x384xf32> to vector<7x384xf32>
    %183 = arith.mulf %182, %168 : vector<7x384xf32>
    %184 = arith.addf %153, %183 : vector<7x384xf32>
    %c5_137 = arith.constant 5 : index
    %c2_138 = arith.constant 2 : index
    %c0_139 = arith.constant 0 : index
    %185 = vector.load %arg6[%c5_137, %c2_138, %c0_139] : memref<9x9x384xf32, #tpu.memory_space<vmem>>, vector<1x7x384xf32>
    %186 = vector.shape_cast %185 : vector<1x7x384xf32> to vector<7x384xf32>
    %187 = arith.mulf %186, %168 : vector<7x384xf32>
    %188 = arith.addf %157, %187 : vector<7x384xf32>
    %c6_140 = arith.constant 6 : index
    %c2_141 = arith.constant 2 : index
    %c0_142 = arith.constant 0 : index
    %189 = vector.load %arg6[%c6_140, %c2_141, %c0_142] : memref<9x9x384xf32, #tpu.memory_space<vmem>>, vector<1x7x384xf32>
    %190 = vector.shape_cast %189 : vector<1x7x384xf32> to vector<7x384xf32>
    %191 = arith.mulf %190, %168 : vector<7x384xf32>
    %192 = arith.addf %161, %191 : vector<7x384xf32>
    %c7_143 = arith.constant 7 : index
    %c2_144 = arith.constant 2 : index
    %c0_145 = arith.constant 0 : index
    %193 = vector.load %arg6[%c7_143, %c2_144, %c0_145] : memref<9x9x384xf32, #tpu.memory_space<vmem>>, vector<1x7x384xf32>
    %194 = vector.shape_cast %193 : vector<1x7x384xf32> to vector<7x384xf32>
    %195 = arith.mulf %194, %168 : vector<7x384xf32>
    %196 = arith.addf %165, %195 : vector<7x384xf32>
    %c6_146 = arith.constant 6 : index
    %c0_147 = arith.constant 0 : index
    %197 = vector.load %arg2[%c6_146, %c0_147] : memref<9x1152xf32, #tpu.memory_space<vmem>>, vector<1x384xf32>
    %198 = vector.shape_cast %197 : vector<1x384xf32> to vector<1x384xf32>
    %199 = vector.broadcast %198 : vector<1x384xf32> to vector<7x384xf32>
    %c2_148 = arith.constant 2 : index
    %c0_149 = arith.constant 0 : index
    %c0_150 = arith.constant 0 : index
    %200 = vector.load %arg6[%c2_148, %c0_149, %c0_150] : memref<9x9x384xf32, #tpu.memory_space<vmem>>, vector<1x7x384xf32>
    %201 = vector.shape_cast %200 : vector<1x7x384xf32> to vector<7x384xf32>
    %202 = arith.mulf %201, %199 : vector<7x384xf32>
    %203 = arith.addf %172, %202 : vector<7x384xf32>
    %c3_151 = arith.constant 3 : index
    %c0_152 = arith.constant 0 : index
    %c0_153 = arith.constant 0 : index
    %204 = vector.load %arg6[%c3_151, %c0_152, %c0_153] : memref<9x9x384xf32, #tpu.memory_space<vmem>>, vector<1x7x384xf32>
    %205 = vector.shape_cast %204 : vector<1x7x384xf32> to vector<7x384xf32>
    %206 = arith.mulf %205, %199 : vector<7x384xf32>
    %207 = arith.addf %176, %206 : vector<7x384xf32>
    %c4_154 = arith.constant 4 : index
    %c0_155 = arith.constant 0 : index
    %c0_156 = arith.constant 0 : index
    %208 = vector.load %arg6[%c4_154, %c0_155, %c0_156] : memref<9x9x384xf32, #tpu.memory_space<vmem>>, vector<1x7x384xf32>
    %209 = vector.shape_cast %208 : vector<1x7x384xf32> to vector<7x384xf32>
    %210 = arith.mulf %209, %199 : vector<7x384xf32>
    %211 = arith.addf %180, %210 : vector<7x384xf32>
    %c5_157 = arith.constant 5 : index
    %c0_158 = arith.constant 0 : index
    %c0_159 = arith.constant 0 : index
    %212 = vector.load %arg6[%c5_157, %c0_158, %c0_159] : memref<9x9x384xf32, #tpu.memory_space<vmem>>, vector<1x7x384xf32>
    %213 = vector.shape_cast %212 : vector<1x7x384xf32> to vector<7x384xf32>
    %214 = arith.mulf %213, %199 : vector<7x384xf32>
    %215 = arith.addf %184, %214 : vector<7x384xf32>
    %c6_160 = arith.constant 6 : index
    %c0_161 = arith.constant 0 : index
    %c0_162 = arith.constant 0 : index
    %216 = vector.load %arg6[%c6_160, %c0_161, %c0_162] : memref<9x9x384xf32, #tpu.memory_space<vmem>>, vector<1x7x384xf32>
    %217 = vector.shape_cast %216 : vector<1x7x384xf32> to vector<7x384xf32>
    %218 = arith.mulf %217, %199 : vector<7x384xf32>
    %219 = arith.addf %188, %218 : vector<7x384xf32>
    %c7_163 = arith.constant 7 : index
    %c0_164 = arith.constant 0 : index
    %c0_165 = arith.constant 0 : index
    %220 = vector.load %arg6[%c7_163, %c0_164, %c0_165] : memref<9x9x384xf32, #tpu.memory_space<vmem>>, vector<1x7x384xf32>
    %221 = vector.shape_cast %220 : vector<1x7x384xf32> to vector<7x384xf32>
    %222 = arith.mulf %221, %199 : vector<7x384xf32>
    %223 = arith.addf %192, %222 : vector<7x384xf32>
    %c8 = arith.constant 8 : index
    %c0_166 = arith.constant 0 : index
    %c0_167 = arith.constant 0 : index
    %224 = vector.load %arg6[%c8, %c0_166, %c0_167] : memref<9x9x384xf32, #tpu.memory_space<vmem>>, vector<1x7x384xf32>
    %225 = vector.shape_cast %224 : vector<1x7x384xf32> to vector<7x384xf32>
    %226 = arith.mulf %225, %199 : vector<7x384xf32>
    %227 = arith.addf %196, %226 : vector<7x384xf32>
    %c7_168 = arith.constant 7 : index
    %c0_169 = arith.constant 0 : index
    %228 = vector.load %arg2[%c7_168, %c0_169] : memref<9x1152xf32, #tpu.memory_space<vmem>>, vector<1x384xf32>
    %229 = vector.shape_cast %228 : vector<1x384xf32> to vector<1x384xf32>
    %230 = vector.broadcast %229 : vector<1x384xf32> to vector<7x384xf32>
    %c2_170 = arith.constant 2 : index
    %c1_171 = arith.constant 1 : index
    %c0_172 = arith.constant 0 : index
    %231 = vector.load %arg6[%c2_170, %c1_171, %c0_172] : memref<9x9x384xf32, #tpu.memory_space<vmem>>, vector<1x7x384xf32>
    %232 = vector.shape_cast %231 : vector<1x7x384xf32> to vector<7x384xf32>
    %233 = arith.mulf %232, %230 : vector<7x384xf32>
    %234 = arith.addf %203, %233 : vector<7x384xf32>
    %c3_173 = arith.constant 3 : index
    %c1_174 = arith.constant 1 : index
    %c0_175 = arith.constant 0 : index
    %235 = vector.load %arg6[%c3_173, %c1_174, %c0_175] : memref<9x9x384xf32, #tpu.memory_space<vmem>>, vector<1x7x384xf32>
    %236 = vector.shape_cast %235 : vector<1x7x384xf32> to vector<7x384xf32>
    %237 = arith.mulf %236, %230 : vector<7x384xf32>
    %238 = arith.addf %207, %237 : vector<7x384xf32>
    %c4_176 = arith.constant 4 : index
    %c1_177 = arith.constant 1 : index
    %c0_178 = arith.constant 0 : index
    %239 = vector.load %arg6[%c4_176, %c1_177, %c0_178] : memref<9x9x384xf32, #tpu.memory_space<vmem>>, vector<1x7x384xf32>
    %240 = vector.shape_cast %239 : vector<1x7x384xf32> to vector<7x384xf32>
    %241 = arith.mulf %240, %230 : vector<7x384xf32>
    %242 = arith.addf %211, %241 : vector<7x384xf32>
    %c5_179 = arith.constant 5 : index
    %c1_180 = arith.constant 1 : index
    %c0_181 = arith.constant 0 : index
    %243 = vector.load %arg6[%c5_179, %c1_180, %c0_181] : memref<9x9x384xf32, #tpu.memory_space<vmem>>, vector<1x7x384xf32>
    %244 = vector.shape_cast %243 : vector<1x7x384xf32> to vector<7x384xf32>
    %245 = arith.mulf %244, %230 : vector<7x384xf32>
    %246 = arith.addf %215, %245 : vector<7x384xf32>
    %c6_182 = arith.constant 6 : index
    %c1_183 = arith.constant 1 : index
    %c0_184 = arith.constant 0 : index
    %247 = vector.load %arg6[%c6_182, %c1_183, %c0_184] : memref<9x9x384xf32, #tpu.memory_space<vmem>>, vector<1x7x384xf32>
    %248 = vector.shape_cast %247 : vector<1x7x384xf32> to vector<7x384xf32>
    %249 = arith.mulf %248, %230 : vector<7x384xf32>
    %250 = arith.addf %219, %249 : vector<7x384xf32>
    %c7_185 = arith.constant 7 : index
    %c1_186 = arith.constant 1 : index
    %c0_187 = arith.constant 0 : index
    %251 = vector.load %arg6[%c7_185, %c1_186, %c0_187] : memref<9x9x384xf32, #tpu.memory_space<vmem>>, vector<1x7x384xf32>
    %252 = vector.shape_cast %251 : vector<1x7x384xf32> to vector<7x384xf32>
    %253 = arith.mulf %252, %230 : vector<7x384xf32>
    %254 = arith.addf %223, %253 : vector<7x384xf32>
    %c8_188 = arith.constant 8 : index
    %c1_189 = arith.constant 1 : index
    %c0_190 = arith.constant 0 : index
    %255 = vector.load %arg6[%c8_188, %c1_189, %c0_190] : memref<9x9x384xf32, #tpu.memory_space<vmem>>, vector<1x7x384xf32>
    %256 = vector.shape_cast %255 : vector<1x7x384xf32> to vector<7x384xf32>
    %257 = arith.mulf %256, %230 : vector<7x384xf32>
    %258 = arith.addf %227, %257 : vector<7x384xf32>
    %c8_191 = arith.constant 8 : index
    %c0_192 = arith.constant 0 : index
    %259 = vector.load %arg2[%c8_191, %c0_192] : memref<9x1152xf32, #tpu.memory_space<vmem>>, vector<1x384xf32>
    %260 = vector.shape_cast %259 : vector<1x384xf32> to vector<1x384xf32>
    %261 = vector.broadcast %260 : vector<1x384xf32> to vector<7x384xf32>
    %c2_193 = arith.constant 2 : index
    %c2_194 = arith.constant 2 : index
    %c0_195 = arith.constant 0 : index
    %262 = vector.load %arg6[%c2_193, %c2_194, %c0_195] : memref<9x9x384xf32, #tpu.memory_space<vmem>>, vector<1x7x384xf32>
    %263 = vector.shape_cast %262 : vector<1x7x384xf32> to vector<7x384xf32>
    %264 = arith.mulf %263, %261 : vector<7x384xf32>
    %265 = arith.addf %234, %264 : vector<7x384xf32>
    %c3_196 = arith.constant 3 : index
    %c2_197 = arith.constant 2 : index
    %c0_198 = arith.constant 0 : index
    %266 = vector.load %arg6[%c3_196, %c2_197, %c0_198] : memref<9x9x384xf32, #tpu.memory_space<vmem>>, vector<1x7x384xf32>
    %267 = vector.shape_cast %266 : vector<1x7x384xf32> to vector<7x384xf32>
    %268 = arith.mulf %267, %261 : vector<7x384xf32>
    %269 = arith.addf %238, %268 : vector<7x384xf32>
    %c4_199 = arith.constant 4 : index
    %c2_200 = arith.constant 2 : index
    %c0_201 = arith.constant 0 : index
    %270 = vector.load %arg6[%c4_199, %c2_200, %c0_201] : memref<9x9x384xf32, #tpu.memory_space<vmem>>, vector<1x7x384xf32>
    %271 = vector.shape_cast %270 : vector<1x7x384xf32> to vector<7x384xf32>
    %272 = arith.mulf %271, %261 : vector<7x384xf32>
    %273 = arith.addf %242, %272 : vector<7x384xf32>
    %c5_202 = arith.constant 5 : index
    %c2_203 = arith.constant 2 : index
    %c0_204 = arith.constant 0 : index
    %274 = vector.load %arg6[%c5_202, %c2_203, %c0_204] : memref<9x9x384xf32, #tpu.memory_space<vmem>>, vector<1x7x384xf32>
    %275 = vector.shape_cast %274 : vector<1x7x384xf32> to vector<7x384xf32>
    %276 = arith.mulf %275, %261 : vector<7x384xf32>
    %277 = arith.addf %246, %276 : vector<7x384xf32>
    %c6_205 = arith.constant 6 : index
    %c2_206 = arith.constant 2 : index
    %c0_207 = arith.constant 0 : index
    %278 = vector.load %arg6[%c6_205, %c2_206, %c0_207] : memref<9x9x384xf32, #tpu.memory_space<vmem>>, vector<1x7x384xf32>
    %279 = vector.shape_cast %278 : vector<1x7x384xf32> to vector<7x384xf32>
    %280 = arith.mulf %279, %261 : vector<7x384xf32>
    %281 = arith.addf %250, %280 : vector<7x384xf32>
    %c7_208 = arith.constant 7 : index
    %c2_209 = arith.constant 2 : index
    %c0_210 = arith.constant 0 : index
    %282 = vector.load %arg6[%c7_208, %c2_209, %c0_210] : memref<9x9x384xf32, #tpu.memory_space<vmem>>, vector<1x7x384xf32>
    %283 = vector.shape_cast %282 : vector<1x7x384xf32> to vector<7x384xf32>
    %284 = arith.mulf %283, %261 : vector<7x384xf32>
    %285 = arith.addf %254, %284 : vector<7x384xf32>
    %c8_211 = arith.constant 8 : index
    %c2_212 = arith.constant 2 : index
    %c0_213 = arith.constant 0 : index
    %286 = vector.load %arg6[%c8_211, %c2_212, %c0_213] : memref<9x9x384xf32, #tpu.memory_space<vmem>>, vector<1x7x384xf32>
    %287 = vector.shape_cast %286 : vector<1x7x384xf32> to vector<7x384xf32>
    %288 = arith.mulf %287, %261 : vector<7x384xf32>
    %289 = arith.addf %258, %288 : vector<7x384xf32>
    %290 = arith.mulf %265, %265 : vector<7x384xf32>
    %291 = arith.addf %265, %269 : vector<7x384xf32>
    %292 = arith.mulf %269, %269 : vector<7x384xf32>
    %293 = arith.addf %290, %292 : vector<7x384xf32>
    %294 = arith.addf %291, %273 : vector<7x384xf32>
    %295 = arith.mulf %273, %273 : vector<7x384xf32>
    %296 = arith.addf %293, %295 : vector<7x384xf32>
    %297 = arith.addf %294, %277 : vector<7x384xf32>
    %298 = arith.mulf %277, %277 : vector<7x384xf32>
    %299 = arith.addf %296, %298 : vector<7x384xf32>
    %300 = arith.addf %297, %281 : vector<7x384xf32>
    %301 = arith.mulf %281, %281 : vector<7x384xf32>
    %302 = arith.addf %299, %301 : vector<7x384xf32>
    %303 = arith.addf %300, %285 : vector<7x384xf32>
    %304 = arith.mulf %285, %285 : vector<7x384xf32>
    %305 = arith.addf %302, %304 : vector<7x384xf32>
    %306 = arith.addf %303, %289 : vector<7x384xf32>
    %307 = arith.mulf %289, %289 : vector<7x384xf32>
    %308 = arith.addf %305, %307 : vector<7x384xf32>
    %cst_214 = arith.constant dense<0.000000e+00> : vector<384xf32>
    %309 = vector.multi_reduction <add>, %306, %cst_214 [0] : vector<7x384xf32> to vector<384xf32>
    %310 = vector.shape_cast %309 : vector<384xf32> to vector<1x384xf32>
    %cst_215 = arith.constant dense<0.000000e+00> : vector<384xf32>
    %311 = vector.multi_reduction <add>, %308, %cst_215 [0] : vector<7x384xf32> to vector<384xf32>
    %312 = vector.shape_cast %311 : vector<384xf32> to vector<1x384xf32>
    %cst_216 = arith.constant 0.0204081628 : f32
    %313 = vector.broadcast %cst_216 : f32 to vector<1x384xf32>
    %314 = arith.mulf %310, %313 : vector<1x384xf32>
    %cst_217 = arith.constant 0.0204081628 : f32
    %315 = vector.broadcast %cst_217 : f32 to vector<1x384xf32>
    %316 = arith.mulf %312, %315 : vector<1x384xf32>
    %317 = arith.mulf %314, %314 : vector<1x384xf32>
    %318 = arith.subf %316, %317 : vector<1x384xf32>
    %cst_218 = arith.constant 9.99999974E-6 : f32
    %319 = vector.broadcast %cst_218 : f32 to vector<1x384xf32>
    %320 = arith.addf %318, %319 : vector<1x384xf32>
    %321 = math.rsqrt %320 : vector<1x384xf32>
    %c0_219 = arith.constant 0 : index
    %c0_220 = arith.constant 0 : index
    %322 = vector.load %arg3[%c0_219, %c0_220] : memref<1x1152xf32, #tpu.memory_space<vmem>>, vector<1x384xf32>
    %323 = arith.mulf %322, %321 : vector<1x384xf32>
    %c0_221 = arith.constant 0 : index
    %c0_222 = arith.constant 0 : index
    %324 = vector.load %arg4[%c0_221, %c0_222] : memref<1x1152xf32, #tpu.memory_space<vmem>>, vector<1x384xf32>
    %325 = arith.mulf %314, %323 : vector<1x384xf32>
    %326 = arith.subf %324, %325 : vector<1x384xf32>
    %327 = vector.shape_cast %323 : vector<1x384xf32> to vector<1x384xf32>
    %328 = vector.broadcast %327 : vector<1x384xf32> to vector<7x384xf32>
    %329 = vector.shape_cast %326 : vector<1x384xf32> to vector<1x384xf32>
    %330 = vector.broadcast %329 : vector<1x384xf32> to vector<7x384xf32>
    %331 = arith.mulf %265, %328 : vector<7x384xf32>
    %332 = arith.addf %331, %330 : vector<7x384xf32>
    %c0_223 = arith.constant 0 : index
    %c0_224 = arith.constant 0 : index
    %c0_225 = arith.constant 0 : index
    %333 = vector.load %arg5[%c0_223, %c0_224, %c0_225] : memref<7x7x1152xf32, #tpu.memory_space<vmem>>, vector<1x7x384xf32>
    %334 = vector.shape_cast %333 : vector<1x7x384xf32> to vector<7x384xf32>
    %335 = vector.shape_cast %332 : vector<7x384xf32> to vector<1x7x384xf32>
    tpu.vector_store %arg5[%c0_223, %c0_224, %c0_225], %335 {strides = array<i32>} : memref<7x7x1152xf32, #tpu.memory_space<vmem>>, vector<1x7x384xf32>,
    %336 = arith.mulf %269, %328 : vector<7x384xf32>
    %337 = arith.addf %336, %330 : vector<7x384xf32>
    %c1_226 = arith.constant 1 : index
    %c0_227 = arith.constant 0 : index
    %c0_228 = arith.constant 0 : index
    %338 = vector.load %arg5[%c1_226, %c0_227, %c0_228] : memref<7x7x1152xf32, #tpu.memory_space<vmem>>, vector<1x7x384xf32>
    %339 = vector.shape_cast %338 : vector<1x7x384xf32> to vector<7x384xf32>
    %340 = vector.shape_cast %337 : vector<7x384xf32> to vector<1x7x384xf32>
    tpu.vector_store %arg5[%c1_226, %c0_227, %c0_228], %340 {strides = array<i32>} : memref<7x7x1152xf32, #tpu.memory_space<vmem>>, vector<1x7x384xf32>,
    %341 = arith.mulf %273, %328 : vector<7x384xf32>
    %342 = arith.addf %341, %330 : vector<7x384xf32>
    %c2_229 = arith.constant 2 : index
    %c0_230 = arith.constant 0 : index
    %c0_231 = arith.constant 0 : index
    %343 = vector.load %arg5[%c2_229, %c0_230, %c0_231] : memref<7x7x1152xf32, #tpu.memory_space<vmem>>, vector<1x7x384xf32>
    %344 = vector.shape_cast %343 : vector<1x7x384xf32> to vector<7x384xf32>
    %345 = vector.shape_cast %342 : vector<7x384xf32> to vector<1x7x384xf32>
    tpu.vector_store %arg5[%c2_229, %c0_230, %c0_231], %345 {strides = array<i32>} : memref<7x7x1152xf32, #tpu.memory_space<vmem>>, vector<1x7x384xf32>,
    %346 = arith.mulf %277, %328 : vector<7x384xf32>
    %347 = arith.addf %346, %330 : vector<7x384xf32>
    %c3_232 = arith.constant 3 : index
    %c0_233 = arith.constant 0 : index
    %c0_234 = arith.constant 0 : index
    %348 = vector.load %arg5[%c3_232, %c0_233, %c0_234] : memref<7x7x1152xf32, #tpu.memory_space<vmem>>, vector<1x7x384xf32>
    %349 = vector.shape_cast %348 : vector<1x7x384xf32> to vector<7x384xf32>
    %350 = vector.shape_cast %347 : vector<7x384xf32> to vector<1x7x384xf32>
    tpu.vector_store %arg5[%c3_232, %c0_233, %c0_234], %350 {strides = array<i32>} : memref<7x7x1152xf32, #tpu.memory_space<vmem>>, vector<1x7x384xf32>,
    %351 = arith.mulf %281, %328 : vector<7x384xf32>
    %352 = arith.addf %351, %330 : vector<7x384xf32>
    %c4_235 = arith.constant 4 : index
    %c0_236 = arith.constant 0 : index
    %c0_237 = arith.constant 0 : index
    %353 = vector.load %arg5[%c4_235, %c0_236, %c0_237] : memref<7x7x1152xf32, #tpu.memory_space<vmem>>, vector<1x7x384xf32>
    %354 = vector.shape_cast %353 : vector<1x7x384xf32> to vector<7x384xf32>
    %355 = vector.shape_cast %352 : vector<7x384xf32> to vector<1x7x384xf32>
    tpu.vector_store %arg5[%c4_235, %c0_236, %c0_237], %355 {strides = array<i32>} : memref<7x7x1152xf32, #tpu.memory_space<vmem>>, vector<1x7x384xf32>,
    %356 = arith.mulf %285, %328 : vector<7x384xf32>
    %357 = arith.addf %356, %330 : vector<7x384xf32>
    %c5_238 = arith.constant 5 : index
    %c0_239 = arith.constant 0 : index
    %c0_240 = arith.constant 0 : index
    %358 = vector.load %arg5[%c5_238, %c0_239, %c0_240] : memref<7x7x1152xf32, #tpu.memory_space<vmem>>, vector<1x7x384xf32>
    %359 = vector.shape_cast %358 : vector<1x7x384xf32> to vector<7x384xf32>
    %360 = vector.shape_cast %357 : vector<7x384xf32> to vector<1x7x384xf32>
    tpu.vector_store %arg5[%c5_238, %c0_239, %c0_240], %360 {strides = array<i32>} : memref<7x7x1152xf32, #tpu.memory_space<vmem>>, vector<1x7x384xf32>,
    %361 = arith.mulf %289, %328 : vector<7x384xf32>
    %362 = arith.addf %361, %330 : vector<7x384xf32>
    %c6_241 = arith.constant 6 : index
    %c0_242 = arith.constant 0 : index
    %c0_243 = arith.constant 0 : index
    %363 = vector.load %arg5[%c6_241, %c0_242, %c0_243] : memref<7x7x1152xf32, #tpu.memory_space<vmem>>, vector<1x7x384xf32>
    %364 = vector.shape_cast %363 : vector<1x7x384xf32> to vector<7x384xf32>
    %365 = vector.shape_cast %362 : vector<7x384xf32> to vector<1x7x384xf32>
    tpu.vector_store %arg5[%c6_241, %c0_242, %c0_243], %365 {strides = array<i32>} : memref<7x7x1152xf32, #tpu.memory_space<vmem>>, vector<1x7x384xf32>,
    %c0_244 = arith.constant 0 : index
    %c0_245 = arith.constant 0 : index
    %c384 = arith.constant 384 : index
    %366 = vector.load %arg1[%c0_244, %c0_245, %c384] : memref<7x7x1152xf32, #tpu.memory_space<vmem>>, vector<7x7x384xf32>
    %c1_246 = arith.constant 1 : index
    %c1_247 = arith.constant 1 : index
    %c0_248 = arith.constant 0 : index
    %367 = vector.load %arg6[%c1_246, %c1_247, %c0_248] : memref<9x9x384xf32, #tpu.memory_space<vmem>>, vector<7x7x384xf32>
    tpu.vector_store %arg6[%c1_246, %c1_247, %c0_248], %366 {strides = array<i32>} : memref<9x9x384xf32, #tpu.memory_space<vmem>>, vector<7x7x384xf32>,
    %cst_249 = arith.constant 0.000000e+00 : f32
    %368 = vector.broadcast %cst_249 : f32 to vector<7x384xf32>
    %cst_250 = arith.constant 0.000000e+00 : f32
    %369 = vector.broadcast %cst_250 : f32 to vector<7x384xf32>
    %cst_251 = arith.constant 0.000000e+00 : f32
    %370 = vector.broadcast %cst_251 : f32 to vector<7x384xf32>
    %cst_252 = arith.constant 0.000000e+00 : f32
    %371 = vector.broadcast %cst_252 : f32 to vector<7x384xf32>
    %cst_253 = arith.constant 0.000000e+00 : f32
    %372 = vector.broadcast %cst_253 : f32 to vector<7x384xf32>
    %cst_254 = arith.constant 0.000000e+00 : f32
    %373 = vector.broadcast %cst_254 : f32 to vector<7x384xf32>
    %cst_255 = arith.constant 0.000000e+00 : f32
    %374 = vector.broadcast %cst_255 : f32 to vector<7x384xf32>
    %c0_256 = arith.constant 0 : index
    %c384_257 = arith.constant 384 : index
    %375 = vector.load %arg2[%c0_256, %c384_257] : memref<9x1152xf32, #tpu.memory_space<vmem>>, vector<1x384xf32>
    %376 = vector.shape_cast %375 : vector<1x384xf32> to vector<1x384xf32>
    %377 = vector.broadcast %376 : vector<1x384xf32> to vector<7x384xf32>
    %c0_258 = arith.constant 0 : index
    %c0_259 = arith.constant 0 : index
    %c0_260 = arith.constant 0 : index
    %378 = vector.load %arg6[%c0_258, %c0_259, %c0_260] : memref<9x9x384xf32, #tpu.memory_space<vmem>>, vector<1x7x384xf32>
    %379 = vector.shape_cast %378 : vector<1x7x384xf32> to vector<7x384xf32>
    %380 = arith.mulf %379, %377 : vector<7x384xf32>
    %381 = arith.addf %368, %380 : vector<7x384xf32>
    %c1_261 = arith.constant 1 : index
    %c0_262 = arith.constant 0 : index
    %c0_263 = arith.constant 0 : index
    %382 = vector.load %arg6[%c1_261, %c0_262, %c0_263] : memref<9x9x384xf32, #tpu.memory_space<vmem>>, vector<1x7x384xf32>
    %383 = vector.shape_cast %382 : vector<1x7x384xf32> to vector<7x384xf32>
    %384 = arith.mulf %383, %377 : vector<7x384xf32>
    %385 = arith.addf %369, %384 : vector<7x384xf32>
    %c2_264 = arith.constant 2 : index
    %c0_265 = arith.constant 0 : index
    %c0_266 = arith.constant 0 : index
    %386 = vector.load %arg6[%c2_264, %c0_265, %c0_266] : memref<9x9x384xf32, #tpu.memory_space<vmem>>, vector<1x7x384xf32>
    %387 = vector.shape_cast %386 : vector<1x7x384xf32> to vector<7x384xf32>
    %388 = arith.mulf %387, %377 : vector<7x384xf32>
    %389 = arith.addf %370, %388 : vector<7x384xf32>
    %c3_267 = arith.constant 3 : index
    %c0_268 = arith.constant 0 : index
    %c0_269 = arith.constant 0 : index
    %390 = vector.load %arg6[%c3_267, %c0_268, %c0_269] : memref<9x9x384xf32, #tpu.memory_space<vmem>>, vector<1x7x384xf32>
    %391 = vector.shape_cast %390 : vector<1x7x384xf32> to vector<7x384xf32>
    %392 = arith.mulf %391, %377 : vector<7x384xf32>
    %393 = arith.addf %371, %392 : vector<7x384xf32>
    %c4_270 = arith.constant 4 : index
    %c0_271 = arith.constant 0 : index
    %c0_272 = arith.constant 0 : index
    %394 = vector.load %arg6[%c4_270, %c0_271, %c0_272] : memref<9x9x384xf32, #tpu.memory_space<vmem>>, vector<1x7x384xf32>
    %395 = vector.shape_cast %394 : vector<1x7x384xf32> to vector<7x384xf32>
    %396 = arith.mulf %395, %377 : vector<7x384xf32>
    %397 = arith.addf %372, %396 : vector<7x384xf32>
    %c5_273 = arith.constant 5 : index
    %c0_274 = arith.constant 0 : index
    %c0_275 = arith.constant 0 : index
    %398 = vector.load %arg6[%c5_273, %c0_274, %c0_275] : memref<9x9x384xf32, #tpu.memory_space<vmem>>, vector<1x7x384xf32>
    %399 = vector.shape_cast %398 : vector<1x7x384xf32> to vector<7x384xf32>
    %400 = arith.mulf %399, %377 : vector<7x384xf32>
    %401 = arith.addf %373, %400 : vector<7x384xf32>
    %c6_276 = arith.constant 6 : index
    %c0_277 = arith.constant 0 : index
    %c0_278 = arith.constant 0 : index
    %402 = vector.load %arg6[%c6_276, %c0_277, %c0_278] : memref<9x9x384xf32, #tpu.memory_space<vmem>>, vector<1x7x384xf32>
    %403 = vector.shape_cast %402 : vector<1x7x384xf32> to vector<7x384xf32>
    %404 = arith.mulf %403, %377 : vector<7x384xf32>
    %405 = arith.addf %374, %404 : vector<7x384xf32>
    %c1_279 = arith.constant 1 : index
    %c384_280 = arith.constant 384 : index
    %406 = vector.load %arg2[%c1_279, %c384_280] : memref<9x1152xf32, #tpu.memory_space<vmem>>, vector<1x384xf32>
    %407 = vector.shape_cast %406 : vector<1x384xf32> to vector<1x384xf32>
    %408 = vector.broadcast %407 : vector<1x384xf32> to vector<7x384xf32>
    %c0_281 = arith.constant 0 : index
    %c1_282 = arith.constant 1 : index
    %c0_283 = arith.constant 0 : index
    %409 = vector.load %arg6[%c0_281, %c1_282, %c0_283] : memref<9x9x384xf32, #tpu.memory_space<vmem>>, vector<1x7x384xf32>
    %410 = vector.shape_cast %409 : vector<1x7x384xf32> to vector<7x384xf32>
    %411 = arith.mulf %410, %408 : vector<7x384xf32>
    %412 = arith.addf %381, %411 : vector<7x384xf32>
    %c1_284 = arith.constant 1 : index
    %c1_285 = arith.constant 1 : index
    %c0_286 = arith.constant 0 : index
    %413 = vector.load %arg6[%c1_284, %c1_285, %c0_286] : memref<9x9x384xf32, #tpu.memory_space<vmem>>, vector<1x7x384xf32>
    %414 = vector.shape_cast %413 : vector<1x7x384xf32> to vector<7x384xf32>
    %415 = arith.mulf %414, %408 : vector<7x384xf32>
    %416 = arith.addf %385, %415 : vector<7x384xf32>
    %c2_287 = arith.constant 2 : index
    %c1_288 = arith.constant 1 : index
    %c0_289 = arith.constant 0 : index
    %417 = vector.load %arg6[%c2_287, %c1_288, %c0_289] : memref<9x9x384xf32, #tpu.memory_space<vmem>>, vector<1x7x384xf32>
    %418 = vector.shape_cast %417 : vector<1x7x384xf32> to vector<7x384xf32>
    %419 = arith.mulf %418, %408 : vector<7x384xf32>
    %420 = arith.addf %389, %419 : vector<7x384xf32>
    %c3_290 = arith.constant 3 : index
    %c1_291 = arith.constant 1 : index
    %c0_292 = arith.constant 0 : index
    %421 = vector.load %arg6[%c3_290, %c1_291, %c0_292] : memref<9x9x384xf32, #tpu.memory_space<vmem>>, vector<1x7x384xf32>
    %422 = vector.shape_cast %421 : vector<1x7x384xf32> to vector<7x384xf32>
    %423 = arith.mulf %422, %408 : vector<7x384xf32>
    %424 = arith.addf %393, %423 : vector<7x384xf32>
    %c4_293 = arith.constant 4 : index
    %c1_294 = arith.constant 1 : index
    %c0_295 = arith.constant 0 : index
    %425 = vector.load %arg6[%c4_293, %c1_294, %c0_295] : memref<9x9x384xf32, #tpu.memory_space<vmem>>, vector<1x7x384xf32>
    %426 = vector.shape_cast %425 : vector<1x7x384xf32> to vector<7x384xf32>
    %427 = arith.mulf %426, %408 : vector<7x384xf32>
    %428 = arith.addf %397, %427 : vector<7x384xf32>
    %c5_296 = arith.constant 5 : index
    %c1_297 = arith.constant 1 : index
    %c0_298 = arith.constant 0 : index
    %429 = vector.load %arg6[%c5_296, %c1_297, %c0_298] : memref<9x9x384xf32, #tpu.memory_space<vmem>>, vector<1x7x384xf32>
    %430 = vector.shape_cast %429 : vector<1x7x384xf32> to vector<7x384xf32>
    %431 = arith.mulf %430, %408 : vector<7x384xf32>
    %432 = arith.addf %401, %431 : vector<7x384xf32>
    %c6_299 = arith.constant 6 : index
    %c1_300 = arith.constant 1 : index
    %c0_301 = arith.constant 0 : index
    %433 = vector.load %arg6[%c6_299, %c1_300, %c0_301] : memref<9x9x384xf32, #tpu.memory_space<vmem>>, vector<1x7x384xf32>
    %434 = vector.shape_cast %433 : vector<1x7x384xf32> to vector<7x384xf32>
    %435 = arith.mulf %434, %408 : vector<7x384xf32>
    %436 = arith.addf %405, %435 : vector<7x384xf32>
    %c2_302 = arith.constant 2 : index
    %c384_303 = arith.constant 384 : index
    %437 = vector.load %arg2[%c2_302, %c384_303] : memref<9x1152xf32, #tpu.memory_space<vmem>>, vector<1x384xf32>
    %438 = vector.shape_cast %437 : vector<1x384xf32> to vector<1x384xf32>
    %439 = vector.broadcast %438 : vector<1x384xf32> to vector<7x384xf32>
    %c0_304 = arith.constant 0 : index
    %c2_305 = arith.constant 2 : index
    %c0_306 = arith.constant 0 : index
    %440 = vector.load %arg6[%c0_304, %c2_305, %c0_306] : memref<9x9x384xf32, #tpu.memory_space<vmem>>, vector<1x7x384xf32>
    %441 = vector.shape_cast %440 : vector<1x7x384xf32> to vector<7x384xf32>
    %442 = arith.mulf %441, %439 : vector<7x384xf32>
    %443 = arith.addf %412, %442 : vector<7x384xf32>
    %c1_307 = arith.constant 1 : index
    %c2_308 = arith.constant 2 : index
    %c0_309 = arith.constant 0 : index
    %444 = vector.load %arg6[%c1_307, %c2_308, %c0_309] : memref<9x9x384xf32, #tpu.memory_space<vmem>>, vector<1x7x384xf32>
    %445 = vector.shape_cast %444 : vector<1x7x384xf32> to vector<7x384xf32>
    %446 = arith.mulf %445, %439 : vector<7x384xf32>
    %447 = arith.addf %416, %446 : vector<7x384xf32>
    %c2_310 = arith.constant 2 : index
    %c2_311 = arith.constant 2 : index
    %c0_312 = arith.constant 0 : index
    %448 = vector.load %arg6[%c2_310, %c2_311, %c0_312] : memref<9x9x384xf32, #tpu.memory_space<vmem>>, vector<1x7x384xf32>
    %449 = vector.shape_cast %448 : vector<1x7x384xf32> to vector<7x384xf32>
    %450 = arith.mulf %449, %439 : vector<7x384xf32>
    %451 = arith.addf %420, %450 : vector<7x384xf32>
    %c3_313 = arith.constant 3 : index
    %c2_314 = arith.constant 2 : index
    %c0_315 = arith.constant 0 : index
    %452 = vector.load %arg6[%c3_313, %c2_314, %c0_315] : memref<9x9x384xf32, #tpu.memory_space<vmem>>, vector<1x7x384xf32>
    %453 = vector.shape_cast %452 : vector<1x7x384xf32> to vector<7x384xf32>
    %454 = arith.mulf %453, %439 : vector<7x384xf32>
    %455 = arith.addf %424, %454 : vector<7x384xf32>
    %c4_316 = arith.constant 4 : index
    %c2_317 = arith.constant 2 : index
    %c0_318 = arith.constant 0 : index
    %456 = vector.load %arg6[%c4_316, %c2_317, %c0_318] : memref<9x9x384xf32, #tpu.memory_space<vmem>>, vector<1x7x384xf32>
    %457 = vector.shape_cast %456 : vector<1x7x384xf32> to vector<7x384xf32>
    %458 = arith.mulf %457, %439 : vector<7x384xf32>
    %459 = arith.addf %428, %458 : vector<7x384xf32>
    %c5_319 = arith.constant 5 : index
    %c2_320 = arith.constant 2 : index
    %c0_321 = arith.constant 0 : index
    %460 = vector.load %arg6[%c5_319, %c2_320, %c0_321] : memref<9x9x384xf32, #tpu.memory_space<vmem>>, vector<1x7x384xf32>
    %461 = vector.shape_cast %460 : vector<1x7x384xf32> to vector<7x384xf32>
    %462 = arith.mulf %461, %439 : vector<7x384xf32>
    %463 = arith.addf %432, %462 : vector<7x384xf32>
    %c6_322 = arith.constant 6 : index
    %c2_323 = arith.constant 2 : index
    %c0_324 = arith.constant 0 : index
    %464 = vector.load %arg6[%c6_322, %c2_323, %c0_324] : memref<9x9x384xf32, #tpu.memory_space<vmem>>, vector<1x7x384xf32>
    %465 = vector.shape_cast %464 : vector<1x7x384xf32> to vector<7x384xf32>
    %466 = arith.mulf %465, %439 : vector<7x384xf32>
    %467 = arith.addf %436, %466 : vector<7x384xf32>
    %c3_325 = arith.constant 3 : index
    %c384_326 = arith.constant 384 : index
    %468 = vector.load %arg2[%c3_325, %c384_326] : memref<9x1152xf32, #tpu.memory_space<vmem>>, vector<1x384xf32>
    %469 = vector.shape_cast %468 : vector<1x384xf32> to vector<1x384xf32>
    %470 = vector.broadcast %469 : vector<1x384xf32> to vector<7x384xf32>
    %c1_327 = arith.constant 1 : index
    %c0_328 = arith.constant 0 : index
    %c0_329 = arith.constant 0 : index
    %471 = vector.load %arg6[%c1_327, %c0_328, %c0_329] : memref<9x9x384xf32, #tpu.memory_space<vmem>>, vector<1x7x384xf32>
    %472 = vector.shape_cast %471 : vector<1x7x384xf32> to vector<7x384xf32>
    %473 = arith.mulf %472, %470 : vector<7x384xf32>
    %474 = arith.addf %443, %473 : vector<7x384xf32>
    %c2_330 = arith.constant 2 : index
    %c0_331 = arith.constant 0 : index
    %c0_332 = arith.constant 0 : index
    %475 = vector.load %arg6[%c2_330, %c0_331, %c0_332] : memref<9x9x384xf32, #tpu.memory_space<vmem>>, vector<1x7x384xf32>
    %476 = vector.shape_cast %475 : vector<1x7x384xf32> to vector<7x384xf32>
    %477 = arith.mulf %476, %470 : vector<7x384xf32>
    %478 = arith.addf %447, %477 : vector<7x384xf32>
    %c3_333 = arith.constant 3 : index
    %c0_334 = arith.constant 0 : index
    %c0_335 = arith.constant 0 : index
    %479 = vector.load %arg6[%c3_333, %c0_334, %c0_335] : memref<9x9x384xf32, #tpu.memory_space<vmem>>, vector<1x7x384xf32>
    %480 = vector.shape_cast %479 : vector<1x7x384xf32> to vector<7x384xf32>
    %481 = arith.mulf %480, %470 : vector<7x384xf32>
    %482 = arith.addf %451, %481 : vector<7x384xf32>
    %c4_336 = arith.constant 4 : index
    %c0_337 = arith.constant 0 : index
    %c0_338 = arith.constant 0 : index
    %483 = vector.load %arg6[%c4_336, %c0_337, %c0_338] : memref<9x9x384xf32, #tpu.memory_space<vmem>>, vector<1x7x384xf32>
    %484 = vector.shape_cast %483 : vector<1x7x384xf32> to vector<7x384xf32>
    %485 = arith.mulf %484, %470 : vector<7x384xf32>
    %486 = arith.addf %455, %485 : vector<7x384xf32>
    %c5_339 = arith.constant 5 : index
    %c0_340 = arith.constant 0 : index
    %c0_341 = arith.constant 0 : index
    %487 = vector.load %arg6[%c5_339, %c0_340, %c0_341] : memref<9x9x384xf32, #tpu.memory_space<vmem>>, vector<1x7x384xf32>
    %488 = vector.shape_cast %487 : vector<1x7x384xf32> to vector<7x384xf32>
    %489 = arith.mulf %488, %470 : vector<7x384xf32>
    %490 = arith.addf %459, %489 : vector<7x384xf32>
    %c6_342 = arith.constant 6 : index
    %c0_343 = arith.constant 0 : index
    %c0_344 = arith.constant 0 : index
    %491 = vector.load %arg6[%c6_342, %c0_343, %c0_344] : memref<9x9x384xf32, #tpu.memory_space<vmem>>, vector<1x7x384xf32>
    %492 = vector.shape_cast %491 : vector<1x7x384xf32> to vector<7x384xf32>
    %493 = arith.mulf %492, %470 : vector<7x384xf32>
    %494 = arith.addf %463, %493 : vector<7x384xf32>
    %c7_345 = arith.constant 7 : index
    %c0_346 = arith.constant 0 : index
    %c0_347 = arith.constant 0 : index
    %495 = vector.load %arg6[%c7_345, %c0_346, %c0_347] : memref<9x9x384xf32, #tpu.memory_space<vmem>>, vector<1x7x384xf32>
    %496 = vector.shape_cast %495 : vector<1x7x384xf32> to vector<7x384xf32>
    %497 = arith.mulf %496, %470 : vector<7x384xf32>
    %498 = arith.addf %467, %497 : vector<7x384xf32>
    %c4_348 = arith.constant 4 : index
    %c384_349 = arith.constant 384 : index
    %499 = vector.load %arg2[%c4_348, %c384_349] : memref<9x1152xf32, #tpu.memory_space<vmem>>, vector<1x384xf32>
    %500 = vector.shape_cast %499 : vector<1x384xf32> to vector<1x384xf32>
    %501 = vector.broadcast %500 : vector<1x384xf32> to vector<7x384xf32>
    %c1_350 = arith.constant 1 : index
    %c1_351 = arith.constant 1 : index
    %c0_352 = arith.constant 0 : index
    %502 = vector.load %arg6[%c1_350, %c1_351, %c0_352] : memref<9x9x384xf32, #tpu.memory_space<vmem>>, vector<1x7x384xf32>
    %503 = vector.shape_cast %502 : vector<1x7x384xf32> to vector<7x384xf32>
    %504 = arith.mulf %503, %501 : vector<7x384xf32>
    %505 = arith.addf %474, %504 : vector<7x384xf32>
    %c2_353 = arith.constant 2 : index
    %c1_354 = arith.constant 1 : index
    %c0_355 = arith.constant 0 : index
    %506 = vector.load %arg6[%c2_353, %c1_354, %c0_355] : memref<9x9x384xf32, #tpu.memory_space<vmem>>, vector<1x7x384xf32>
    %507 = vector.shape_cast %506 : vector<1x7x384xf32> to vector<7x384xf32>
    %508 = arith.mulf %507, %501 : vector<7x384xf32>
    %509 = arith.addf %478, %508 : vector<7x384xf32>
    %c3_356 = arith.constant 3 : index
    %c1_357 = arith.constant 1 : index
    %c0_358 = arith.constant 0 : index
    %510 = vector.load %arg6[%c3_356, %c1_357, %c0_358] : memref<9x9x384xf32, #tpu.memory_space<vmem>>, vector<1x7x384xf32>
    %511 = vector.shape_cast %510 : vector<1x7x384xf32> to vector<7x384xf32>
    %512 = arith.mulf %511, %501 : vector<7x384xf32>
    %513 = arith.addf %482, %512 : vector<7x384xf32>
    %c4_359 = arith.constant 4 : index
    %c1_360 = arith.constant 1 : index
    %c0_361 = arith.constant 0 : index
    %514 = vector.load %arg6[%c4_359, %c1_360, %c0_361] : memref<9x9x384xf32, #tpu.memory_space<vmem>>, vector<1x7x384xf32>
    %515 = vector.shape_cast %514 : vector<1x7x384xf32> to vector<7x384xf32>
    %516 = arith.mulf %515, %501 : vector<7x384xf32>
    %517 = arith.addf %486, %516 : vector<7x384xf32>
    %c5_362 = arith.constant 5 : index
    %c1_363 = arith.constant 1 : index
    %c0_364 = arith.constant 0 : index
    %518 = vector.load %arg6[%c5_362, %c1_363, %c0_364] : memref<9x9x384xf32, #tpu.memory_space<vmem>>, vector<1x7x384xf32>
    %519 = vector.shape_cast %518 : vector<1x7x384xf32> to vector<7x384xf32>
    %520 = arith.mulf %519, %501 : vector<7x384xf32>
    %521 = arith.addf %490, %520 : vector<7x384xf32>
    %c6_365 = arith.constant 6 : index
    %c1_366 = arith.constant 1 : index
    %c0_367 = arith.constant 0 : index
    %522 = vector.load %arg6[%c6_365, %c1_366, %c0_367] : memref<9x9x384xf32, #tpu.memory_space<vmem>>, vector<1x7x384xf32>
    %523 = vector.shape_cast %522 : vector<1x7x384xf32> to vector<7x384xf32>
    %524 = arith.mulf %523, %501 : vector<7x384xf32>
    %525 = arith.addf %494, %524 : vector<7x384xf32>
    %c7_368 = arith.constant 7 : index
    %c1_369 = arith.constant 1 : index
    %c0_370 = arith.constant 0 : index
    %526 = vector.load %arg6[%c7_368, %c1_369, %c0_370] : memref<9x9x384xf32, #tpu.memory_space<vmem>>, vector<1x7x384xf32>
    %527 = vector.shape_cast %526 : vector<1x7x384xf32> to vector<7x384xf32>
    %528 = arith.mulf %527, %501 : vector<7x384xf32>
    %529 = arith.addf %498, %528 : vector<7x384xf32>
    %c5_371 = arith.constant 5 : index
    %c384_372 = arith.constant 384 : index
    %530 = vector.load %arg2[%c5_371, %c384_372] : memref<9x1152xf32, #tpu.memory_space<vmem>>, vector<1x384xf32>
    %531 = vector.shape_cast %530 : vector<1x384xf32> to vector<1x384xf32>
    %532 = vector.broadcast %531 : vector<1x384xf32> to vector<7x384xf32>
    %c1_373 = arith.constant 1 : index
    %c2_374 = arith.constant 2 : index
    %c0_375 = arith.constant 0 : index
    %533 = vector.load %arg6[%c1_373, %c2_374, %c0_375] : memref<9x9x384xf32, #tpu.memory_space<vmem>>, vector<1x7x384xf32>
    %534 = vector.shape_cast %533 : vector<1x7x384xf32> to vector<7x384xf32>
    %535 = arith.mulf %534, %532 : vector<7x384xf32>
    %536 = arith.addf %505, %535 : vector<7x384xf32>
    %c2_376 = arith.constant 2 : index
    %c2_377 = arith.constant 2 : index
    %c0_378 = arith.constant 0 : index
    %537 = vector.load %arg6[%c2_376, %c2_377, %c0_378] : memref<9x9x384xf32, #tpu.memory_space<vmem>>, vector<1x7x384xf32>
    %538 = vector.shape_cast %537 : vector<1x7x384xf32> to vector<7x384xf32>
    %539 = arith.mulf %538, %532 : vector<7x384xf32>
    %540 = arith.addf %509, %539 : vector<7x384xf32>
    %c3_379 = arith.constant 3 : index
    %c2_380 = arith.constant 2 : index
    %c0_381 = arith.constant 0 : index
    %541 = vector.load %arg6[%c3_379, %c2_380, %c0_381] : memref<9x9x384xf32, #tpu.memory_space<vmem>>, vector<1x7x384xf32>
    %542 = vector.shape_cast %541 : vector<1x7x384xf32> to vector<7x384xf32>
    %543 = arith.mulf %542, %532 : vector<7x384xf32>
    %544 = arith.addf %513, %543 : vector<7x384xf32>
    %c4_382 = arith.constant 4 : index
    %c2_383 = arith.constant 2 : index
    %c0_384 = arith.constant 0 : index
    %545 = vector.load %arg6[%c4_382, %c2_383, %c0_384] : memref<9x9x384xf32, #tpu.memory_space<vmem>>, vector<1x7x384xf32>
    %546 = vector.shape_cast %545 : vector<1x7x384xf32> to vector<7x384xf32>
    %547 = arith.mulf %546, %532 : vector<7x384xf32>
    %548 = arith.addf %517, %547 : vector<7x384xf32>
    %c5_385 = arith.constant 5 : index
    %c2_386 = arith.constant 2 : index
    %c0_387 = arith.constant 0 : index
    %549 = vector.load %arg6[%c5_385, %c2_386, %c0_387] : memref<9x9x384xf32, #tpu.memory_space<vmem>>, vector<1x7x384xf32>
    %550 = vector.shape_cast %549 : vector<1x7x384xf32> to vector<7x384xf32>
    %551 = arith.mulf %550, %532 : vector<7x384xf32>
    %552 = arith.addf %521, %551 : vector<7x384xf32>
    %c6_388 = arith.constant 6 : index
    %c2_389 = arith.constant 2 : index
    %c0_390 = arith.constant 0 : index
    %553 = vector.load %arg6[%c6_388, %c2_389, %c0_390] : memref<9x9x384xf32, #tpu.memory_space<vmem>>, vector<1x7x384xf32>
    %554 = vector.shape_cast %553 : vector<1x7x384xf32> to vector<7x384xf32>
    %555 = arith.mulf %554, %532 : vector<7x384xf32>
    %556 = arith.addf %525, %555 : vector<7x384xf32>
    %c7_391 = arith.constant 7 : index
    %c2_392 = arith.constant 2 : index
    %c0_393 = arith.constant 0 : index
    %557 = vector.load %arg6[%c7_391, %c2_392, %c0_393] : memref<9x9x384xf32, #tpu.memory_space<vmem>>, vector<1x7x384xf32>
    %558 = vector.shape_cast %557 : vector<1x7x384xf32> to vector<7x384xf32>
    %559 = arith.mulf %558, %532 : vector<7x384xf32>
    %560 = arith.addf %529, %559 : vector<7x384xf32>
    %c6_394 = arith.constant 6 : index
    %c384_395 = arith.constant 384 : index
    %561 = vector.load %arg2[%c6_394, %c384_395] : memref<9x1152xf32, #tpu.memory_space<vmem>>, vector<1x384xf32>
    %562 = vector.shape_cast %561 : vector<1x384xf32> to vector<1x384xf32>
    %563 = vector.broadcast %562 : vector<1x384xf32> to vector<7x384xf32>
    %c2_396 = arith.constant 2 : index
    %c0_397 = arith.constant 0 : index
    %c0_398 = arith.constant 0 : index
    %564 = vector.load %arg6[%c2_396, %c0_397, %c0_398] : memref<9x9x384xf32, #tpu.memory_space<vmem>>, vector<1x7x384xf32>
    %565 = vector.shape_cast %564 : vector<1x7x384xf32> to vector<7x384xf32>
    %566 = arith.mulf %565, %563 : vector<7x384xf32>
    %567 = arith.addf %536, %566 : vector<7x384xf32>
    %c3_399 = arith.constant 3 : index
    %c0_400 = arith.constant 0 : index
    %c0_401 = arith.constant 0 : index
    %568 = vector.load %arg6[%c3_399, %c0_400, %c0_401] : memref<9x9x384xf32, #tpu.memory_space<vmem>>, vector<1x7x384xf32>
    %569 = vector.shape_cast %568 : vector<1x7x384xf32> to vector<7x384xf32>
    %570 = arith.mulf %569, %563 : vector<7x384xf32>
    %571 = arith.addf %540, %570 : vector<7x384xf32>
    %c4_402 = arith.constant 4 : index
    %c0_403 = arith.constant 0 : index
    %c0_404 = arith.constant 0 : index
    %572 = vector.load %arg6[%c4_402, %c0_403, %c0_404] : memref<9x9x384xf32, #tpu.memory_space<vmem>>, vector<1x7x384xf32>
    %573 = vector.shape_cast %572 : vector<1x7x384xf32> to vector<7x384xf32>
    %574 = arith.mulf %573, %563 : vector<7x384xf32>
    %575 = arith.addf %544, %574 : vector<7x384xf32>
    %c5_405 = arith.constant 5 : index
    %c0_406 = arith.constant 0 : index
    %c0_407 = arith.constant 0 : index
    %576 = vector.load %arg6[%c5_405, %c0_406, %c0_407] : memref<9x9x384xf32, #tpu.memory_space<vmem>>, vector<1x7x384xf32>
    %577 = vector.shape_cast %576 : vector<1x7x384xf32> to vector<7x384xf32>
    %578 = arith.mulf %577, %563 : vector<7x384xf32>
    %579 = arith.addf %548, %578 : vector<7x384xf32>
    %c6_408 = arith.constant 6 : index
    %c0_409 = arith.constant 0 : index
    %c0_410 = arith.constant 0 : index
    %580 = vector.load %arg6[%c6_408, %c0_409, %c0_410] : memref<9x9x384xf32, #tpu.memory_space<vmem>>, vector<1x7x384xf32>
    %581 = vector.shape_cast %580 : vector<1x7x384xf32> to vector<7x384xf32>
    %582 = arith.mulf %581, %563 : vector<7x384xf32>
    %583 = arith.addf %552, %582 : vector<7x384xf32>
    %c7_411 = arith.constant 7 : index
    %c0_412 = arith.constant 0 : index
    %c0_413 = arith.constant 0 : index
    %584 = vector.load %arg6[%c7_411, %c0_412, %c0_413] : memref<9x9x384xf32, #tpu.memory_space<vmem>>, vector<1x7x384xf32>
    %585 = vector.shape_cast %584 : vector<1x7x384xf32> to vector<7x384xf32>
    %586 = arith.mulf %585, %563 : vector<7x384xf32>
    %587 = arith.addf %556, %586 : vector<7x384xf32>
    %c8_414 = arith.constant 8 : index
    %c0_415 = arith.constant 0 : index
    %c0_416 = arith.constant 0 : index
    %588 = vector.load %arg6[%c8_414, %c0_415, %c0_416] : memref<9x9x384xf32, #tpu.memory_space<vmem>>, vector<1x7x384xf32>
    %589 = vector.shape_cast %588 : vector<1x7x384xf32> to vector<7x384xf32>
    %590 = arith.mulf %589, %563 : vector<7x384xf32>
    %591 = arith.addf %560, %590 : vector<7x384xf32>
    %c7_417 = arith.constant 7 : index
    %c384_418 = arith.constant 384 : index
    %592 = vector.load %arg2[%c7_417, %c384_418] : memref<9x1152xf32, #tpu.memory_space<vmem>>, vector<1x384xf32>
    %593 = vector.shape_cast %592 : vector<1x384xf32> to vector<1x384xf32>
    %594 = vector.broadcast %593 : vector<1x384xf32> to vector<7x384xf32>
    %c2_419 = arith.constant 2 : index
    %c1_420 = arith.constant 1 : index
    %c0_421 = arith.constant 0 : index
    %595 = vector.load %arg6[%c2_419, %c1_420, %c0_421] : memref<9x9x384xf32, #tpu.memory_space<vmem>>, vector<1x7x384xf32>
    %596 = vector.shape_cast %595 : vector<1x7x384xf32> to vector<7x384xf32>
    %597 = arith.mulf %596, %594 : vector<7x384xf32>
    %598 = arith.addf %567, %597 : vector<7x384xf32>
    %c3_422 = arith.constant 3 : index
    %c1_423 = arith.constant 1 : index
    %c0_424 = arith.constant 0 : index
    %599 = vector.load %arg6[%c3_422, %c1_423, %c0_424] : memref<9x9x384xf32, #tpu.memory_space<vmem>>, vector<1x7x384xf32>
    %600 = vector.shape_cast %599 : vector<1x7x384xf32> to vector<7x384xf32>
    %601 = arith.mulf %600, %594 : vector<7x384xf32>
    %602 = arith.addf %571, %601 : vector<7x384xf32>
    %c4_425 = arith.constant 4 : index
    %c1_426 = arith.constant 1 : index
    %c0_427 = arith.constant 0 : index
    %603 = vector.load %arg6[%c4_425, %c1_426, %c0_427] : memref<9x9x384xf32, #tpu.memory_space<vmem>>, vector<1x7x384xf32>
    %604 = vector.shape_cast %603 : vector<1x7x384xf32> to vector<7x384xf32>
    %605 = arith.mulf %604, %594 : vector<7x384xf32>
    %606 = arith.addf %575, %605 : vector<7x384xf32>
    %c5_428 = arith.constant 5 : index
    %c1_429 = arith.constant 1 : index
    %c0_430 = arith.constant 0 : index
    %607 = vector.load %arg6[%c5_428, %c1_429, %c0_430] : memref<9x9x384xf32, #tpu.memory_space<vmem>>, vector<1x7x384xf32>
    %608 = vector.shape_cast %607 : vector<1x7x384xf32> to vector<7x384xf32>
    %609 = arith.mulf %608, %594 : vector<7x384xf32>
    %610 = arith.addf %579, %609 : vector<7x384xf32>
    %c6_431 = arith.constant 6 : index
    %c1_432 = arith.constant 1 : index
    %c0_433 = arith.constant 0 : index
    %611 = vector.load %arg6[%c6_431, %c1_432, %c0_433] : memref<9x9x384xf32, #tpu.memory_space<vmem>>, vector<1x7x384xf32>
    %612 = vector.shape_cast %611 : vector<1x7x384xf32> to vector<7x384xf32>
    %613 = arith.mulf %612, %594 : vector<7x384xf32>
    %614 = arith.addf %583, %613 : vector<7x384xf32>
    %c7_434 = arith.constant 7 : index
    %c1_435 = arith.constant 1 : index
    %c0_436 = arith.constant 0 : index
    %615 = vector.load %arg6[%c7_434, %c1_435, %c0_436] : memref<9x9x384xf32, #tpu.memory_space<vmem>>, vector<1x7x384xf32>
    %616 = vector.shape_cast %615 : vector<1x7x384xf32> to vector<7x384xf32>
    %617 = arith.mulf %616, %594 : vector<7x384xf32>
    %618 = arith.addf %587, %617 : vector<7x384xf32>
    %c8_437 = arith.constant 8 : index
    %c1_438 = arith.constant 1 : index
    %c0_439 = arith.constant 0 : index
    %619 = vector.load %arg6[%c8_437, %c1_438, %c0_439] : memref<9x9x384xf32, #tpu.memory_space<vmem>>, vector<1x7x384xf32>
    %620 = vector.shape_cast %619 : vector<1x7x384xf32> to vector<7x384xf32>
    %621 = arith.mulf %620, %594 : vector<7x384xf32>
    %622 = arith.addf %591, %621 : vector<7x384xf32>
    %c8_440 = arith.constant 8 : index
    %c384_441 = arith.constant 384 : index
    %623 = vector.load %arg2[%c8_440, %c384_441] : memref<9x1152xf32, #tpu.memory_space<vmem>>, vector<1x384xf32>
    %624 = vector.shape_cast %623 : vector<1x384xf32> to vector<1x384xf32>
    %625 = vector.broadcast %624 : vector<1x384xf32> to vector<7x384xf32>
    %c2_442 = arith.constant 2 : index
    %c2_443 = arith.constant 2 : index
    %c0_444 = arith.constant 0 : index
    %626 = vector.load %arg6[%c2_442, %c2_443, %c0_444] : memref<9x9x384xf32, #tpu.memory_space<vmem>>, vector<1x7x384xf32>
    %627 = vector.shape_cast %626 : vector<1x7x384xf32> to vector<7x384xf32>
    %628 = arith.mulf %627, %625 : vector<7x384xf32>
    %629 = arith.addf %598, %628 : vector<7x384xf32>
    %c3_445 = arith.constant 3 : index
    %c2_446 = arith.constant 2 : index
    %c0_447 = arith.constant 0 : index
    %630 = vector.load %arg6[%c3_445, %c2_446, %c0_447] : memref<9x9x384xf32, #tpu.memory_space<vmem>>, vector<1x7x384xf32>
    %631 = vector.shape_cast %630 : vector<1x7x384xf32> to vector<7x384xf32>
    %632 = arith.mulf %631, %625 : vector<7x384xf32>
    %633 = arith.addf %602, %632 : vector<7x384xf32>
    %c4_448 = arith.constant 4 : index
    %c2_449 = arith.constant 2 : index
    %c0_450 = arith.constant 0 : index
    %634 = vector.load %arg6[%c4_448, %c2_449, %c0_450] : memref<9x9x384xf32, #tpu.memory_space<vmem>>, vector<1x7x384xf32>
    %635 = vector.shape_cast %634 : vector<1x7x384xf32> to vector<7x384xf32>
    %636 = arith.mulf %635, %625 : vector<7x384xf32>
    %637 = arith.addf %606, %636 : vector<7x384xf32>
    %c5_451 = arith.constant 5 : index
    %c2_452 = arith.constant 2 : index
    %c0_453 = arith.constant 0 : index
    %638 = vector.load %arg6[%c5_451, %c2_452, %c0_453] : memref<9x9x384xf32, #tpu.memory_space<vmem>>, vector<1x7x384xf32>
    %639 = vector.shape_cast %638 : vector<1x7x384xf32> to vector<7x384xf32>
    %640 = arith.mulf %639, %625 : vector<7x384xf32>
    %641 = arith.addf %610, %640 : vector<7x384xf32>
    %c6_454 = arith.constant 6 : index
    %c2_455 = arith.constant 2 : index
    %c0_456 = arith.constant 0 : index
    %642 = vector.load %arg6[%c6_454, %c2_455, %c0_456] : memref<9x9x384xf32, #tpu.memory_space<vmem>>, vector<1x7x384xf32>
    %643 = vector.shape_cast %642 : vector<1x7x384xf32> to vector<7x384xf32>
    %644 = arith.mulf %643, %625 : vector<7x384xf32>
    %645 = arith.addf %614, %644 : vector<7x384xf32>
    %c7_457 = arith.constant 7 : index
    %c2_458 = arith.constant 2 : index
    %c0_459 = arith.constant 0 : index
    %646 = vector.load %arg6[%c7_457, %c2_458, %c0_459] : memref<9x9x384xf32, #tpu.memory_space<vmem>>, vector<1x7x384xf32>
    %647 = vector.shape_cast %646 : vector<1x7x384xf32> to vector<7x384xf32>
    %648 = arith.mulf %647, %625 : vector<7x384xf32>
    %649 = arith.addf %618, %648 : vector<7x384xf32>
    %c8_460 = arith.constant 8 : index
    %c2_461 = arith.constant 2 : index
    %c0_462 = arith.constant 0 : index
    %650 = vector.load %arg6[%c8_460, %c2_461, %c0_462] : memref<9x9x384xf32, #tpu.memory_space<vmem>>, vector<1x7x384xf32>
    %651 = vector.shape_cast %650 : vector<1x7x384xf32> to vector<7x384xf32>
    %652 = arith.mulf %651, %625 : vector<7x384xf32>
    %653 = arith.addf %622, %652 : vector<7x384xf32>
    %654 = arith.mulf %629, %629 : vector<7x384xf32>
    %655 = arith.addf %629, %633 : vector<7x384xf32>
    %656 = arith.mulf %633, %633 : vector<7x384xf32>
    %657 = arith.addf %654, %656 : vector<7x384xf32>
    %658 = arith.addf %655, %637 : vector<7x384xf32>
    %659 = arith.mulf %637, %637 : vector<7x384xf32>
    %660 = arith.addf %657, %659 : vector<7x384xf32>
    %661 = arith.addf %658, %641 : vector<7x384xf32>
    %662 = arith.mulf %641, %641 : vector<7x384xf32>
    %663 = arith.addf %660, %662 : vector<7x384xf32>
    %664 = arith.addf %661, %645 : vector<7x384xf32>
    %665 = arith.mulf %645, %645 : vector<7x384xf32>
    %666 = arith.addf %663, %665 : vector<7x384xf32>
    %667 = arith.addf %664, %649 : vector<7x384xf32>
    %668 = arith.mulf %649, %649 : vector<7x384xf32>
    %669 = arith.addf %666, %668 : vector<7x384xf32>
    %670 = arith.addf %667, %653 : vector<7x384xf32>
    %671 = arith.mulf %653, %653 : vector<7x384xf32>
    %672 = arith.addf %669, %671 : vector<7x384xf32>
    %cst_463 = arith.constant dense<0.000000e+00> : vector<384xf32>
    %673 = vector.multi_reduction <add>, %670, %cst_463 [0] : vector<7x384xf32> to vector<384xf32>
    %674 = vector.shape_cast %673 : vector<384xf32> to vector<1x384xf32>
    %cst_464 = arith.constant dense<0.000000e+00> : vector<384xf32>
    %675 = vector.multi_reduction <add>, %672, %cst_464 [0] : vector<7x384xf32> to vector<384xf32>
    %676 = vector.shape_cast %675 : vector<384xf32> to vector<1x384xf32>
    %cst_465 = arith.constant 0.0204081628 : f32
    %677 = vector.broadcast %cst_465 : f32 to vector<1x384xf32>
    %678 = arith.mulf %674, %677 : vector<1x384xf32>
    %cst_466 = arith.constant 0.0204081628 : f32
    %679 = vector.broadcast %cst_466 : f32 to vector<1x384xf32>
    %680 = arith.mulf %676, %679 : vector<1x384xf32>
    %681 = arith.mulf %678, %678 : vector<1x384xf32>
    %682 = arith.subf %680, %681 : vector<1x384xf32>
    %cst_467 = arith.constant 9.99999974E-6 : f32
    %683 = vector.broadcast %cst_467 : f32 to vector<1x384xf32>
    %684 = arith.addf %682, %683 : vector<1x384xf32>
    %685 = math.rsqrt %684 : vector<1x384xf32>
    %c0_468 = arith.constant 0 : index
    %c384_469 = arith.constant 384 : index
    %686 = vector.load %arg3[%c0_468, %c384_469] : memref<1x1152xf32, #tpu.memory_space<vmem>>, vector<1x384xf32>
    %687 = arith.mulf %686, %685 : vector<1x384xf32>
    %c0_470 = arith.constant 0 : index
    %c384_471 = arith.constant 384 : index
    %688 = vector.load %arg4[%c0_470, %c384_471] : memref<1x1152xf32, #tpu.memory_space<vmem>>, vector<1x384xf32>
    %689 = arith.mulf %678, %687 : vector<1x384xf32>
    %690 = arith.subf %688, %689 : vector<1x384xf32>
    %691 = vector.shape_cast %687 : vector<1x384xf32> to vector<1x384xf32>
    %692 = vector.broadcast %691 : vector<1x384xf32> to vector<7x384xf32>
    %693 = vector.shape_cast %690 : vector<1x384xf32> to vector<1x384xf32>
    %694 = vector.broadcast %693 : vector<1x384xf32> to vector<7x384xf32>
    %695 = arith.mulf %629, %692 : vector<7x384xf32>
    %696 = arith.addf %695, %694 : vector<7x384xf32>
    %c0_472 = arith.constant 0 : index
    %c0_473 = arith.constant 0 : index
    %c384_474 = arith.constant 384 : index
    %697 = vector.load %arg5[%c0_472, %c0_473, %c384_474] : memref<7x7x1152xf32, #tpu.memory_space<vmem>>, vector<1x7x384xf32>
    %698 = vector.shape_cast %697 : vector<1x7x384xf32> to vector<7x384xf32>
    %699 = vector.shape_cast %696 : vector<7x384xf32> to vector<1x7x384xf32>
    tpu.vector_store %arg5[%c0_472, %c0_473, %c384_474], %699 {strides = array<i32>} : memref<7x7x1152xf32, #tpu.memory_space<vmem>>, vector<1x7x384xf32>,
    %700 = arith.mulf %633, %692 : vector<7x384xf32>
    %701 = arith.addf %700, %694 : vector<7x384xf32>
    %c1_475 = arith.constant 1 : index
    %c0_476 = arith.constant 0 : index
    %c384_477 = arith.constant 384 : index
    %702 = vector.load %arg5[%c1_475, %c0_476, %c384_477] : memref<7x7x1152xf32, #tpu.memory_space<vmem>>, vector<1x7x384xf32>
    %703 = vector.shape_cast %702 : vector<1x7x384xf32> to vector<7x384xf32>
    %704 = vector.shape_cast %701 : vector<7x384xf32> to vector<1x7x384xf32>
    tpu.vector_store %arg5[%c1_475, %c0_476, %c384_477], %704 {strides = array<i32>} : memref<7x7x1152xf32, #tpu.memory_space<vmem>>, vector<1x7x384xf32>,
    %705 = arith.mulf %637, %692 : vector<7x384xf32>
    %706 = arith.addf %705, %694 : vector<7x384xf32>
    %c2_478 = arith.constant 2 : index
    %c0_479 = arith.constant 0 : index
    %c384_480 = arith.constant 384 : index
    %707 = vector.load %arg5[%c2_478, %c0_479, %c384_480] : memref<7x7x1152xf32, #tpu.memory_space<vmem>>, vector<1x7x384xf32>
    %708 = vector.shape_cast %707 : vector<1x7x384xf32> to vector<7x384xf32>
    %709 = vector.shape_cast %706 : vector<7x384xf32> to vector<1x7x384xf32>
    tpu.vector_store %arg5[%c2_478, %c0_479, %c384_480], %709 {strides = array<i32>} : memref<7x7x1152xf32, #tpu.memory_space<vmem>>, vector<1x7x384xf32>,
    %710 = arith.mulf %641, %692 : vector<7x384xf32>
    %711 = arith.addf %710, %694 : vector<7x384xf32>
    %c3_481 = arith.constant 3 : index
    %c0_482 = arith.constant 0 : index
    %c384_483 = arith.constant 384 : index
    %712 = vector.load %arg5[%c3_481, %c0_482, %c384_483] : memref<7x7x1152xf32, #tpu.memory_space<vmem>>, vector<1x7x384xf32>
    %713 = vector.shape_cast %712 : vector<1x7x384xf32> to vector<7x384xf32>
    %714 = vector.shape_cast %711 : vector<7x384xf32> to vector<1x7x384xf32>
    tpu.vector_store %arg5[%c3_481, %c0_482, %c384_483], %714 {strides = array<i32>} : memref<7x7x1152xf32, #tpu.memory_space<vmem>>, vector<1x7x384xf32>,
    %715 = arith.mulf %645, %692 : vector<7x384xf32>
    %716 = arith.addf %715, %694 : vector<7x384xf32>
    %c4_484 = arith.constant 4 : index
    %c0_485 = arith.constant 0 : index
    %c384_486 = arith.constant 384 : index
    %717 = vector.load %arg5[%c4_484, %c0_485, %c384_486] : memref<7x7x1152xf32, #tpu.memory_space<vmem>>, vector<1x7x384xf32>
    %718 = vector.shape_cast %717 : vector<1x7x384xf32> to vector<7x384xf32>
    %719 = vector.shape_cast %716 : vector<7x384xf32> to vector<1x7x384xf32>
    tpu.vector_store %arg5[%c4_484, %c0_485, %c384_486], %719 {strides = array<i32>} : memref<7x7x1152xf32, #tpu.memory_space<vmem>>, vector<1x7x384xf32>,
    %720 = arith.mulf %649, %692 : vector<7x384xf32>
    %721 = arith.addf %720, %694 : vector<7x384xf32>
    %c5_487 = arith.constant 5 : index
    %c0_488 = arith.constant 0 : index
    %c384_489 = arith.constant 384 : index
    %722 = vector.load %arg5[%c5_487, %c0_488, %c384_489] : memref<7x7x1152xf32, #tpu.memory_space<vmem>>, vector<1x7x384xf32>
    %723 = vector.shape_cast %722 : vector<1x7x384xf32> to vector<7x384xf32>
    %724 = vector.shape_cast %721 : vector<7x384xf32> to vector<1x7x384xf32>
    tpu.vector_store %arg5[%c5_487, %c0_488, %c384_489], %724 {strides = array<i32>} : memref<7x7x1152xf32, #tpu.memory_space<vmem>>, vector<1x7x384xf32>,
    %725 = arith.mulf %653, %692 : vector<7x384xf32>
    %726 = arith.addf %725, %694 : vector<7x384xf32>
    %c6_490 = arith.constant 6 : index
    %c0_491 = arith.constant 0 : index
    %c384_492 = arith.constant 384 : index
    %727 = vector.load %arg5[%c6_490, %c0_491, %c384_492] : memref<7x7x1152xf32, #tpu.memory_space<vmem>>, vector<1x7x384xf32>
    %728 = vector.shape_cast %727 : vector<1x7x384xf32> to vector<7x384xf32>
    %729 = vector.shape_cast %726 : vector<7x384xf32> to vector<1x7x384xf32>
    tpu.vector_store %arg5[%c6_490, %c0_491, %c384_492], %729 {strides = array<i32>} : memref<7x7x1152xf32, #tpu.memory_space<vmem>>, vector<1x7x384xf32>,
    %c0_493 = arith.constant 0 : index
    %c0_494 = arith.constant 0 : index
    %c768 = arith.constant 768 : index
    %730 = vector.load %arg1[%c0_493, %c0_494, %c768] : memref<7x7x1152xf32, #tpu.memory_space<vmem>>, vector<7x7x384xf32>
    %c1_495 = arith.constant 1 : index
    %c1_496 = arith.constant 1 : index
    %c0_497 = arith.constant 0 : index
    %731 = vector.load %arg6[%c1_495, %c1_496, %c0_497] : memref<9x9x384xf32, #tpu.memory_space<vmem>>, vector<7x7x384xf32>
    tpu.vector_store %arg6[%c1_495, %c1_496, %c0_497], %730 {strides = array<i32>} : memref<9x9x384xf32, #tpu.memory_space<vmem>>, vector<7x7x384xf32>,
    %cst_498 = arith.constant 0.000000e+00 : f32
    %732 = vector.broadcast %cst_498 : f32 to vector<7x384xf32>
    %cst_499 = arith.constant 0.000000e+00 : f32
    %733 = vector.broadcast %cst_499 : f32 to vector<7x384xf32>
    %cst_500 = arith.constant 0.000000e+00 : f32
    %734 = vector.broadcast %cst_500 : f32 to vector<7x384xf32>
    %cst_501 = arith.constant 0.000000e+00 : f32
    %735 = vector.broadcast %cst_501 : f32 to vector<7x384xf32>
    %cst_502 = arith.constant 0.000000e+00 : f32
    %736 = vector.broadcast %cst_502 : f32 to vector<7x384xf32>
    %cst_503 = arith.constant 0.000000e+00 : f32
    %737 = vector.broadcast %cst_503 : f32 to vector<7x384xf32>
    %cst_504 = arith.constant 0.000000e+00 : f32
    %738 = vector.broadcast %cst_504 : f32 to vector<7x384xf32>
    %c0_505 = arith.constant 0 : index
    %c768_506 = arith.constant 768 : index
    %739 = vector.load %arg2[%c0_505, %c768_506] : memref<9x1152xf32, #tpu.memory_space<vmem>>, vector<1x384xf32>
    %740 = vector.shape_cast %739 : vector<1x384xf32> to vector<1x384xf32>
    %741 = vector.broadcast %740 : vector<1x384xf32> to vector<7x384xf32>
    %c0_507 = arith.constant 0 : index
    %c0_508 = arith.constant 0 : index
    %c0_509 = arith.constant 0 : index
    %742 = vector.load %arg6[%c0_507, %c0_508, %c0_509] : memref<9x9x384xf32, #tpu.memory_space<vmem>>, vector<1x7x384xf32>
    %743 = vector.shape_cast %742 : vector<1x7x384xf32> to vector<7x384xf32>
    %744 = arith.mulf %743, %741 : vector<7x384xf32>
    %745 = arith.addf %732, %744 : vector<7x384xf32>
    %c1_510 = arith.constant 1 : index
    %c0_511 = arith.constant 0 : index
    %c0_512 = arith.constant 0 : index
    %746 = vector.load %arg6[%c1_510, %c0_511, %c0_512] : memref<9x9x384xf32, #tpu.memory_space<vmem>>, vector<1x7x384xf32>
    %747 = vector.shape_cast %746 : vector<1x7x384xf32> to vector<7x384xf32>
    %748 = arith.mulf %747, %741 : vector<7x384xf32>
    %749 = arith.addf %733, %748 : vector<7x384xf32>
    %c2_513 = arith.constant 2 : index
    %c0_514 = arith.constant 0 : index
    %c0_515 = arith.constant 0 : index
    %750 = vector.load %arg6[%c2_513, %c0_514, %c0_515] : memref<9x9x384xf32, #tpu.memory_space<vmem>>, vector<1x7x384xf32>
    %751 = vector.shape_cast %750 : vector<1x7x384xf32> to vector<7x384xf32>
    %752 = arith.mulf %751, %741 : vector<7x384xf32>
    %753 = arith.addf %734, %752 : vector<7x384xf32>
    %c3_516 = arith.constant 3 : index
    %c0_517 = arith.constant 0 : index
    %c0_518 = arith.constant 0 : index
    %754 = vector.load %arg6[%c3_516, %c0_517, %c0_518] : memref<9x9x384xf32, #tpu.memory_space<vmem>>, vector<1x7x384xf32>
    %755 = vector.shape_cast %754 : vector<1x7x384xf32> to vector<7x384xf32>
    %756 = arith.mulf %755, %741 : vector<7x384xf32>
    %757 = arith.addf %735, %756 : vector<7x384xf32>
    %c4_519 = arith.constant 4 : index
    %c0_520 = arith.constant 0 : index
    %c0_521 = arith.constant 0 : index
    %758 = vector.load %arg6[%c4_519, %c0_520, %c0_521] : memref<9x9x384xf32, #tpu.memory_space<vmem>>, vector<1x7x384xf32>
    %759 = vector.shape_cast %758 : vector<1x7x384xf32> to vector<7x384xf32>
    %760 = arith.mulf %759, %741 : vector<7x384xf32>
    %761 = arith.addf %736, %760 : vector<7x384xf32>
    %c5_522 = arith.constant 5 : index
    %c0_523 = arith.constant 0 : index
    %c0_524 = arith.constant 0 : index
    %762 = vector.load %arg6[%c5_522, %c0_523, %c0_524] : memref<9x9x384xf32, #tpu.memory_space<vmem>>, vector<1x7x384xf32>
    %763 = vector.shape_cast %762 : vector<1x7x384xf32> to vector<7x384xf32>
    %764 = arith.mulf %763, %741 : vector<7x384xf32>
    %765 = arith.addf %737, %764 : vector<7x384xf32>
    %c6_525 = arith.constant 6 : index
    %c0_526 = arith.constant 0 : index
    %c0_527 = arith.constant 0 : index
    %766 = vector.load %arg6[%c6_525, %c0_526, %c0_527] : memref<9x9x384xf32, #tpu.memory_space<vmem>>, vector<1x7x384xf32>
    %767 = vector.shape_cast %766 : vector<1x7x384xf32> to vector<7x384xf32>
    %768 = arith.mulf %767, %741 : vector<7x384xf32>
    %769 = arith.addf %738, %768 : vector<7x384xf32>
    %c1_528 = arith.constant 1 : index
    %c768_529 = arith.constant 768 : index
    %770 = vector.load %arg2[%c1_528, %c768_529] : memref<9x1152xf32, #tpu.memory_space<vmem>>, vector<1x384xf32>
    %771 = vector.shape_cast %770 : vector<1x384xf32> to vector<1x384xf32>
    %772 = vector.broadcast %771 : vector<1x384xf32> to vector<7x384xf32>
    %c0_530 = arith.constant 0 : index
    %c1_531 = arith.constant 1 : index
    %c0_532 = arith.constant 0 : index
    %773 = vector.load %arg6[%c0_530, %c1_531, %c0_532] : memref<9x9x384xf32, #tpu.memory_space<vmem>>, vector<1x7x384xf32>
    %774 = vector.shape_cast %773 : vector<1x7x384xf32> to vector<7x384xf32>
    %775 = arith.mulf %774, %772 : vector<7x384xf32>
    %776 = arith.addf %745, %775 : vector<7x384xf32>
    %c1_533 = arith.constant 1 : index
    %c1_534 = arith.constant 1 : index
    %c0_535 = arith.constant 0 : index
    %777 = vector.load %arg6[%c1_533, %c1_534, %c0_535] : memref<9x9x384xf32, #tpu.memory_space<vmem>>, vector<1x7x384xf32>
    %778 = vector.shape_cast %777 : vector<1x7x384xf32> to vector<7x384xf32>
    %779 = arith.mulf %778, %772 : vector<7x384xf32>
    %780 = arith.addf %749, %779 : vector<7x384xf32>
    %c2_536 = arith.constant 2 : index
    %c1_537 = arith.constant 1 : index
    %c0_538 = arith.constant 0 : index
    %781 = vector.load %arg6[%c2_536, %c1_537, %c0_538] : memref<9x9x384xf32, #tpu.memory_space<vmem>>, vector<1x7x384xf32>
    %782 = vector.shape_cast %781 : vector<1x7x384xf32> to vector<7x384xf32>
    %783 = arith.mulf %782, %772 : vector<7x384xf32>
    %784 = arith.addf %753, %783 : vector<7x384xf32>
    %c3_539 = arith.constant 3 : index
    %c1_540 = arith.constant 1 : index
    %c0_541 = arith.constant 0 : index
    %785 = vector.load %arg6[%c3_539, %c1_540, %c0_541] : memref<9x9x384xf32, #tpu.memory_space<vmem>>, vector<1x7x384xf32>
    %786 = vector.shape_cast %785 : vector<1x7x384xf32> to vector<7x384xf32>
    %787 = arith.mulf %786, %772 : vector<7x384xf32>
    %788 = arith.addf %757, %787 : vector<7x384xf32>
    %c4_542 = arith.constant 4 : index
    %c1_543 = arith.constant 1 : index
    %c0_544 = arith.constant 0 : index
    %789 = vector.load %arg6[%c4_542, %c1_543, %c0_544] : memref<9x9x384xf32, #tpu.memory_space<vmem>>, vector<1x7x384xf32>
    %790 = vector.shape_cast %789 : vector<1x7x384xf32> to vector<7x384xf32>
    %791 = arith.mulf %790, %772 : vector<7x384xf32>
    %792 = arith.addf %761, %791 : vector<7x384xf32>
    %c5_545 = arith.constant 5 : index
    %c1_546 = arith.constant 1 : index
    %c0_547 = arith.constant 0 : index
    %793 = vector.load %arg6[%c5_545, %c1_546, %c0_547] : memref<9x9x384xf32, #tpu.memory_space<vmem>>, vector<1x7x384xf32>
    %794 = vector.shape_cast %793 : vector<1x7x384xf32> to vector<7x384xf32>
    %795 = arith.mulf %794, %772 : vector<7x384xf32>
    %796 = arith.addf %765, %795 : vector<7x384xf32>
    %c6_548 = arith.constant 6 : index
    %c1_549 = arith.constant 1 : index
    %c0_550 = arith.constant 0 : index
    %797 = vector.load %arg6[%c6_548, %c1_549, %c0_550] : memref<9x9x384xf32, #tpu.memory_space<vmem>>, vector<1x7x384xf32>
    %798 = vector.shape_cast %797 : vector<1x7x384xf32> to vector<7x384xf32>
    %799 = arith.mulf %798, %772 : vector<7x384xf32>
    %800 = arith.addf %769, %799 : vector<7x384xf32>
    %c2_551 = arith.constant 2 : index
    %c768_552 = arith.constant 768 : index
    %801 = vector.load %arg2[%c2_551, %c768_552] : memref<9x1152xf32, #tpu.memory_space<vmem>>, vector<1x384xf32>
    %802 = vector.shape_cast %801 : vector<1x384xf32> to vector<1x384xf32>
    %803 = vector.broadcast %802 : vector<1x384xf32> to vector<7x384xf32>
    %c0_553 = arith.constant 0 : index
    %c2_554 = arith.constant 2 : index
    %c0_555 = arith.constant 0 : index
    %804 = vector.load %arg6[%c0_553, %c2_554, %c0_555] : memref<9x9x384xf32, #tpu.memory_space<vmem>>, vector<1x7x384xf32>
    %805 = vector.shape_cast %804 : vector<1x7x384xf32> to vector<7x384xf32>
    %806 = arith.mulf %805, %803 : vector<7x384xf32>
    %807 = arith.addf %776, %806 : vector<7x384xf32>
    %c1_556 = arith.constant 1 : index
    %c2_557 = arith.constant 2 : index
    %c0_558 = arith.constant 0 : index
    %808 = vector.load %arg6[%c1_556, %c2_557, %c0_558] : memref<9x9x384xf32, #tpu.memory_space<vmem>>, vector<1x7x384xf32>
    %809 = vector.shape_cast %808 : vector<1x7x384xf32> to vector<7x384xf32>
    %810 = arith.mulf %809, %803 : vector<7x384xf32>
    %811 = arith.addf %780, %810 : vector<7x384xf32>
    %c2_559 = arith.constant 2 : index
    %c2_560 = arith.constant 2 : index
    %c0_561 = arith.constant 0 : index
    %812 = vector.load %arg6[%c2_559, %c2_560, %c0_561] : memref<9x9x384xf32, #tpu.memory_space<vmem>>, vector<1x7x384xf32>
    %813 = vector.shape_cast %812 : vector<1x7x384xf32> to vector<7x384xf32>
    %814 = arith.mulf %813, %803 : vector<7x384xf32>
    %815 = arith.addf %784, %814 : vector<7x384xf32>
    %c3_562 = arith.constant 3 : index
    %c2_563 = arith.constant 2 : index
    %c0_564 = arith.constant 0 : index
    %816 = vector.load %arg6[%c3_562, %c2_563, %c0_564] : memref<9x9x384xf32, #tpu.memory_space<vmem>>, vector<1x7x384xf32>
    %817 = vector.shape_cast %816 : vector<1x7x384xf32> to vector<7x384xf32>
    %818 = arith.mulf %817, %803 : vector<7x384xf32>
    %819 = arith.addf %788, %818 : vector<7x384xf32>
    %c4_565 = arith.constant 4 : index
    %c2_566 = arith.constant 2 : index
    %c0_567 = arith.constant 0 : index
    %820 = vector.load %arg6[%c4_565, %c2_566, %c0_567] : memref<9x9x384xf32, #tpu.memory_space<vmem>>, vector<1x7x384xf32>
    %821 = vector.shape_cast %820 : vector<1x7x384xf32> to vector<7x384xf32>
    %822 = arith.mulf %821, %803 : vector<7x384xf32>
    %823 = arith.addf %792, %822 : vector<7x384xf32>
    %c5_568 = arith.constant 5 : index
    %c2_569 = arith.constant 2 : index
    %c0_570 = arith.constant 0 : index
    %824 = vector.load %arg6[%c5_568, %c2_569, %c0_570] : memref<9x9x384xf32, #tpu.memory_space<vmem>>, vector<1x7x384xf32>
    %825 = vector.shape_cast %824 : vector<1x7x384xf32> to vector<7x384xf32>
    %826 = arith.mulf %825, %803 : vector<7x384xf32>
    %827 = arith.addf %796, %826 : vector<7x384xf32>
    %c6_571 = arith.constant 6 : index
    %c2_572 = arith.constant 2 : index
    %c0_573 = arith.constant 0 : index
    %828 = vector.load %arg6[%c6_571, %c2_572, %c0_573] : memref<9x9x384xf32, #tpu.memory_space<vmem>>, vector<1x7x384xf32>
    %829 = vector.shape_cast %828 : vector<1x7x384xf32> to vector<7x384xf32>
    %830 = arith.mulf %829, %803 : vector<7x384xf32>
    %831 = arith.addf %800, %830 : vector<7x384xf32>
    %c3_574 = arith.constant 3 : index
    %c768_575 = arith.constant 768 : index
    %832 = vector.load %arg2[%c3_574, %c768_575] : memref<9x1152xf32, #tpu.memory_space<vmem>>, vector<1x384xf32>
    %833 = vector.shape_cast %832 : vector<1x384xf32> to vector<1x384xf32>
    %834 = vector.broadcast %833 : vector<1x384xf32> to vector<7x384xf32>
    %c1_576 = arith.constant 1 : index
    %c0_577 = arith.constant 0 : index
    %c0_578 = arith.constant 0 : index
    %835 = vector.load %arg6[%c1_576, %c0_577, %c0_578] : memref<9x9x384xf32, #tpu.memory_space<vmem>>, vector<1x7x384xf32>
    %836 = vector.shape_cast %835 : vector<1x7x384xf32> to vector<7x384xf32>
    %837 = arith.mulf %836, %834 : vector<7x384xf32>
    %838 = arith.addf %807, %837 : vector<7x384xf32>
    %c2_579 = arith.constant 2 : index
    %c0_580 = arith.constant 0 : index
    %c0_581 = arith.constant 0 : index
    %839 = vector.load %arg6[%c2_579, %c0_580, %c0_581] : memref<9x9x384xf32, #tpu.memory_space<vmem>>, vector<1x7x384xf32>
    %840 = vector.shape_cast %839 : vector<1x7x384xf32> to vector<7x384xf32>
    %841 = arith.mulf %840, %834 : vector<7x384xf32>
    %842 = arith.addf %811, %841 : vector<7x384xf32>
    %c3_582 = arith.constant 3 : index
    %c0_583 = arith.constant 0 : index
    %c0_584 = arith.constant 0 : index
    %843 = vector.load %arg6[%c3_582, %c0_583, %c0_584] : memref<9x9x384xf32, #tpu.memory_space<vmem>>, vector<1x7x384xf32>
    %844 = vector.shape_cast %843 : vector<1x7x384xf32> to vector<7x384xf32>
    %845 = arith.mulf %844, %834 : vector<7x384xf32>
    %846 = arith.addf %815, %845 : vector<7x384xf32>
    %c4_585 = arith.constant 4 : index
    %c0_586 = arith.constant 0 : index
    %c0_587 = arith.constant 0 : index
    %847 = vector.load %arg6[%c4_585, %c0_586, %c0_587] : memref<9x9x384xf32, #tpu.memory_space<vmem>>, vector<1x7x384xf32>
    %848 = vector.shape_cast %847 : vector<1x7x384xf32> to vector<7x384xf32>
    %849 = arith.mulf %848, %834 : vector<7x384xf32>
    %850 = arith.addf %819, %849 : vector<7x384xf32>
    %c5_588 = arith.constant 5 : index
    %c0_589 = arith.constant 0 : index
    %c0_590 = arith.constant 0 : index
    %851 = vector.load %arg6[%c5_588, %c0_589, %c0_590] : memref<9x9x384xf32, #tpu.memory_space<vmem>>, vector<1x7x384xf32>
    %852 = vector.shape_cast %851 : vector<1x7x384xf32> to vector<7x384xf32>
    %853 = arith.mulf %852, %834 : vector<7x384xf32>
    %854 = arith.addf %823, %853 : vector<7x384xf32>
    %c6_591 = arith.constant 6 : index
    %c0_592 = arith.constant 0 : index
    %c0_593 = arith.constant 0 : index
    %855 = vector.load %arg6[%c6_591, %c0_592, %c0_593] : memref<9x9x384xf32, #tpu.memory_space<vmem>>, vector<1x7x384xf32>
    %856 = vector.shape_cast %855 : vector<1x7x384xf32> to vector<7x384xf32>
    %857 = arith.mulf %856, %834 : vector<7x384xf32>
    %858 = arith.addf %827, %857 : vector<7x384xf32>
    %c7_594 = arith.constant 7 : index
    %c0_595 = arith.constant 0 : index
    %c0_596 = arith.constant 0 : index
    %859 = vector.load %arg6[%c7_594, %c0_595, %c0_596] : memref<9x9x384xf32, #tpu.memory_space<vmem>>, vector<1x7x384xf32>
    %860 = vector.shape_cast %859 : vector<1x7x384xf32> to vector<7x384xf32>
    %861 = arith.mulf %860, %834 : vector<7x384xf32>
    %862 = arith.addf %831, %861 : vector<7x384xf32>
    %c4_597 = arith.constant 4 : index
    %c768_598 = arith.constant 768 : index
    %863 = vector.load %arg2[%c4_597, %c768_598] : memref<9x1152xf32, #tpu.memory_space<vmem>>, vector<1x384xf32>
    %864 = vector.shape_cast %863 : vector<1x384xf32> to vector<1x384xf32>
    %865 = vector.broadcast %864 : vector<1x384xf32> to vector<7x384xf32>
    %c1_599 = arith.constant 1 : index
    %c1_600 = arith.constant 1 : index
    %c0_601 = arith.constant 0 : index
    %866 = vector.load %arg6[%c1_599, %c1_600, %c0_601] : memref<9x9x384xf32, #tpu.memory_space<vmem>>, vector<1x7x384xf32>
    %867 = vector.shape_cast %866 : vector<1x7x384xf32> to vector<7x384xf32>
    %868 = arith.mulf %867, %865 : vector<7x384xf32>
    %869 = arith.addf %838, %868 : vector<7x384xf32>
    %c2_602 = arith.constant 2 : index
    %c1_603 = arith.constant 1 : index
    %c0_604 = arith.constant 0 : index
    %870 = vector.load %arg6[%c2_602, %c1_603, %c0_604] : memref<9x9x384xf32, #tpu.memory_space<vmem>>, vector<1x7x384xf32>
    %871 = vector.shape_cast %870 : vector<1x7x384xf32> to vector<7x384xf32>
    %872 = arith.mulf %871, %865 : vector<7x384xf32>
    %873 = arith.addf %842, %872 : vector<7x384xf32>
    %c3_605 = arith.constant 3 : index
    %c1_606 = arith.constant 1 : index
    %c0_607 = arith.constant 0 : index
    %874 = vector.load %arg6[%c3_605, %c1_606, %c0_607] : memref<9x9x384xf32, #tpu.memory_space<vmem>>, vector<1x7x384xf32>
    %875 = vector.shape_cast %874 : vector<1x7x384xf32> to vector<7x384xf32>
    %876 = arith.mulf %875, %865 : vector<7x384xf32>
    %877 = arith.addf %846, %876 : vector<7x384xf32>
    %c4_608 = arith.constant 4 : index
    %c1_609 = arith.constant 1 : index
    %c0_610 = arith.constant 0 : index
    %878 = vector.load %arg6[%c4_608, %c1_609, %c0_610] : memref<9x9x384xf32, #tpu.memory_space<vmem>>, vector<1x7x384xf32>
    %879 = vector.shape_cast %878 : vector<1x7x384xf32> to vector<7x384xf32>
    %880 = arith.mulf %879, %865 : vector<7x384xf32>
    %881 = arith.addf %850, %880 : vector<7x384xf32>
    %c5_611 = arith.constant 5 : index
    %c1_612 = arith.constant 1 : index
    %c0_613 = arith.constant 0 : index
    %882 = vector.load %arg6[%c5_611, %c1_612, %c0_613] : memref<9x9x384xf32, #tpu.memory_space<vmem>>, vector<1x7x384xf32>
    %883 = vector.shape_cast %882 : vector<1x7x384xf32> to vector<7x384xf32>
    %884 = arith.mulf %883, %865 : vector<7x384xf32>
    %885 = arith.addf %854, %884 : vector<7x384xf32>
    %c6_614 = arith.constant 6 : index
    %c1_615 = arith.constant 1 : index
    %c0_616 = arith.constant 0 : index
    %886 = vector.load %arg6[%c6_614, %c1_615, %c0_616] : memref<9x9x384xf32, #tpu.memory_space<vmem>>, vector<1x7x384xf32>
    %887 = vector.shape_cast %886 : vector<1x7x384xf32> to vector<7x384xf32>
    %888 = arith.mulf %887, %865 : vector<7x384xf32>
    %889 = arith.addf %858, %888 : vector<7x384xf32>
    %c7_617 = arith.constant 7 : index
    %c1_618 = arith.constant 1 : index
    %c0_619 = arith.constant 0 : index
    %890 = vector.load %arg6[%c7_617, %c1_618, %c0_619] : memref<9x9x384xf32, #tpu.memory_space<vmem>>, vector<1x7x384xf32>
    %891 = vector.shape_cast %890 : vector<1x7x384xf32> to vector<7x384xf32>
    %892 = arith.mulf %891, %865 : vector<7x384xf32>
    %893 = arith.addf %862, %892 : vector<7x384xf32>
    %c5_620 = arith.constant 5 : index
    %c768_621 = arith.constant 768 : index
    %894 = vector.load %arg2[%c5_620, %c768_621] : memref<9x1152xf32, #tpu.memory_space<vmem>>, vector<1x384xf32>
    %895 = vector.shape_cast %894 : vector<1x384xf32> to vector<1x384xf32>
    %896 = vector.broadcast %895 : vector<1x384xf32> to vector<7x384xf32>
    %c1_622 = arith.constant 1 : index
    %c2_623 = arith.constant 2 : index
    %c0_624 = arith.constant 0 : index
    %897 = vector.load %arg6[%c1_622, %c2_623, %c0_624] : memref<9x9x384xf32, #tpu.memory_space<vmem>>, vector<1x7x384xf32>
    %898 = vector.shape_cast %897 : vector<1x7x384xf32> to vector<7x384xf32>
    %899 = arith.mulf %898, %896 : vector<7x384xf32>
    %900 = arith.addf %869, %899 : vector<7x384xf32>
    %c2_625 = arith.constant 2 : index
    %c2_626 = arith.constant 2 : index
    %c0_627 = arith.constant 0 : index
    %901 = vector.load %arg6[%c2_625, %c2_626, %c0_627] : memref<9x9x384xf32, #tpu.memory_space<vmem>>, vector<1x7x384xf32>
    %902 = vector.shape_cast %901 : vector<1x7x384xf32> to vector<7x384xf32>
    %903 = arith.mulf %902, %896 : vector<7x384xf32>
    %904 = arith.addf %873, %903 : vector<7x384xf32>
    %c3_628 = arith.constant 3 : index
    %c2_629 = arith.constant 2 : index
    %c0_630 = arith.constant 0 : index
    %905 = vector.load %arg6[%c3_628, %c2_629, %c0_630] : memref<9x9x384xf32, #tpu.memory_space<vmem>>, vector<1x7x384xf32>
    %906 = vector.shape_cast %905 : vector<1x7x384xf32> to vector<7x384xf32>
    %907 = arith.mulf %906, %896 : vector<7x384xf32>
    %908 = arith.addf %877, %907 : vector<7x384xf32>
    %c4_631 = arith.constant 4 : index
    %c2_632 = arith.constant 2 : index
    %c0_633 = arith.constant 0 : index
    %909 = vector.load %arg6[%c4_631, %c2_632, %c0_633] : memref<9x9x384xf32, #tpu.memory_space<vmem>>, vector<1x7x384xf32>
    %910 = vector.shape_cast %909 : vector<1x7x384xf32> to vector<7x384xf32>
    %911 = arith.mulf %910, %896 : vector<7x384xf32>
    %912 = arith.addf %881, %911 : vector<7x384xf32>
    %c5_634 = arith.constant 5 : index
    %c2_635 = arith.constant 2 : index
    %c0_636 = arith.constant 0 : index
    %913 = vector.load %arg6[%c5_634, %c2_635, %c0_636] : memref<9x9x384xf32, #tpu.memory_space<vmem>>, vector<1x7x384xf32>
    %914 = vector.shape_cast %913 : vector<1x7x384xf32> to vector<7x384xf32>
    %915 = arith.mulf %914, %896 : vector<7x384xf32>
    %916 = arith.addf %885, %915 : vector<7x384xf32>
    %c6_637 = arith.constant 6 : index
    %c2_638 = arith.constant 2 : index
    %c0_639 = arith.constant 0 : index
    %917 = vector.load %arg6[%c6_637, %c2_638, %c0_639] : memref<9x9x384xf32, #tpu.memory_space<vmem>>, vector<1x7x384xf32>
    %918 = vector.shape_cast %917 : vector<1x7x384xf32> to vector<7x384xf32>
    %919 = arith.mulf %918, %896 : vector<7x384xf32>
    %920 = arith.addf %889, %919 : vector<7x384xf32>
    %c7_640 = arith.constant 7 : index
    %c2_641 = arith.constant 2 : index
    %c0_642 = arith.constant 0 : index
    %921 = vector.load %arg6[%c7_640, %c2_641, %c0_642] : memref<9x9x384xf32, #tpu.memory_space<vmem>>, vector<1x7x384xf32>
    %922 = vector.shape_cast %921 : vector<1x7x384xf32> to vector<7x384xf32>
    %923 = arith.mulf %922, %896 : vector<7x384xf32>
    %924 = arith.addf %893, %923 : vector<7x384xf32>
    %c6_643 = arith.constant 6 : index
    %c768_644 = arith.constant 768 : index
    %925 = vector.load %arg2[%c6_643, %c768_644] : memref<9x1152xf32, #tpu.memory_space<vmem>>, vector<1x384xf32>
    %926 = vector.shape_cast %925 : vector<1x384xf32> to vector<1x384xf32>
    %927 = vector.broadcast %926 : vector<1x384xf32> to vector<7x384xf32>
    %c2_645 = arith.constant 2 : index
    %c0_646 = arith.constant 0 : index
    %c0_647 = arith.constant 0 : index
    %928 = vector.load %arg6[%c2_645, %c0_646, %c0_647] : memref<9x9x384xf32, #tpu.memory_space<vmem>>, vector<1x7x384xf32>
    %929 = vector.shape_cast %928 : vector<1x7x384xf32> to vector<7x384xf32>
    %930 = arith.mulf %929, %927 : vector<7x384xf32>
    %931 = arith.addf %900, %930 : vector<7x384xf32>
    %c3_648 = arith.constant 3 : index
    %c0_649 = arith.constant 0 : index
    %c0_650 = arith.constant 0 : index
    %932 = vector.load %arg6[%c3_648, %c0_649, %c0_650] : memref<9x9x384xf32, #tpu.memory_space<vmem>>, vector<1x7x384xf32>
    %933 = vector.shape_cast %932 : vector<1x7x384xf32> to vector<7x384xf32>
    %934 = arith.mulf %933, %927 : vector<7x384xf32>
    %935 = arith.addf %904, %934 : vector<7x384xf32>
    %c4_651 = arith.constant 4 : index
    %c0_652 = arith.constant 0 : index
    %c0_653 = arith.constant 0 : index
    %936 = vector.load %arg6[%c4_651, %c0_652, %c0_653] : memref<9x9x384xf32, #tpu.memory_space<vmem>>, vector<1x7x384xf32>
    %937 = vector.shape_cast %936 : vector<1x7x384xf32> to vector<7x384xf32>
    %938 = arith.mulf %937, %927 : vector<7x384xf32>
    %939 = arith.addf %908, %938 : vector<7x384xf32>
    %c5_654 = arith.constant 5 : index
    %c0_655 = arith.constant 0 : index
    %c0_656 = arith.constant 0 : index
    %940 = vector.load %arg6[%c5_654, %c0_655, %c0_656] : memref<9x9x384xf32, #tpu.memory_space<vmem>>, vector<1x7x384xf32>
    %941 = vector.shape_cast %940 : vector<1x7x384xf32> to vector<7x384xf32>
    %942 = arith.mulf %941, %927 : vector<7x384xf32>
    %943 = arith.addf %912, %942 : vector<7x384xf32>
    %c6_657 = arith.constant 6 : index
    %c0_658 = arith.constant 0 : index
    %c0_659 = arith.constant 0 : index
    %944 = vector.load %arg6[%c6_657, %c0_658, %c0_659] : memref<9x9x384xf32, #tpu.memory_space<vmem>>, vector<1x7x384xf32>
    %945 = vector.shape_cast %944 : vector<1x7x384xf32> to vector<7x384xf32>
    %946 = arith.mulf %945, %927 : vector<7x384xf32>
    %947 = arith.addf %916, %946 : vector<7x384xf32>
    %c7_660 = arith.constant 7 : index
    %c0_661 = arith.constant 0 : index
    %c0_662 = arith.constant 0 : index
    %948 = vector.load %arg6[%c7_660, %c0_661, %c0_662] : memref<9x9x384xf32, #tpu.memory_space<vmem>>, vector<1x7x384xf32>
    %949 = vector.shape_cast %948 : vector<1x7x384xf32> to vector<7x384xf32>
    %950 = arith.mulf %949, %927 : vector<7x384xf32>
    %951 = arith.addf %920, %950 : vector<7x384xf32>
    %c8_663 = arith.constant 8 : index
    %c0_664 = arith.constant 0 : index
    %c0_665 = arith.constant 0 : index
    %952 = vector.load %arg6[%c8_663, %c0_664, %c0_665] : memref<9x9x384xf32, #tpu.memory_space<vmem>>, vector<1x7x384xf32>
    %953 = vector.shape_cast %952 : vector<1x7x384xf32> to vector<7x384xf32>
    %954 = arith.mulf %953, %927 : vector<7x384xf32>
    %955 = arith.addf %924, %954 : vector<7x384xf32>
    %c7_666 = arith.constant 7 : index
    %c768_667 = arith.constant 768 : index
    %956 = vector.load %arg2[%c7_666, %c768_667] : memref<9x1152xf32, #tpu.memory_space<vmem>>, vector<1x384xf32>
    %957 = vector.shape_cast %956 : vector<1x384xf32> to vector<1x384xf32>
    %958 = vector.broadcast %957 : vector<1x384xf32> to vector<7x384xf32>
    %c2_668 = arith.constant 2 : index
    %c1_669 = arith.constant 1 : index
    %c0_670 = arith.constant 0 : index
    %959 = vector.load %arg6[%c2_668, %c1_669, %c0_670] : memref<9x9x384xf32, #tpu.memory_space<vmem>>, vector<1x7x384xf32>
    %960 = vector.shape_cast %959 : vector<1x7x384xf32> to vector<7x384xf32>
    %961 = arith.mulf %960, %958 : vector<7x384xf32>
    %962 = arith.addf %931, %961 : vector<7x384xf32>
    %c3_671 = arith.constant 3 : index
    %c1_672 = arith.constant 1 : index
    %c0_673 = arith.constant 0 : index
    %963 = vector.load %arg6[%c3_671, %c1_672, %c0_673] : memref<9x9x384xf32, #tpu.memory_space<vmem>>, vector<1x7x384xf32>
    %964 = vector.shape_cast %963 : vector<1x7x384xf32> to vector<7x384xf32>
    %965 = arith.mulf %964, %958 : vector<7x384xf32>
    %966 = arith.addf %935, %965 : vector<7x384xf32>
    %c4_674 = arith.constant 4 : index
    %c1_675 = arith.constant 1 : index
    %c0_676 = arith.constant 0 : index
    %967 = vector.load %arg6[%c4_674, %c1_675, %c0_676] : memref<9x9x384xf32, #tpu.memory_space<vmem>>, vector<1x7x384xf32>
    %968 = vector.shape_cast %967 : vector<1x7x384xf32> to vector<7x384xf32>
    %969 = arith.mulf %968, %958 : vector<7x384xf32>
    %970 = arith.addf %939, %969 : vector<7x384xf32>
    %c5_677 = arith.constant 5 : index
    %c1_678 = arith.constant 1 : index
    %c0_679 = arith.constant 0 : index
    %971 = vector.load %arg6[%c5_677, %c1_678, %c0_679] : memref<9x9x384xf32, #tpu.memory_space<vmem>>, vector<1x7x384xf32>
    %972 = vector.shape_cast %971 : vector<1x7x384xf32> to vector<7x384xf32>
    %973 = arith.mulf %972, %958 : vector<7x384xf32>
    %974 = arith.addf %943, %973 : vector<7x384xf32>
    %c6_680 = arith.constant 6 : index
    %c1_681 = arith.constant 1 : index
    %c0_682 = arith.constant 0 : index
    %975 = vector.load %arg6[%c6_680, %c1_681, %c0_682] : memref<9x9x384xf32, #tpu.memory_space<vmem>>, vector<1x7x384xf32>
    %976 = vector.shape_cast %975 : vector<1x7x384xf32> to vector<7x384xf32>
    %977 = arith.mulf %976, %958 : vector<7x384xf32>
    %978 = arith.addf %947, %977 : vector<7x384xf32>
    %c7_683 = arith.constant 7 : index
    %c1_684 = arith.constant 1 : index
    %c0_685 = arith.constant 0 : index
    %979 = vector.load %arg6[%c7_683, %c1_684, %c0_685] : memref<9x9x384xf32, #tpu.memory_space<vmem>>, vector<1x7x384xf32>
    %980 = vector.shape_cast %979 : vector<1x7x384xf32> to vector<7x384xf32>
    %981 = arith.mulf %980, %958 : vector<7x384xf32>
    %982 = arith.addf %951, %981 : vector<7x384xf32>
    %c8_686 = arith.constant 8 : index
    %c1_687 = arith.constant 1 : index
    %c0_688 = arith.constant 0 : index
    %983 = vector.load %arg6[%c8_686, %c1_687, %c0_688] : memref<9x9x384xf32, #tpu.memory_space<vmem>>, vector<1x7x384xf32>
    %984 = vector.shape_cast %983 : vector<1x7x384xf32> to vector<7x384xf32>
    %985 = arith.mulf %984, %958 : vector<7x384xf32>
    %986 = arith.addf %955, %985 : vector<7x384xf32>
    %c8_689 = arith.constant 8 : index
    %c768_690 = arith.constant 768 : index
    %987 = vector.load %arg2[%c8_689, %c768_690] : memref<9x1152xf32, #tpu.memory_space<vmem>>, vector<1x384xf32>
    %988 = vector.shape_cast %987 : vector<1x384xf32> to vector<1x384xf32>
    %989 = vector.broadcast %988 : vector<1x384xf32> to vector<7x384xf32>
    %c2_691 = arith.constant 2 : index
    %c2_692 = arith.constant 2 : index
    %c0_693 = arith.constant 0 : index
    %990 = vector.load %arg6[%c2_691, %c2_692, %c0_693] : memref<9x9x384xf32, #tpu.memory_space<vmem>>, vector<1x7x384xf32>
    %991 = vector.shape_cast %990 : vector<1x7x384xf32> to vector<7x384xf32>
    %992 = arith.mulf %991, %989 : vector<7x384xf32>
    %993 = arith.addf %962, %992 : vector<7x384xf32>
    %c3_694 = arith.constant 3 : index
    %c2_695 = arith.constant 2 : index
    %c0_696 = arith.constant 0 : index
    %994 = vector.load %arg6[%c3_694, %c2_695, %c0_696] : memref<9x9x384xf32, #tpu.memory_space<vmem>>, vector<1x7x384xf32>
    %995 = vector.shape_cast %994 : vector<1x7x384xf32> to vector<7x384xf32>
    %996 = arith.mulf %995, %989 : vector<7x384xf32>
    %997 = arith.addf %966, %996 : vector<7x384xf32>
    %c4_697 = arith.constant 4 : index
    %c2_698 = arith.constant 2 : index
    %c0_699 = arith.constant 0 : index
    %998 = vector.load %arg6[%c4_697, %c2_698, %c0_699] : memref<9x9x384xf32, #tpu.memory_space<vmem>>, vector<1x7x384xf32>
    %999 = vector.shape_cast %998 : vector<1x7x384xf32> to vector<7x384xf32>
    %1000 = arith.mulf %999, %989 : vector<7x384xf32>
    %1001 = arith.addf %970, %1000 : vector<7x384xf32>
    %c5_700 = arith.constant 5 : index
    %c2_701 = arith.constant 2 : index
    %c0_702 = arith.constant 0 : index
    %1002 = vector.load %arg6[%c5_700, %c2_701, %c0_702] : memref<9x9x384xf32, #tpu.memory_space<vmem>>, vector<1x7x384xf32>
    %1003 = vector.shape_cast %1002 : vector<1x7x384xf32> to vector<7x384xf32>
    %1004 = arith.mulf %1003, %989 : vector<7x384xf32>
    %1005 = arith.addf %974, %1004 : vector<7x384xf32>
    %c6_703 = arith.constant 6 : index
    %c2_704 = arith.constant 2 : index
    %c0_705 = arith.constant 0 : index
    %1006 = vector.load %arg6[%c6_703, %c2_704, %c0_705] : memref<9x9x384xf32, #tpu.memory_space<vmem>>, vector<1x7x384xf32>
    %1007 = vector.shape_cast %1006 : vector<1x7x384xf32> to vector<7x384xf32>
    %1008 = arith.mulf %1007, %989 : vector<7x384xf32>
    %1009 = arith.addf %978, %1008 : vector<7x384xf32>
    %c7_706 = arith.constant 7 : index
    %c2_707 = arith.constant 2 : index
    %c0_708 = arith.constant 0 : index
    %1010 = vector.load %arg6[%c7_706, %c2_707, %c0_708] : memref<9x9x384xf32, #tpu.memory_space<vmem>>, vector<1x7x384xf32>
    %1011 = vector.shape_cast %1010 : vector<1x7x384xf32> to vector<7x384xf32>
    %1012 = arith.mulf %1011, %989 : vector<7x384xf32>
    %1013 = arith.addf %982, %1012 : vector<7x384xf32>
    %c8_709 = arith.constant 8 : index
    %c2_710 = arith.constant 2 : index
    %c0_711 = arith.constant 0 : index
    %1014 = vector.load %arg6[%c8_709, %c2_710, %c0_711] : memref<9x9x384xf32, #tpu.memory_space<vmem>>, vector<1x7x384xf32>
    %1015 = vector.shape_cast %1014 : vector<1x7x384xf32> to vector<7x384xf32>
    %1016 = arith.mulf %1015, %989 : vector<7x384xf32>
    %1017 = arith.addf %986, %1016 : vector<7x384xf32>
    %1018 = arith.mulf %993, %993 : vector<7x384xf32>
    %1019 = arith.addf %993, %997 : vector<7x384xf32>
    %1020 = arith.mulf %997, %997 : vector<7x384xf32>
    %1021 = arith.addf %1018, %1020 : vector<7x384xf32>
    %1022 = arith.addf %1019, %1001 : vector<7x384xf32>
    %1023 = arith.mulf %1001, %1001 : vector<7x384xf32>
    %1024 = arith.addf %1021, %1023 : vector<7x384xf32>
    %1025 = arith.addf %1022, %1005 : vector<7x384xf32>
    %1026 = arith.mulf %1005, %1005 : vector<7x384xf32>
    %1027 = arith.addf %1024, %1026 : vector<7x384xf32>
    %1028 = arith.addf %1025, %1009 : vector<7x384xf32>
    %1029 = arith.mulf %1009, %1009 : vector<7x384xf32>
    %1030 = arith.addf %1027, %1029 : vector<7x384xf32>
    %1031 = arith.addf %1028, %1013 : vector<7x384xf32>
    %1032 = arith.mulf %1013, %1013 : vector<7x384xf32>
    %1033 = arith.addf %1030, %1032 : vector<7x384xf32>
    %1034 = arith.addf %1031, %1017 : vector<7x384xf32>
    %1035 = arith.mulf %1017, %1017 : vector<7x384xf32>
    %1036 = arith.addf %1033, %1035 : vector<7x384xf32>
    %cst_712 = arith.constant dense<0.000000e+00> : vector<384xf32>
    %1037 = vector.multi_reduction <add>, %1034, %cst_712 [0] : vector<7x384xf32> to vector<384xf32>
    %1038 = vector.shape_cast %1037 : vector<384xf32> to vector<1x384xf32>
    %cst_713 = arith.constant dense<0.000000e+00> : vector<384xf32>
    %1039 = vector.multi_reduction <add>, %1036, %cst_713 [0] : vector<7x384xf32> to vector<384xf32>
    %1040 = vector.shape_cast %1039 : vector<384xf32> to vector<1x384xf32>
    %cst_714 = arith.constant 0.0204081628 : f32
    %1041 = vector.broadcast %cst_714 : f32 to vector<1x384xf32>
    %1042 = arith.mulf %1038, %1041 : vector<1x384xf32>
    %cst_715 = arith.constant 0.0204081628 : f32
    %1043 = vector.broadcast %cst_715 : f32 to vector<1x384xf32>
    %1044 = arith.mulf %1040, %1043 : vector<1x384xf32>
    %1045 = arith.mulf %1042, %1042 : vector<1x384xf32>
    %1046 = arith.subf %1044, %1045 : vector<1x384xf32>
    %cst_716 = arith.constant 9.99999974E-6 : f32
    %1047 = vector.broadcast %cst_716 : f32 to vector<1x384xf32>
    %1048 = arith.addf %1046, %1047 : vector<1x384xf32>
    %1049 = math.rsqrt %1048 : vector<1x384xf32>
    %c0_717 = arith.constant 0 : index
    %c768_718 = arith.constant 768 : index
    %1050 = vector.load %arg3[%c0_717, %c768_718] : memref<1x1152xf32, #tpu.memory_space<vmem>>, vector<1x384xf32>
    %1051 = arith.mulf %1050, %1049 : vector<1x384xf32>
    %c0_719 = arith.constant 0 : index
    %c768_720 = arith.constant 768 : index
    %1052 = vector.load %arg4[%c0_719, %c768_720] : memref<1x1152xf32, #tpu.memory_space<vmem>>, vector<1x384xf32>
    %1053 = arith.mulf %1042, %1051 : vector<1x384xf32>
    %1054 = arith.subf %1052, %1053 : vector<1x384xf32>
    %1055 = vector.shape_cast %1051 : vector<1x384xf32> to vector<1x384xf32>
    %1056 = vector.broadcast %1055 : vector<1x384xf32> to vector<7x384xf32>
    %1057 = vector.shape_cast %1054 : vector<1x384xf32> to vector<1x384xf32>
    %1058 = vector.broadcast %1057 : vector<1x384xf32> to vector<7x384xf32>
    %1059 = arith.mulf %993, %1056 : vector<7x384xf32>
    %1060 = arith.addf %1059, %1058 : vector<7x384xf32>
    %c0_721 = arith.constant 0 : index
    %c0_722 = arith.constant 0 : index
    %c768_723 = arith.constant 768 : index
    %1061 = vector.load %arg5[%c0_721, %c0_722, %c768_723] : memref<7x7x1152xf32, #tpu.memory_space<vmem>>, vector<1x7x384xf32>
    %1062 = vector.shape_cast %1061 : vector<1x7x384xf32> to vector<7x384xf32>
    %1063 = vector.shape_cast %1060 : vector<7x384xf32> to vector<1x7x384xf32>
    tpu.vector_store %arg5[%c0_721, %c0_722, %c768_723], %1063 {strides = array<i32>} : memref<7x7x1152xf32, #tpu.memory_space<vmem>>, vector<1x7x384xf32>,
    %1064 = arith.mulf %997, %1056 : vector<7x384xf32>
    %1065 = arith.addf %1064, %1058 : vector<7x384xf32>
    %c1_724 = arith.constant 1 : index
    %c0_725 = arith.constant 0 : index
    %c768_726 = arith.constant 768 : index
    %1066 = vector.load %arg5[%c1_724, %c0_725, %c768_726] : memref<7x7x1152xf32, #tpu.memory_space<vmem>>, vector<1x7x384xf32>
    %1067 = vector.shape_cast %1066 : vector<1x7x384xf32> to vector<7x384xf32>
    %1068 = vector.shape_cast %1065 : vector<7x384xf32> to vector<1x7x384xf32>
    tpu.vector_store %arg5[%c1_724, %c0_725, %c768_726], %1068 {strides = array<i32>} : memref<7x7x1152xf32, #tpu.memory_space<vmem>>, vector<1x7x384xf32>,
    %1069 = arith.mulf %1001, %1056 : vector<7x384xf32>
    %1070 = arith.addf %1069, %1058 : vector<7x384xf32>
    %c2_727 = arith.constant 2 : index
    %c0_728 = arith.constant 0 : index
    %c768_729 = arith.constant 768 : index
    %1071 = vector.load %arg5[%c2_727, %c0_728, %c768_729] : memref<7x7x1152xf32, #tpu.memory_space<vmem>>, vector<1x7x384xf32>
    %1072 = vector.shape_cast %1071 : vector<1x7x384xf32> to vector<7x384xf32>
    %1073 = vector.shape_cast %1070 : vector<7x384xf32> to vector<1x7x384xf32>
    tpu.vector_store %arg5[%c2_727, %c0_728, %c768_729], %1073 {strides = array<i32>} : memref<7x7x1152xf32, #tpu.memory_space<vmem>>, vector<1x7x384xf32>,
    %1074 = arith.mulf %1005, %1056 : vector<7x384xf32>
    %1075 = arith.addf %1074, %1058 : vector<7x384xf32>
    %c3_730 = arith.constant 3 : index
    %c0_731 = arith.constant 0 : index
    %c768_732 = arith.constant 768 : index
    %1076 = vector.load %arg5[%c3_730, %c0_731, %c768_732] : memref<7x7x1152xf32, #tpu.memory_space<vmem>>, vector<1x7x384xf32>
    %1077 = vector.shape_cast %1076 : vector<1x7x384xf32> to vector<7x384xf32>
    %1078 = vector.shape_cast %1075 : vector<7x384xf32> to vector<1x7x384xf32>
    tpu.vector_store %arg5[%c3_730, %c0_731, %c768_732], %1078 {strides = array<i32>} : memref<7x7x1152xf32, #tpu.memory_space<vmem>>, vector<1x7x384xf32>,
    %1079 = arith.mulf %1009, %1056 : vector<7x384xf32>
    %1080 = arith.addf %1079, %1058 : vector<7x384xf32>
    %c4_733 = arith.constant 4 : index
    %c0_734 = arith.constant 0 : index
    %c768_735 = arith.constant 768 : index
    %1081 = vector.load %arg5[%c4_733, %c0_734, %c768_735] : memref<7x7x1152xf32, #tpu.memory_space<vmem>>, vector<1x7x384xf32>
    %1082 = vector.shape_cast %1081 : vector<1x7x384xf32> to vector<7x384xf32>
    %1083 = vector.shape_cast %1080 : vector<7x384xf32> to vector<1x7x384xf32>
    tpu.vector_store %arg5[%c4_733, %c0_734, %c768_735], %1083 {strides = array<i32>} : memref<7x7x1152xf32, #tpu.memory_space<vmem>>, vector<1x7x384xf32>,
    %1084 = arith.mulf %1013, %1056 : vector<7x384xf32>
    %1085 = arith.addf %1084, %1058 : vector<7x384xf32>
    %c5_736 = arith.constant 5 : index
    %c0_737 = arith.constant 0 : index
    %c768_738 = arith.constant 768 : index
    %1086 = vector.load %arg5[%c5_736, %c0_737, %c768_738] : memref<7x7x1152xf32, #tpu.memory_space<vmem>>, vector<1x7x384xf32>
    %1087 = vector.shape_cast %1086 : vector<1x7x384xf32> to vector<7x384xf32>
    %1088 = vector.shape_cast %1085 : vector<7x384xf32> to vector<1x7x384xf32>
    tpu.vector_store %arg5[%c5_736, %c0_737, %c768_738], %1088 {strides = array<i32>} : memref<7x7x1152xf32, #tpu.memory_space<vmem>>, vector<1x7x384xf32>,
    %1089 = arith.mulf %1017, %1056 : vector<7x384xf32>
    %1090 = arith.addf %1089, %1058 : vector<7x384xf32>
    %c6_739 = arith.constant 6 : index
    %c0_740 = arith.constant 0 : index
    %c768_741 = arith.constant 768 : index
    %1091 = vector.load %arg5[%c6_739, %c0_740, %c768_741] : memref<7x7x1152xf32, #tpu.memory_space<vmem>>, vector<1x7x384xf32>
    %1092 = vector.shape_cast %1091 : vector<1x7x384xf32> to vector<7x384xf32>
    %1093 = vector.shape_cast %1090 : vector<7x384xf32> to vector<1x7x384xf32>
    tpu.vector_store %arg5[%c6_739, %c0_740, %c768_741], %1093 {strides = array<i32>} : memref<7x7x1152xf32, #tpu.memory_space<vmem>>, vector<1x7x384xf32>,
    return
  }
  func.func @transform_0(%arg0: i32) -> (i32, i32, i32) {
    %c0_i32 = arith.constant 0 : i32
    %c0_i32_0 = arith.constant 0 : i32
    %c0_i32_1 = arith.constant 0 : i32
    %c0_i32_2 = arith.constant 0 : i32
    return %c0_i32, %c0_i32_0, %c0_i32_1 : i32, i32, i32
  }
  func.func @transform_1(%arg0: i32) -> (i32, i32) {
    %c0_i32 = arith.constant 0 : i32
    %c0_i32_0 = arith.constant 0 : i32
    %c0_i32_1 = arith.constant 0 : i32
    return %c0_i32, %c0_i32_0 : i32, i32
  }
  func.func @transform_2(%arg0: i32) -> (i32, i32) {
    %c0_i32 = arith.constant 0 : i32
    %c0_i32_0 = arith.constant 0 : i32
    %c0_i32_1 = arith.constant 0 : i32
    return %c0_i32, %c0_i32_0 : i32, i32
  }
  func.func @transform_3(%arg0: i32) -> (i32, i32) {
    %c0_i32 = arith.constant 0 : i32
    %c0_i32_0 = arith.constant 0 : i32
    %c0_i32_1 = arith.constant 0 : i32
    return %c0_i32, %c0_i32_0 : i32, i32
  }
  func.func @transform_4(%arg0: i32) -> (i32, i32, i32) {
    %c0_i32 = arith.constant 0 : i32
    %c0_i32_0 = arith.constant 0 : i32
    %c0_i32_1 = arith.constant 0 : i32
    %c0_i32_2 = arith.constant 0 : i32
    return %c0_i32, %c0_i32_0, %c0_i32_1 : i32, i32, i32
  }
}

</mosaic_0001>

<llo_original>
// kernel: dwconv_bn.1
$region0: #{dwconv_bn.1}
  #allocation0 [shape = 'u32[]', space=smem, size = 0x4, offset = 0x4, fixed_abs, tag = 'smem constant byte address 0x4 - core index']
  #allocation1 [shape = 'u32[144,128]{1,0:T(1,128)}', space=vmem, size = 0x12000, scoped, tag = 'internal scratch']
  #allocation2 [shape = 'f32[9,9,384]{2,1,0:T(8,128)}', space=vmem, size = 0x36000, scoped, tag = 'scratch operand']
  %s0 = inlined_call_operand.vmem [shape: f32[7,7,1152], index: 0, kind: input, shape index: {}]
  %s1 = inlined_call_operand.vmem [shape: f32[9,1152], index: 1, kind: input, shape index: {}]
  %s2 = inlined_call_operand.vmem [shape: f32[1,1152], index: 2, kind: input, shape index: {}]
  %s3 = inlined_call_operand.vmem [shape: f32[1,1152], index: 3, kind: input, shape index: {}]
  %s4 = inlined_call_operand.vmem [shape: f32[7,7,1152], index: 4, kind: output, shape index: {}]
  %s5 = sld [smem:[#allocation0]]
  $region26: #{dwconv_bn.1} parent=0
    _
  %s7 = ssub.s32 1, %s5
  %s8 = scalar_select 0, %s7, %s5
  // Predicated region
  $region2: #{dwconv_bn.1} parent=0 // pred_check
    _
  $region3: #{dwconv_bn.1} parent=0 // pred_check_branch
    %10 = sbr.rel (0) target = $region5
  $region4: #{dwconv_bn.1} parent=0 // pred_region
    _
  $region5: #{dwconv_bn.1} parent=0 // pred_fallthru
    _
  // Predicated region
  $region6: #{dwconv_bn.1} parent=0 // pred_check
    _
  $region7: #{dwconv_bn.1} parent=0 // pred_check_branch
    %12 = sbr.rel (0) target = $region9
  $region8: #{dwconv_bn.1} parent=0 // pred_region
    _
  $region9: #{dwconv_bn.1} parent=0 // pred_fallthru
    _
  // Predicated region
  $region10: #{dwconv_bn.1} parent=0 // pred_check
    _
  $region11: #{dwconv_bn.1} parent=0 // pred_check_branch
    %14 = sbr.rel (0) target = $region13
  $region12: #{dwconv_bn.1} parent=0 // pred_region
    _
  $region13: #{dwconv_bn.1} parent=0 // pred_fallthru
    _
  // Predicated region
  $region14: #{dwconv_bn.1} parent=0 // pred_check
    _
  $region15: #{dwconv_bn.1} parent=0 // pred_check_branch
    %16 = sbr.rel (0) target = $region17
  $region16: #{dwconv_bn.1} parent=0 // pred_region
    _
  $region17: #{dwconv_bn.1} parent=0 // pred_fallthru
    _
  %17 = vst [vmem:[#allocation2] sm:$0xff] 0.0
  %18 = vst [vmem:[#allocation2 + $0x8] sm:$0xff] 0.0
  %19 = vst [vmem:[#allocation2 + $0x10] sm:$0xff] 0.0
  %20 = vst [vmem:[#allocation2 + $0x18] sm:$0x1] 0.0
  %21 = vst [vmem:[#allocation2 + $0x20] sm:$0x1] 0.0
  %22 = vst [vmem:[#allocation2 + $0x28] sm:$0x1] 0.0
  %23 = vst [vmem:[#allocation2 + $0x30] sm:$0xff] 0.0
  %24 = vst [vmem:[#allocation2 + $0x38] sm:$0xff] 0.0
  %25 = vst [vmem:[#allocation2 + $0x40] sm:$0xff] 0.0
  %26 = vst [vmem:[#allocation2 + $0x48] sm:$0x1] 0.0
  %27 = vst [vmem:[#allocation2 + $0x50] sm:$0x1] 0.0
  %28 = vst [vmem:[#allocation2 + $0x58] sm:$0x1] 0.0
  %29 = vst [vmem:[#allocation2 + $0x60] sm:$0xff] 0.0
  %30 = vst [vmem:[#allocation2 + $0x68] sm:$0xff] 0.0
  %31 = vst [vmem:[#allocation2 + $0x70] sm:$0xff] 0.0
  %32 = vst [vmem:[#allocation2 + $0x78] sm:$0x1] 0.0
  %33 = vst [vmem:[#allocation2 + $0x80] sm:$0x1] 0.0
  %34 = vst [vmem:[#allocation2 + $0x88] sm:$0x1] 0.0
  %35 = vst [vmem:[#allocation2 + $0x90] sm:$0xff] 0.0
  %36 = vst [vmem:[#allocation2 + $0x98] sm:$0xff] 0.0
  %37 = vst [vmem:[#allocation2 + $0xa0] sm:$0xff] 0.0
  %38 = vst [vmem:[#allocation2 + $0xa8] sm:$0x1] 0.0
  %39 = vst [vmem:[#allocation2 + $0xb0] sm:$0x1] 0.0
  %40 = vst [vmem:[#allocation2 + $0xb8] sm:$0x1] 0.0
  %41 = vst [vmem:[#allocation2 + $0xc0] sm:$0xff] 0.0
  %42 = vst [vmem:[#allocation2 + $0xc8] sm:$0xff] 0.0
  %43 = vst [vmem:[#allocation2 + $0xd0] sm:$0xff] 0.0
  %44 = vst [vmem:[#allocation2 + $0xd8] sm:$0x1] 0.0
  %45 = vst [vmem:[#allocation2 + $0xe0] sm:$0x1] 0.0
  %46 = vst [vmem:[#allocation2 + $0xe8] sm:$0x1] 0.0
  %47 = vst [vmem:[#allocation2 + $0xf0] sm:$0xff] 0.0
  %48 = vst [vmem:[#allocation2 + $0xf8] sm:$0xff] 0.0
  %49 = vst [vmem:[#allocation2 + $0x100] sm:$0xff] 0.0
  %50 = vst [vmem:[#allocation2 + $0x108] sm:$0x1] 0.0
  %51 = vst [vmem:[#allocation2 + $0x110] sm:$0x1] 0.0
  %52 = vst [vmem:[#allocation2 + $0x118] sm:$0x1] 0.0
  %53 = vst [vmem:[#allocation2 + $0x120] sm:$0xff] 0.0
  %54 = vst [vmem:[#allocation2 + $0x128] sm:$0xff] 0.0
  %55 = vst [vmem:[#allocation2 + $0x130] sm:$0xff] 0.0
  %56 = vst [vmem:[#allocation2 + $0x138] sm:$0x1] 0.0
  %57 = vst [vmem:[#allocation2 + $0x140] sm:$0x1] 0.0
  %58 = vst [vmem:[#allocation2 + $0x148] sm:$0x1] 0.0
  %59 = vst [vmem:[#allocation2 + $0x150] sm:$0xff] 0.0
  %60 = vst [vmem:[#allocation2 + $0x158] sm:$0xff] 0.0
  %61 = vst [vmem:[#allocation2 + $0x160] sm:$0xff] 0.0
  %62 = vst [vmem:[#allocation2 + $0x168] sm:$0x1] 0.0
  %63 = vst [vmem:[#allocation2 + $0x170] sm:$0x1] 0.0
  %64 = vst [vmem:[#allocation2 + $0x178] sm:$0x1] 0.0
  %65 = vst [vmem:[#allocation2 + $0x180] sm:$0xff] 0.0
  %66 = vst [vmem:[#allocation2 + $0x188] sm:$0xff] 0.0
  %67 = vst [vmem:[#allocation2 + $0x190] sm:$0xff] 0.0
  %68 = vst [vmem:[#allocation2 + $0x198] sm:$0x1] 0.0
  %69 = vst [vmem:[#allocation2 + $0x1a0] sm:$0x1] 0.0
  %70 = vst [vmem:[#allocation2 + $0x1a8] sm:$0x1] 0.0
  %v71 = vld [vmem:[%s0] sm:$0x7f]
  %v72 = vld [vmem:[%s0 + $0x8] sm:$0x7f]
  %v73 = vld [vmem:[%s0 + $0x10] sm:$0x7f]
  %v74 = vld [vmem:[%s0 + $0x48] sm:$0x7f]
  %v75 = vld [vmem:[%s0 + $0x50] sm:$0x7f]
  %v76 = vld [vmem:[%s0 + $0x58] sm:$0x7f]
  %v77 = vld [vmem:[%s0 + $0x90] sm:$0x7f]
  %v78 = vld [vmem:[%s0 + $0x98] sm:$0x7f]
  %v79 = vld [vmem:[%s0 + $0xa0] sm:$0x7f]
  %v80 = vld [vmem:[%s0 + $0xd8] sm:$0x7f]
  %v81 = vld [vmem:[%s0 + $0xe0] sm:$0x7f]
  %v82 = vld [vmem:[%s0 + $0xe8] sm:$0x7f]
  %v83 = vld [vmem:[%s0 + $0x120] sm:$0x7f]
  %v84 = vld [vmem:[%s0 + $0x128] sm:$0x7f]
  %v85 = vld [vmem:[%s0 + $0x130] sm:$0x7f]
  %v86 = vld [vmem:[%s0 + $0x168] sm:$0x7f]
  %v87 = vld [vmem:[%s0 + $0x170] sm:$0x7f]
  %v88 = vld [vmem:[%s0 + $0x178] sm:$0x7f]
  %v89 = vld [vmem:[%s0 + $0x1b0] sm:$0x7f]
  %v90 = vld [vmem:[%s0 + $0x1b8] sm:$0x7f]
  %v91 = vld [vmem:[%s0 + $0x1c0] sm:$0x7f]
  %v113 = vrot.slane %v71, 7
  %v114 = vrot.slane %v72, 7
  %v115 = vrot.slane %v73, 7
  %v116 = vrot.slane %v74, 7
  %v117 = vrot.slane %v75, 7
  %v118 = vrot.slane %v76, 7
  %v119 = vrot.slane %v77, 7
  %v120 = vrot.slane %v78, 7
  %v121 = vrot.slane %v79, 7
  %v122 = vrot.slane %v80, 7
  %v123 = vrot.slane %v81, 7
  %v124 = vrot.slane %v82, 7
  %v125 = vrot.slane %v83, 7
  %v126 = vrot.slane %v84, 7
  %v127 = vrot.slane %v85, 7
  %v128 = vrot.slane %v86, 7
  %v129 = vrot.slane %v87, 7
  %v130 = vrot.slane %v88, 7
  %v131 = vrot.slane %v89, 7
  %v132 = vrot.slane %v90, 7
  %v133 = vrot.slane %v91, 7
  %s155 = scalar_lea.vmem [#allocation2], 48
  %156 = vst [vmem:[%s155] sm:$0xfe] %v113
  %157 = vst [vmem:[%s155 + $0x8] sm:$0xfe] %v114
  %158 = vst [vmem:[%s155 + $0x10] sm:$0xfe] %v115
  %159 = vst [vmem:[%s155 + $0x30] sm:$0xfe] %v116
  %160 = vst [vmem:[%s155 + $0x38] sm:$0xfe] %v117
  %161 = vst [vmem:[%s155 + $0x40] sm:$0xfe] %v118
  %162 = vst [vmem:[%s155 + $0x60] sm:$0xfe] %v119
  %163 = vst [vmem:[%s155 + $0x68] sm:$0xfe] %v120
  %164 = vst [vmem:[%s155 + $0x70] sm:$0xfe] %v121
  %165 = vst [vmem:[%s155 + $0x90] sm:$0xfe] %v122
  %166 = vst [vmem:[%s155 + $0x98] sm:$0xfe] %v123
  %167 = vst [vmem:[%s155 + $0xa0] sm:$0xfe] %v124
  %168 = vst [vmem:[%s155 + $0xc0] sm:$0xfe] %v125
  %169 = vst [vmem:[%s155 + $0xc8] sm:$0xfe] %v126
  %170 = vst [vmem:[%s155 + $0xd0] sm:$0xfe] %v127
  %171 = vst [vmem:[%s155 + $0xf0] sm:$0xfe] %v128
  %172 = vst [vmem:[%s155 + $0xf8] sm:$0xfe] %v129
  %173 = vst [vmem:[%s155 + $0x100] sm:$0xfe] %v130
  %174 = vst [vmem:[%s155 + $0x120] sm:$0xfe] %v131
  %175 = vst [vmem:[%s155 + $0x128] sm:$0xfe] %v132
  %176 = vst [vmem:[%s155 + $0x130] sm:$0xfe] %v133
  %v177 = vld [vmem:[%s1] ss:$8 sm:$0x7]
  %v179 = vlaneseq
  %v180 = vshrl.u32 %v179, 7
  %v181 = vsub.s32 0, %v180
  %v182 = vrot.slane %v177, %v181
  %v183 = vlaneseq
  %v184 = vshrl.u32 %v183, 7
  %v185 = vsub.s32 1, %v184
  %v186 = vrot.slane %v177, %v185
  %v187 = vlaneseq
  %v188 = vshrl.u32 %v187, 7
  %v189 = vsub.s32 2, %v188
  %v190 = vrot.slane %v177, %v189
  %v194 = vld [vmem:[#allocation2] sm:$0x7f]
  %v195 = vld [vmem:[#allocation2 + $0x8] sm:$0x7f]
  %v196 = vld [vmem:[#allocation2 + $0x10] sm:$0x7f]
  %v197 = vmul.f32 %v194, %v182
  %v198 = vmul.f32 %v195, %v186
  %v199 = vmul.f32 %v196, %v190
  %v200 = vadd.f32 %v197, 0.0
  %v201 = vadd.f32 %v198, 0.0
  %v202 = vadd.f32 %v199, 0.0
  %v203 = vld [vmem:[%s155] sm:$0x7f]
  %v204 = vld [vmem:[%s155 + $0x8] sm:$0x7f]
  %v205 = vld [vmem:[%s155 + $0x10] sm:$0x7f]
  %v206 = vmul.f32 %v203, %v182
  %v207 = vmul.f32 %v204, %v186
  %v208 = vmul.f32 %v205, %v190
  %v209 = vadd.f32 %v206, 0.0
  %v210 = vadd.f32 %v207, 0.0
  %v211 = vadd.f32 %v208, 0.0
  %s212 = scalar_lea.vmem [#allocation2], 96
  %v213 = vld [vmem:[%s212] sm:$0x7f]
  %v214 = vld [vmem:[%s212 + $0x8] sm:$0x7f]
  %v215 = vld [vmem:[%s212 + $0x10] sm:$0x7f]
  %v216 = vmul.f32 %v213, %v182
  %v217 = vmul.f32 %v214, %v186
  %v218 = vmul.f32 %v215, %v190
  %v219 = vadd.f32 %v216, 0.0
  %v220 = vadd.f32 %v217, 0.0
  %v221 = vadd.f32 %v218, 0.0
  %s222 = scalar_lea.vmem [#allocation2], 144
  %v223 = vld [vmem:[%s222] sm:$0x7f]
  %v224 = vld [vmem:[%s222 + $0x8] sm:$0x7f]
  %v225 = vld [vmem:[%s222 + $0x10] sm:$0x7f]
  %v226 = vmul.f32 %v223, %v182
  %v227 = vmul.f32 %v224, %v186
  %v228 = vmul.f32 %v225, %v190
  %v229 = vadd.f32 %v226, 0.0
  %v230 = vadd.f32 %v227, 0.0
  %v231 = vadd.f32 %v228, 0.0
  %s232 = scalar_lea.vmem [#allocation2], 192
  %v233 = vld [vmem:[%s232] sm:$0x7f]
  %v234 = vld [vmem:[%s232 + $0x8] sm:$0x7f]
  %v235 = vld [vmem:[%s232 + $0x10] sm:$0x7f]
  %v236 = vmul.f32 %v233, %v182
  %v237 = vmul.f32 %v234, %v186
  %v238 = vmul.f32 %v235, %v190
  %v239 = vadd.f32 %v236, 0.0
  %v240 = vadd.f32 %v237, 0.0
  %v241 = vadd.f32 %v238, 0.0
  %s242 = scalar_lea.vmem [#allocation2], 240
  %v243 = vld [vmem:[%s242] sm:$0x7f]
  %v244 = vld [vmem:[%s242 + $0x8] sm:$0x7f]
  %v245 = vld [vmem:[%s242 + $0x10] sm:$0x7f]
  %v246 = vmul.f32 %v243, %v182
  %v247 = vmul.f32 %v244, %v186
  %v248 = vmul.f32 %v245, %v190
  %v249 = vadd.f32 %v246, 0.0
  %v250 = vadd.f32 %v247, 0.0
  %v251 = vadd.f32 %v248, 0.0
  %s252 = scalar_lea.vmem [#allocation2], 288
  %v253 = vld [vmem:[%s252] sm:$0x7f]
  %v254 = vld [vmem:[%s252 + $0x8] sm:$0x7f]
  %v255 = vld [vmem:[%s252 + $0x10] sm:$0x7f]
  %v256 = vmul.f32 %v253, %v182
  %v257 = vmul.f32 %v254, %v186
  %v258 = vmul.f32 %v255, %v190
  %v259 = vadd.f32 %v256, 0.0
  %v260 = vadd.f32 %v257, 0.0
  %v261 = vadd.f32 %v258, 0.0
  %s262 = scalar_lea.vmem %s1, 1
  %v263 = vld [vmem:[%s262] ss:$8 sm:$0x7]
  %v265 = vlaneseq
  %v266 = vshrl.u32 %v265, 7
  %v267 = vsub.s32 0, %v266
  %v268 = vrot.slane %v263, %v267
  %v269 = vlaneseq
  %v270 = vshrl.u32 %v269, 7
  %v271 = vsub.s32 1, %v270
  %v272 = vrot.slane %v263, %v271
  %v273 = vlaneseq
  %v274 = vshrl.u32 %v273, 7
  %v275 = vsub.s32 2, %v274
  %v276 = vrot.slane %v263, %v275
  %v280 = vld [vmem:[#allocation2] sm:$0xfe]
  %v281 = vld [vmem:[#allocation2 + $0x8] sm:$0xfe]
  %v282 = vld [vmem:[#allocation2 + $0x10] sm:$0xfe]
  %v283 = vmul.f32 %v280, %v268
  %v284 = vmul.f32 %v281, %v272
  %v285 = vmul.f32 %v282, %v276
  %v289 = vrot.slane %v283, 1
  %v290 = vrot.slane %v284, 1
  %v291 = vrot.slane %v285, 1
  %v295 = vadd.f32 %v200, %v289
  %v296 = vadd.f32 %v201, %v290
  %v297 = vadd.f32 %v202, %v291
  %v298 = vld [vmem:[%s155] sm:$0xfe]
  %v299 = vld [vmem:[%s155 + $0x8] sm:$0xfe]
  %v300 = vld [vmem:[%s155 + $0x10] sm:$0xfe]
  %v301 = vmul.f32 %v298, %v268
  %v302 = vmul.f32 %v299, %v272
  %v303 = vmul.f32 %v300, %v276
  %v307 = vrot.slane %v301, 1
  %v308 = vrot.slane %v302, 1
  %v309 = vrot.slane %v303, 1
  %v313 = vadd.f32 %v209, %v307
  %v314 = vadd.f32 %v210, %v308
  %v315 = vadd.f32 %v211, %v309
  %v316 = vld [vmem:[%s212] sm:$0xfe]
  %v317 = vld [vmem:[%s212 + $0x8] sm:$0xfe]
  %v318 = vld [vmem:[%s212 + $0x10] sm:$0xfe]
  %v319 = vmul.f32 %v316, %v268
  %v320 = vmul.f32 %v317, %v272
  %v321 = vmul.f32 %v318, %v276
  %v325 = vrot.slane %v319, 1
  %v326 = vrot.slane %v320, 1
  %v327 = vrot.slane %v321, 1
  %v331 = vadd.f32 %v219, %v325
  %v332 = vadd.f32 %v220, %v326
  %v333 = vadd.f32 %v221, %v327
  %v334 = vld [vmem:[%s222] sm:$0xfe]
  %v335 = vld [vmem:[%s222 + $0x8] sm:$0xfe]
  %v336 = vld [vmem:[%s222 + $0x10] sm:$0xfe]
  %v337 = vmul.f32 %v334, %v268
  %v338 = vmul.f32 %v335, %v272
  %v339 = vmul.f32 %v336, %v276
  %v343 = vrot.slane %v337, 1
  %v344 = vrot.slane %v338, 1
  %v345 = vrot.slane %v339, 1
  %v349 = vadd.f32 %v229, %v343
  %v350 = vadd.f32 %v230, %v344
  %v351 = vadd.f32 %v231, %v345
  %v352 = vld [vmem:[%s232] sm:$0xfe]
  %v353 = vld [vmem:[%s232 + $0x8] sm:$0xfe]
  %v354 = vld [vmem:[%s232 + $0x10] sm:$0xfe]
  %v355 = vmul.f32 %v352, %v268
  %v356 = vmul.f32 %v353, %v272
  %v357 = vmul.f32 %v354, %v276
  %v361 = vrot.slane %v355, 1
  %v362 = vrot.slane %v356, 1
  %v363 = vrot.slane %v357, 1
  %v367 = vadd.f32 %v239, %v361
  %v368 = vadd.f32 %v240, %v362
  %v369 = vadd.f32 %v241, %v363
  %v370 = vld [vmem:[%s242] sm:$0xfe]
  %v371 = vld [vmem:[%s242 + $0x8] sm:$0xfe]
  %v372 = vld [vmem:[%s242 + $0x10] sm:$0xfe]
  %v373 = vmul.f32 %v370, %v268
  %v374 = vmul.f32 %v371, %v272
  %v375 = vmul.f32 %v372, %v276
  %v379 = vrot.slane %v373, 1
  %v380 = vrot.slane %v374, 1
  %v381 = vrot.slane %v375, 1
  %v385 = vadd.f32 %v249, %v379
  %v386 = vadd.f32 %v250, %v380
  %v387 = vadd.f32 %v251, %v381
  %v388 = vld [vmem:[%s252] sm:$0xfe]
  %v389 = vld [vmem:[%s252 + $0x8] sm:$0xfe]
  %v390 = vld [vmem:[%s252 + $0x10] sm:$0xfe]
  %v391 = vmul.f32 %v388, %v268
  %v392 = vmul.f32 %v389, %v272
  %v393 = vmul.f32 %v390, %v276
  %v397 = vrot.slane %v391, 1
  %v398 = vrot.slane %v392, 1
  %v399 = vrot.slane %v393, 1
  %v403 = vadd.f32 %v259, %v397
  %v404 = vadd.f32 %v260, %v398
  %v405 = vadd.f32 %v261, %v399
  %s406 = scalar_lea.vmem %s1, 2
  %v407 = vld [vmem:[%s406] ss:$8 sm:$0x7]
  %v409 = vlaneseq
  %v410 = vshrl.u32 %v409, 7
  %v411 = vsub.s32 0, %v410
  %v412 = vrot.slane %v407, %v411
  %v413 = vlaneseq
  %v414 = vshrl.u32 %v413, 7
  %v415 = vsub.s32 1, %v414
  %v416 = vrot.slane %v407, %v415
  %v417 = vlaneseq
  %v418 = vshrl.u32 %v417, 7
  %v419 = vsub.s32 2, %v418
  %v420 = vrot.slane %v407, %v419
  %v424 = vld [vmem:[#allocation2] sm:$0xfc]
  %v425 = vld [vmem:[#allocation2 + $0x8] sm:$0xfc]
  %v426 = vld [vmem:[#allocation2 + $0x10] sm:$0xfc]
  %v427 = vld [vmem:[#allocation2 + $0x18] sm:$0x1]
  %v428 = vld [vmem:[#allocation2 + $0x20] sm:$0x1]
  %v429 = vld [vmem:[#allocation2 + $0x28] sm:$0x1]
  %v430 = vmul.f32 %v424, %v412
  %v431 = vmul.f32 %v425, %v416
  %v432 = vmul.f32 %v426, %v420
  %v433 = vmul.f32 %v427, %v412
  %v434 = vmul.f32 %v428, %v416
  %v435 = vmul.f32 %v429, %v420
  %vm442 = vcmask 1045504
  %v443 = vrot.slane %v430, 2
  %v444 = vrot.slane %v433, 2
  %v445 = vsel %vm442, %v443, %v444
  %v446 = vrot.slane %v431, 2
  %v447 = vrot.slane %v434, 2
  %v448 = vsel %vm442, %v446, %v447
  %v449 = vrot.slane %v432, 2
  %v450 = vrot.slane %v435, 2
  %v451 = vsel %vm442, %v449, %v450
  %v455 = vadd.f32 %v295, %v445
  %v456 = vadd.f32 %v296, %v448
  %v457 = vadd.f32 %v297, %v451
  %v458 = vld [vmem:[%s155] sm:$0xfc]
  %v459 = vld [vmem:[%s155 + $0x8] sm:$0xfc]
  %v460 = vld [vmem:[%s155 + $0x10] sm:$0xfc]
  %v461 = vld [vmem:[%s155 + $0x18] sm:$0x1]
  %v462 = vld [vmem:[%s155 + $0x20] sm:$0x1]
  %v463 = vld [vmem:[%s155 + $0x28] sm:$0x1]
  %v464 = vmul.f32 %v458, %v412
  %v465 = vmul.f32 %v459, %v416
  %v466 = vmul.f32 %v460, %v420
  %v467 = vmul.f32 %v461, %v412
  %v468 = vmul.f32 %v462, %v416
  %v469 = vmul.f32 %v463, %v420
  %v476 = vrot.slane %v464, 2
  %v477 = vrot.slane %v467, 2
  %v478 = vsel %vm442, %v476, %v477
  %v479 = vrot.slane %v465, 2
  %v480 = vrot.slane %v468, 2
  %v481 = vsel %vm442, %v479, %v480
  %v482 = vrot.slane %v466, 2
  %v483 = vrot.slane %v469, 2
  %v484 = vsel %vm442, %v482, %v483
  %v488 = vadd.f32 %v313, %v478
  %v489 = vadd.f32 %v314, %v481
  %v490 = vadd.f32 %v315, %v484
  %v491 = vld [vmem:[%s212] sm:$0xfc]
  %v492 = vld [vmem:[%s212 + $0x8] sm:$0xfc]
  %v493 = vld [vmem:[%s212 + $0x10] sm:$0xfc]
  %v494 = vld [vmem:[%s212 + $0x18] sm:$0x1]
  %v495 = vld [vmem:[%s212 + $0x20] sm:$0x1]
  %v496 = vld [vmem:[%s212 + $0x28] sm:$0x1]
  %v497 = vmul.f32 %v491, %v412
  %v498 = vmul.f32 %v492, %v416
  %v499 = vmul.f32 %v493, %v420
  %v500 = vmul.f32 %v494, %v412
  %v501 = vmul.f32 %v495, %v416
  %v502 = vmul.f32 %v496, %v420
  %v509 = vrot.slane %v497, 2
  %v510 = vrot.slane %v500, 2
  %v511 = vsel %vm442, %v509, %v510
  %v512 = vrot.slane %v498, 2
  %v513 = vrot.slane %v501, 2
  %v514 = vsel %vm442, %v512, %v513
  %v515 = vrot.slane %v499, 2
  %v516 = vrot.slane %v502, 2
  %v517 = vsel %vm442, %v515, %v516
  %v521 = vadd.f32 %v331, %v511
  %v522 = vadd.f32 %v332, %v514
  %v523 = vadd.f32 %v333, %v517
  %v524 = vld [vmem:[%s222] sm:$0xfc]
  %v525 = vld [vmem:[%s222 + $0x8] sm:$0xfc]
  %v526 = vld [vmem:[%s222 + $0x10] sm:$0xfc]
  %v527 = vld [vmem:[%s222 + $0x18] sm:$0x1]
  %v528 = vld [vmem:[%s222 + $0x20] sm:$0x1]
  %v529 = vld [vmem:[%s222 + $0x28] sm:$0x1]
  %v530 = vmul.f32 %v524, %v412
  %v531 = vmul.f32 %v525, %v416
  %v532 = vmul.f32 %v526, %v420
  %v533 = vmul.f32 %v527, %v412
  %v534 = vmul.f32 %v528, %v416
  %v535 = vmul.f32 %v529, %v420
  %v542 = vrot.slane %v530, 2
  %v543 = vrot.slane %v533, 2
  %v544 = vsel %vm442, %v542, %v543
  %v545 = vrot.slane %v531, 2
  %v546 = vrot.slane %v534, 2
  %v547 = vsel %vm442, %v545, %v546
  %v548 = vrot.slane %v532, 2
  %v549 = vrot.slane %v535, 2
  %v550 = vsel %vm442, %v548, %v549
  %v554 = vadd.f32 %v349, %v544
  %v555 = vadd.f32 %v350, %v547
  %v556 = vadd.f32 %v351, %v550
  %v557 = vld [vmem:[%s232] sm:$0xfc]
  %v558 = vld [vmem:[%s232 + $0x8] sm:$0xfc]
  %v559 = vld [vmem:[%s232 + $0x10] sm:$0xfc]
  %v560 = vld [vmem:[%s232 + $0x18] sm:$0x1]
  %v561 = vld [vmem:[%s232 + $0x20] sm:$0x1]
  %v562 = vld [vmem:[%s232 + $0x28] sm:$0x1]
  %v563 = vmul.f32 %v557, %v412
  %v564 = vmul.f32 %v558, %v416
  %v565 = vmul.f32 %v559, %v420
  %v566 = vmul.f32 %v560, %v412
  %v567 = vmul.f32 %v561, %v416
  %v568 = vmul.f32 %v562, %v420
  %v575 = vrot.slane %v563, 2
  %v576 = vrot.slane %v566, 2
  %v577 = vsel %vm442, %v575, %v576
  %v578 = vrot.slane %v564, 2
  %v579 = vrot.slane %v567, 2
  %v580 = vsel %vm442, %v578, %v579
  %v581 = vrot.slane %v565, 2
  %v582 = vrot.slane %v568, 2
  %v583 = vsel %vm442, %v581, %v582
  %v587 = vadd.f32 %v367, %v577
  %v588 = vadd.f32 %v368, %v580
  %v589 = vadd.f32 %v369, %v583
  %v590 = vld [vmem:[%s242] sm:$0xfc]
  %v591 = vld [vmem:[%s242 + $0x8] sm:$0xfc]
  %v592 = vld [vmem:[%s242 + $0x10] sm:$0xfc]
  %v593 = vld [vmem:[%s242 + $0x18] sm:$0x1]
  %v594 = vld [vmem:[%s242 + $0x20] sm:$0x1]
  %v595 = vld [vmem:[%s242 + $0x28] sm:$0x1]
  %v596 = vmul.f32 %v590, %v412
  %v597 = vmul.f32 %v591, %v416
  %v598 = vmul.f32 %v592, %v420
  %v599 = vmul.f32 %v593, %v412
  %v600 = vmul.f32 %v594, %v416
  %v601 = vmul.f32 %v595, %v420
  %v608 = vrot.slane %v596, 2
  %v609 = vrot.slane %v599, 2
  %v610 = vsel %vm442, %v608, %v609
  %v611 = vrot.slane %v597, 2
  %v612 = vrot.slane %v600, 2
  %v613 = vsel %vm442, %v611, %v612
  %v614 = vrot.slane %v598, 2
  %v615 = vrot.slane %v601, 2
  %v616 = vsel %vm442, %v614, %v615
  %v620 = vadd.f32 %v385, %v610
  %v621 = vadd.f32 %v386, %v613
  %v622 = vadd.f32 %v387, %v616
  %v623 = vld [vmem:[%s252] sm:$0xfc]
  %v624 = vld [vmem:[%s252 + $0x8] sm:$0xfc]
  %v625 = vld [vmem:[%s252 + $0x10] sm:$0xfc]
  %v626 = vld [vmem:[%s252 + $0x18] sm:$0x1]
  %v627 = vld [vmem:[%s252 + $0x20] sm:$0x1]
  %v628 = vld [vmem:[%s252 + $0x28] sm:$0x1]
  %v629 = vmul.f32 %v623, %v412
  %v630 = vmul.f32 %v624, %v416
  %v631 = vmul.f32 %v625, %v420
  %v632 = vmul.f32 %v626, %v412
  %v633 = vmul.f32 %v627, %v416
  %v634 = vmul.f32 %v628, %v420
  %v641 = vrot.slane %v629, 2
  %v642 = vrot.slane %v632, 2
  %v643 = vsel %vm442, %v641, %v642
  %v644 = vrot.slane %v630, 2
  %v645 = vrot.slane %v633, 2
  %v646 = vsel %vm442, %v644, %v645
  %v647 = vrot.slane %v631, 2
  %v648 = vrot.slane %v634, 2
  %v649 = vsel %vm442, %v647, %v648
  %v653 = vadd.f32 %v403, %v643
  %v654 = vadd.f32 %v404, %v646
  %v655 = vadd.f32 %v405, %v649
  %s656 = scalar_lea.vmem %s1, 3
  %v657 = vld [vmem:[%s656] ss:$8 sm:$0x7]
  %v659 = vlaneseq
  %v660 = vshrl.u32 %v659, 7
  %v661 = vsub.s32 0, %v660
  %v662 = vrot.slane %v657, %v661
  %v663 = vlaneseq
  %v664 = vshrl.u32 %v663, 7
  %v665 = vsub.s32 1, %v664
  %v666 = vrot.slane %v657, %v665
  %v667 = vlaneseq
  %v668 = vshrl.u32 %v667, 7
  %v669 = vsub.s32 2, %v668
  %v670 = vrot.slane %v657, %v669
  %v674 = vmul.f32 %v203, %v662
  %v675 = vmul.f32 %v204, %v666
  %v676 = vmul.f32 %v205, %v670
  %v677 = vadd.f32 %v455, %v674
  %v678 = vadd.f32 %v456, %v675
  %v679 = vadd.f32 %v457, %v676
  %v680 = vmul.f32 %v213, %v662
  %v681 = vmul.f32 %v214, %v666
  %v682 = vmul.f32 %v215, %v670
  %v683 = vadd.f32 %v488, %v680
  %v684 = vadd.f32 %v489, %v681
  %v685 = vadd.f32 %v490, %v682
  %v686 = vmul.f32 %v223, %v662
  %v687 = vmul.f32 %v224, %v666
  %v688 = vmul.f32 %v225, %v670
  %v689 = vadd.f32 %v521, %v686
  %v690 = vadd.f32 %v522, %v687
  %v691 = vadd.f32 %v523, %v688
  %v692 = vmul.f32 %v233, %v662
  %v693 = vmul.f32 %v234, %v666
  %v694 = vmul.f32 %v235, %v670
  %v695 = vadd.f32 %v554, %v692
  %v696 = vadd.f32 %v555, %v693
  %v697 = vadd.f32 %v556, %v694
  %v698 = vmul.f32 %v243, %v662
  %v699 = vmul.f32 %v244, %v666
  %v700 = vmul.f32 %v245, %v670
  %v701 = vadd.f32 %v587, %v698
  %v702 = vadd.f32 %v588, %v699
  %v703 = vadd.f32 %v589, %v700
  %v704 = vmul.f32 %v253, %v662
  %v705 = vmul.f32 %v254, %v666
  %v706 = vmul.f32 %v255, %v670
  %v707 = vadd.f32 %v620, %v704
  %v708 = vadd.f32 %v621, %v705
  %v709 = vadd.f32 %v622, %v706
  %s710 = scalar_lea.vmem [#allocation2], 336
  %v711 = vld [vmem:[%s710] sm:$0x7f]
  %v712 = vld [vmem:[%s710 + $0x8] sm:$0x7f]
  %v713 = vld [vmem:[%s710 + $0x10] sm:$0x7f]
  %v714 = vmul.f32 %v711, %v662
  %v715 = vmul.f32 %v712, %v666
  %v716 = vmul.f32 %v713, %v670
  %v717 = vadd.f32 %v653, %v714
  %v718 = vadd.f32 %v654, %v715
  %v719 = vadd.f32 %v655, %v716
  %s720 = scalar_lea.vmem %s1, 4
  %v721 = vld [vmem:[%s720] ss:$8 sm:$0x7]
  %v723 = vlaneseq
  %v724 = vshrl.u32 %v723, 7
  %v725 = vsub.s32 0, %v724
  %v726 = vrot.slane %v721, %v725
  %v727 = vlaneseq
  %v728 = vshrl.u32 %v727, 7
  %v729 = vsub.s32 1, %v728
  %v730 = vrot.slane %v721, %v729
  %v731 = vlaneseq
  %v732 = vshrl.u32 %v731, 7
  %v733 = vsub.s32 2, %v732
  %v734 = vrot.slane %v721, %v733
  %v738 = vmul.f32 %v298, %v726
  %v739 = vmul.f32 %v299, %v730
  %v740 = vmul.f32 %v300, %v734
  %v744 = vrot.slane %v738, 1
  %v745 = vrot.slane %v739, 1
  %v746 = vrot.slane %v740, 1
  %v750 = vadd.f32 %v677, %v744
  %v751 = vadd.f32 %v678, %v745
  %v752 = vadd.f32 %v679, %v746
  %v753 = vmul.f32 %v316, %v726
  %v754 = vmul.f32 %v317, %v730
  %v755 = vmul.f32 %v318, %v734
  %v759 = vrot.slane %v753, 1
  %v760 = vrot.slane %v754, 1
  %v761 = vrot.slane %v755, 1
  %v765 = vadd.f32 %v683, %v759
  %v766 = vadd.f32 %v684, %v760
  %v767 = vadd.f32 %v685, %v761
  %v768 = vmul.f32 %v334, %v726
  %v769 = vmul.f32 %v335, %v730
  %v770 = vmul.f32 %v336, %v734
  %v774 = vrot.slane %v768, 1
  %v775 = vrot.slane %v769, 1
  %v776 = vrot.slane %v770, 1
  %v780 = vadd.f32 %v689, %v774
  %v781 = vadd.f32 %v690, %v775
  %v782 = vadd.f32 %v691, %v776
  %v783 = vmul.f32 %v352, %v726
  %v784 = vmul.f32 %v353, %v730
  %v785 = vmul.f32 %v354, %v734
  %v789 = vrot.slane %v783, 1
  %v790 = vrot.slane %v784, 1
  %v791 = vrot.slane %v785, 1
  %v795 = vadd.f32 %v695, %v789
  %v796 = vadd.f32 %v696, %v790
  %v797 = vadd.f32 %v697, %v791
  %v798 = vmul.f32 %v370, %v726
  %v799 = vmul.f32 %v371, %v730
  %v800 = vmul.f32 %v372, %v734
  %v804 = vrot.slane %v798, 1
  %v805 = vrot.slane %v799, 1
  %v806 = vrot.slane %v800, 1
  %v810 = vadd.f32 %v701, %v804
  %v811 = vadd.f32 %v702, %v805
  %v812 = vadd.f32 %v703, %v806
  %v813 = vmul.f32 %v388, %v726
  %v814 = vmul.f32 %v389, %v730
  %v815 = vmul.f32 %v390, %v734
  %v819 = vrot.slane %v813, 1
  %v820 = vrot.slane %v814, 1
  %v821 = vrot.slane %v815, 1
  %v825 = vadd.f32 %v707, %v819
  %v826 = vadd.f32 %v708, %v820
  %v827 = vadd.f32 %v709, %v821
  %v828 = vld [vmem:[%s710] sm:$0xfe]
  %v829 = vld [vmem:[%s710 + $0x8] sm:$0xfe]
  %v830 = vld [vmem:[%s710 + $0x10] sm:$0xfe]
  %v831 = vmul.f32 %v828, %v726
  %v832 = vmul.f32 %v829, %v730
  %v833 = vmul.f32 %v830, %v734
  %v837 = vrot.slane %v831, 1
  %v838 = vrot.slane %v832, 1
  %v839 = vrot.slane %v833, 1
  %v843 = vadd.f32 %v717, %v837
  %v844 = vadd.f32 %v718, %v838
  %v845 = vadd.f32 %v719, %v839
  %s846 = scalar_lea.vmem %s1, 5
  %v847 = vld [vmem:[%s846] ss:$8 sm:$0x7]
  %v849 = vlaneseq
  %v850 = vshrl.u32 %v849, 7
  %v851 = vsub.s32 0, %v850
  %v852 = vrot.slane %v847, %v851
  %v853 = vlaneseq
  %v854 = vshrl.u32 %v853, 7
  %v855 = vsub.s32 1, %v854
  %v856 = vrot.slane %v847, %v855
  %v857 = vlaneseq
  %v858 = vshrl.u32 %v857, 7
  %v859 = vsub.s32 2, %v858
  %v860 = vrot.slane %v847, %v859
  %v864 = vmul.f32 %v458, %v852
  %v865 = vmul.f32 %v459, %v856
  %v866 = vmul.f32 %v460, %v860
  %v867 = vmul.f32 %v461, %v852
  %v868 = vmul.f32 %v462, %v856
  %v869 = vmul.f32 %v463, %v860
  %v876 = vrot.slane %v864, 2
  %v877 = vrot.slane %v867, 2
  %v878 = vsel %vm442, %v876, %v877
  %v879 = vrot.slane %v865, 2
  %v880 = vrot.slane %v868, 2
  %v881 = vsel %vm442, %v879, %v880
  %v882 = vrot.slane %v866, 2
  %v883 = vrot.slane %v869, 2
  %v884 = vsel %vm442, %v882, %v883
  %v888 = vadd.f32 %v750, %v878
  %v889 = vadd.f32 %v751, %v881
  %v890 = vadd.f32 %v752, %v884
  %v891 = vmul.f32 %v491, %v852
  %v892 = vmul.f32 %v492, %v856
  %v893 = vmul.f32 %v493, %v860
  %v894 = vmul.f32 %v494, %v852
  %v895 = vmul.f32 %v495, %v856
  %v896 = vmul.f32 %v496, %v860
  %v903 = vrot.slane %v891, 2
  %v904 = vrot.slane %v894, 2
  %v905 = vsel %vm442, %v903, %v904
  %v906 = vrot.slane %v892, 2
  %v907 = vrot.slane %v895, 2
  %v908 = vsel %vm442, %v906, %v907
  %v909 = vrot.slane %v893, 2
  %v910 = vrot.slane %v896, 2
  %v911 = vsel %vm442, %v909, %v910
  %v915 = vadd.f32 %v765, %v905
  %v916 = vadd.f32 %v766, %v908
  %v917 = vadd.f32 %v767, %v911
  %v918 = vmul.f32 %v524, %v852
  %v919 = vmul.f32 %v525, %v856
  %v920 = vmul.f32 %v526, %v860
  %v921 = vmul.f32 %v527, %v852
  %v922 = vmul.f32 %v528, %v856
  %v923 = vmul.f32 %v529, %v860
  %v930 = vrot.slane %v918, 2
  %v931 = vrot.slane %v921, 2
  %v932 = vsel %vm442, %v930, %v931
  %v933 = vrot.slane %v919, 2
  %v934 = vrot.slane %v922, 2
  %v935 = vsel %vm442, %v933, %v934
  %v936 = vrot.slane %v920, 2
  %v937 = vrot.slane %v923, 2
  %v938 = vsel %vm442, %v936, %v937
  %v942 = vadd.f32 %v780, %v932
  %v943 = vadd.f32 %v781, %v935
  %v944 = vadd.f32 %v782, %v938
  %v945 = vmul.f32 %v557, %v852
  %v946 = vmul.f32 %v558, %v856
  %v947 = vmul.f32 %v559, %v860
  %v948 = vmul.f32 %v560, %v852
  %v949 = vmul.f32 %v561, %v856
  %v950 = vmul.f32 %v562, %v860
  %v957 = vrot.slane %v945, 2
  %v958 = vrot.slane %v948, 2
  %v959 = vsel %vm442, %v957, %v958
  %v960 = vrot.slane %v946, 2
  %v961 = vrot.slane %v949, 2
  %v962 = vsel %vm442, %v960, %v961
  %v963 = vrot.slane %v947, 2
  %v964 = vrot.slane %v950, 2
  %v965 = vsel %vm442, %v963, %v964
  %v969 = vadd.f32 %v795, %v959
  %v970 = vadd.f32 %v796, %v962
  %v971 = vadd.f32 %v797, %v965
  %v972 = vmul.f32 %v590, %v852
  %v973 = vmul.f32 %v591, %v856
  %v974 = vmul.f32 %v592, %v860
  %v975 = vmul.f32 %v593, %v852
  %v976 = vmul.f32 %v594, %v856
  %v977 = vmul.f32 %v595, %v860
  %v984 = vrot.slane %v972, 2
  %v985 = vrot.slane %v975, 2
  %v986 = vsel %vm442, %v984, %v985
  %v987 = vrot.slane %v973, 2
  %v988 = vrot.slane %v976, 2
  %v989 = vsel %vm442, %v987, %v988
  %v990 = vrot.slane %v974, 2
  %v991 = vrot.slane %v977, 2
  %v992 = vsel %vm442, %v990, %v991
  %v996 = vadd.f32 %v810, %v986
  %v997 = vadd.f32 %v811, %v989
  %v998 = vadd.f32 %v812, %v992
  %v999 = vmul.f32 %v623, %v852
  %v1000 = vmul.f32 %v624, %v856
  %v1001 = vmul.f32 %v625, %v860
  %v1002 = vmul.f32 %v626, %v852
  %v1003 = vmul.f32 %v627, %v856
  %v1004 = vmul.f32 %v628, %v860
  %v1011 = vrot.slane %v999, 2
  %v1012 = vrot.slane %v1002, 2
  %v1013 = vsel %vm442, %v1011, %v1012
  %v1014 = vrot.slane %v1000, 2
  %v1015 = vrot.slane %v1003, 2
  %v1016 = vsel %vm442, %v1014, %v1015
  %v1017 = vrot.slane %v1001, 2
  %v1018 = vrot.slane %v1004, 2
  %v1019 = vsel %vm442, %v1017, %v1018
  %v1023 = vadd.f32 %v825, %v1013
  %v1024 = vadd.f32 %v826, %v1016
  %v1025 = vadd.f32 %v827, %v1019
  %v1026 = vld [vmem:[%s710] sm:$0xfc]
  %v1027 = vld [vmem:[%s710 + $0x8] sm:$0xfc]
  %v1028 = vld [vmem:[%s710 + $0x10] sm:$0xfc]
  %v1029 = vld [vmem:[%s710 + $0x18] sm:$0x1]
  %v1030 = vld [vmem:[%s710 + $0x20] sm:$0x1]
  %v1031 = vld [vmem:[%s710 + $0x28] sm:$0x1]
  %v1032 = vmul.f32 %v1026, %v852
  %v1033 = vmul.f32 %v1027, %v856
  %v1034 = vmul.f32 %v1028, %v860
  %v1035 = vmul.f32 %v1029, %v852
  %v1036 = vmul.f32 %v1030, %v856
  %v1037 = vmul.f32 %v1031, %v860
  %v1044 = vrot.slane %v1032, 2
  %v1045 = vrot.slane %v1035, 2
  %v1046 = vsel %vm442, %v1044, %v1045
  %v1047 = vrot.slane %v1033, 2
  %v1048 = vrot.slane %v1036, 2
  %v1049 = vsel %vm442, %v1047, %v1048
  %v1050 = vrot.slane %v1034, 2
  %v1051 = vrot.slane %v1037, 2
  %v1052 = vsel %vm442, %v1050, %v1051
  %v1056 = vadd.f32 %v843, %v1046
  %v1057 = vadd.f32 %v844, %v1049
  %v1058 = vadd.f32 %v845, %v1052
  %s1059 = scalar_lea.vmem %s1, 6
  %v1060 = vld [vmem:[%s1059] ss:$8 sm:$0x7]
  %v1062 = vlaneseq
  %v1063 = vshrl.u32 %v1062, 7
  %v1064 = vsub.s32 0, %v1063
  %v1065 = vrot.slane %v1060, %v1064
  %v1066 = vlaneseq
  %v1067 = vshrl.u32 %v1066, 7
  %v1068 = vsub.s32 1, %v1067
  %v1069 = vrot.slane %v1060, %v1068
  %v1070 = vlaneseq
  %v1071 = vshrl.u32 %v1070, 7
  %v1072 = vsub.s32 2, %v1071
  %v1073 = vrot.slane %v1060, %v1072
  %v1077 = vmul.f32 %v213, %v1065
  %v1078 = vmul.f32 %v214, %v1069
  %v1079 = vmul.f32 %v215, %v1073
  %v1080 = vadd.f32 %v888, %v1077
  %v1081 = vadd.f32 %v889, %v1078
  %v1082 = vadd.f32 %v890, %v1079
  %v1083 = vmul.f32 %v223, %v1065
  %v1084 = vmul.f32 %v224, %v1069
  %v1085 = vmul.f32 %v225, %v1073
  %v1086 = vadd.f32 %v915, %v1083
  %v1087 = vadd.f32 %v916, %v1084
  %v1088 = vadd.f32 %v917, %v1085
  %v1089 = vmul.f32 %v233, %v1065
  %v1090 = vmul.f32 %v234, %v1069
  %v1091 = vmul.f32 %v235, %v1073
  %v1092 = vadd.f32 %v942, %v1089
  %v1093 = vadd.f32 %v943, %v1090
  %v1094 = vadd.f32 %v944, %v1091
  %v1095 = vmul.f32 %v243, %v1065
  %v1096 = vmul.f32 %v244, %v1069
  %v1097 = vmul.f32 %v245, %v1073
  %v1098 = vadd.f32 %v969, %v1095
  %v1099 = vadd.f32 %v970, %v1096
  %v1100 = vadd.f32 %v971, %v1097
  %v1101 = vmul.f32 %v253, %v1065
  %v1102 = vmul.f32 %v254, %v1069
  %v1103 = vmul.f32 %v255, %v1073
  %v1104 = vadd.f32 %v996, %v1101
  %v1105 = vadd.f32 %v997, %v1102
  %v1106 = vadd.f32 %v998, %v1103
  %v1107 = vmul.f32 %v711, %v1065
  %v1108 = vmul.f32 %v712, %v1069
  %v1109 = vmul.f32 %v713, %v1073
  %v1110 = vadd.f32 %v1023, %v1107
  %v1111 = vadd.f32 %v1024, %v1108
  %v1112 = vadd.f32 %v1025, %v1109
  %s1113 = scalar_lea.vmem [#allocation2], 384
  %v1114 = vld [vmem:[%s1113] sm:$0x7f]
  %v1115 = vld [vmem:[%s1113 + $0x8] sm:$0x7f]
  %v1116 = vld [vmem:[%s1113 + $0x10] sm:$0x7f]
  %v1117 = vmul.f32 %v1114, %v1065
  %v1118 = vmul.f32 %v1115, %v1069
  %v1119 = vmul.f32 %v1116, %v1073
  %v1120 = vadd.f32 %v1056, %v1117
  %v1121 = vadd.f32 %v1057, %v1118
  %v1122 = vadd.f32 %v1058, %v1119
  %s1123 = scalar_lea.vmem %s1, 7
  %v1124 = vld [vmem:[%s1123] ss:$8 sm:$0x7]
  %v1126 = vlaneseq
  %v1127 = vshrl.u32 %v1126, 7
  %v1128 = vsub.s32 0, %v1127
  %v1129 = vrot.slane %v1124, %v1128
  %v1130 = vlaneseq
  %v1131 = vshrl.u32 %v1130, 7
  %v1132 = vsub.s32 1, %v1131
  %v1133 = vrot.slane %v1124, %v1132
  %v1134 = vlaneseq
  %v1135 = vshrl.u32 %v1134, 7
  %v1136 = vsub.s32 2, %v1135
  %v1137 = vrot.slane %v1124, %v1136
  %v1141 = vmul.f32 %v316, %v1129
  %v1142 = vmul.f32 %v317, %v1133
  %v1143 = vmul.f32 %v318, %v1137
  %v1147 = vrot.slane %v1141, 1
  %v1148 = vrot.slane %v1142, 1
  %v1149 = vrot.slane %v1143, 1
  %v1153 = vadd.f32 %v1080, %v1147
  %v1154 = vadd.f32 %v1081, %v1148
  %v1155 = vadd.f32 %v1082, %v1149
  %v1156 = vmul.f32 %v334, %v1129
  %v1157 = vmul.f32 %v335, %v1133
  %v1158 = vmul.f32 %v336, %v1137
  %v1162 = vrot.slane %v1156, 1
  %v1163 = vrot.slane %v1157, 1
  %v1164 = vrot.slane %v1158, 1
  %v1168 = vadd.f32 %v1086, %v1162
  %v1169 = vadd.f32 %v1087, %v1163
  %v1170 = vadd.f32 %v1088, %v1164
  %v1171 = vmul.f32 %v352, %v1129
  %v1172 = vmul.f32 %v353, %v1133
  %v1173 = vmul.f32 %v354, %v1137
  %v1177 = vrot.slane %v1171, 1
  %v1178 = vrot.slane %v1172, 1
  %v1179 = vrot.slane %v1173, 1
  %v1183 = vadd.f32 %v1092, %v1177
  %v1184 = vadd.f32 %v1093, %v1178
  %v1185 = vadd.f32 %v1094, %v1179
  %v1186 = vmul.f32 %v370, %v1129
  %v1187 = vmul.f32 %v371, %v1133
  %v1188 = vmul.f32 %v372, %v1137
  %v1192 = vrot.slane %v1186, 1
  %v1193 = vrot.slane %v1187, 1
  %v1194 = vrot.slane %v1188, 1
  %v1198 = vadd.f32 %v1098, %v1192
  %v1199 = vadd.f32 %v1099, %v1193
  %v1200 = vadd.f32 %v1100, %v1194
  %v1201 = vmul.f32 %v388, %v1129
  %v1202 = vmul.f32 %v389, %v1133
  %v1203 = vmul.f32 %v390, %v1137
  %v1207 = vrot.slane %v1201, 1
  %v1208 = vrot.slane %v1202, 1
  %v1209 = vrot.slane %v1203, 1
  %v1213 = vadd.f32 %v1104, %v1207
  %v1214 = vadd.f32 %v1105, %v1208
  %v1215 = vadd.f32 %v1106, %v1209
  %v1216 = vmul.f32 %v828, %v1129
  %v1217 = vmul.f32 %v829, %v1133
  %v1218 = vmul.f32 %v830, %v1137
  %v1222 = vrot.slane %v1216, 1
  %v1223 = vrot.slane %v1217, 1
  %v1224 = vrot.slane %v1218, 1
  %v1228 = vadd.f32 %v1110, %v1222
  %v1229 = vadd.f32 %v1111, %v1223
  %v1230 = vadd.f32 %v1112, %v1224
  %v1231 = vld [vmem:[%s1113] sm:$0xfe]
  %v1232 = vld [vmem:[%s1113 + $0x8] sm:$0xfe]
  %v1233 = vld [vmem:[%s1113 + $0x10] sm:$0xfe]
  %v1234 = vmul.f32 %v1231, %v1129
  %v1235 = vmul.f32 %v1232, %v1133
  %v1236 = vmul.f32 %v1233, %v1137
  %v1240 = vrot.slane %v1234, 1
  %v1241 = vrot.slane %v1235, 1
  %v1242 = vrot.slane %v1236, 1
  %v1246 = vadd.f32 %v1120, %v1240
  %v1247 = vadd.f32 %v1121, %v1241
  %v1248 = vadd.f32 %v1122, %v1242
  %s1249 = scalar_lea.vmem %s1, 72
  %v1250 = vld [vmem:[%s1249] ss:$8 sm:$0x7]
  %v1252 = vlaneseq
  %v1253 = vshrl.u32 %v1252, 7
  %v1254 = vsub.s32 0, %v1253
  %v1255 = vrot.slane %v1250, %v1254
  %v1256 = vlaneseq
  %v1257 = vshrl.u32 %v1256, 7
  %v1258 = vsub.s32 1, %v1257
  %v1259 = vrot.slane %v1250, %v1258
  %v1260 = vlaneseq
  %v1261 = vshrl.u32 %v1260, 7
  %v1262 = vsub.s32 2, %v1261
  %v1263 = vrot.slane %v1250, %v1262
  %v1267 = vmul.f32 %v491, %v1255
  %v1268 = vmul.f32 %v492, %v1259
  %v1269 = vmul.f32 %v493, %v1263
  %v1270 = vmul.f32 %v494, %v1255
  %v1271 = vmul.f32 %v495, %v1259
  %v1272 = vmul.f32 %v496, %v1263
  %v1279 = vrot.slane %v1267, 2
  %v1280 = vrot.slane %v1270, 2
  %v1281 = vsel %vm442, %v1279, %v1280
  %v1282 = vrot.slane %v1268, 2
  %v1283 = vrot.slane %v1271, 2
  %v1284 = vsel %vm442, %v1282, %v1283
  %v1285 = vrot.slane %v1269, 2
  %v1286 = vrot.slane %v1272, 2
  %v1287 = vsel %vm442, %v1285, %v1286
  %v1291 = vadd.f32 %v1153, %v1281
  %v1292 = vadd.f32 %v1154, %v1284
  %v1293 = vadd.f32 %v1155, %v1287
  %v1294 = vmul.f32 %v524, %v1255
  %v1295 = vmul.f32 %v525, %v1259
  %v1296 = vmul.f32 %v526, %v1263
  %v1297 = vmul.f32 %v527, %v1255
  %v1298 = vmul.f32 %v528, %v1259
  %v1299 = vmul.f32 %v529, %v1263
  %v1306 = vrot.slane %v1294, 2
  %v1307 = vrot.slane %v1297, 2
  %v1308 = vsel %vm442, %v1306, %v1307
  %v1309 = vrot.slane %v1295, 2
  %v1310 = vrot.slane %v1298, 2
  %v1311 = vsel %vm442, %v1309, %v1310
  %v1312 = vrot.slane %v1296, 2
  %v1313 = vrot.slane %v1299, 2
  %v1314 = vsel %vm442, %v1312, %v1313
  %v1318 = vadd.f32 %v1168, %v1308
  %v1319 = vadd.f32 %v1169, %v1311
  %v1320 = vadd.f32 %v1170, %v1314
  %v1321 = vmul.f32 %v557, %v1255
  %v1322 = vmul.f32 %v558, %v1259
  %v1323 = vmul.f32 %v559, %v1263
  %v1324 = vmul.f32 %v560, %v1255
  %v1325 = vmul.f32 %v561, %v1259
  %v1326 = vmul.f32 %v562, %v1263
  %v1333 = vrot.slane %v1321, 2
  %v1334 = vrot.slane %v1324, 2
  %v1335 = vsel %vm442, %v1333, %v1334
  %v1336 = vrot.slane %v1322, 2
  %v1337 = vrot.slane %v1325, 2
  %v1338 = vsel %vm442, %v1336, %v1337
  %v1339 = vrot.slane %v1323, 2
  %v1340 = vrot.slane %v1326, 2
  %v1341 = vsel %vm442, %v1339, %v1340
  %v1345 = vadd.f32 %v1183, %v1335
  %v1346 = vadd.f32 %v1184, %v1338
  %v1347 = vadd.f32 %v1185, %v1341
  %v1348 = vmul.f32 %v590, %v1255
  %v1349 = vmul.f32 %v591, %v1259
  %v1350 = vmul.f32 %v592, %v1263
  %v1351 = vmul.f32 %v593, %v1255
  %v1352 = vmul.f32 %v594, %v1259
  %v1353 = vmul.f32 %v595, %v1263
  %v1360 = vrot.slane %v1348, 2
  %v1361 = vrot.slane %v1351, 2
  %v1362 = vsel %vm442, %v1360, %v1361
  %v1363 = vrot.slane %v1349, 2
  %v1364 = vrot.slane %v1352, 2
  %v1365 = vsel %vm442, %v1363, %v1364
  %v1366 = vrot.slane %v1350, 2
  %v1367 = vrot.slane %v1353, 2
  %v1368 = vsel %vm442, %v1366, %v1367
  %v1372 = vadd.f32 %v1198, %v1362
  %v1373 = vadd.f32 %v1199, %v1365
  %v1374 = vadd.f32 %v1200, %v1368
  %v1375 = vmul.f32 %v623, %v1255
  %v1376 = vmul.f32 %v624, %v1259
  %v1377 = vmul.f32 %v625, %v1263
  %v1378 = vmul.f32 %v626, %v1255
  %v1379 = vmul.f32 %v627, %v1259
  %v1380 = vmul.f32 %v628, %v1263
  %v1387 = vrot.slane %v1375, 2
  %v1388 = vrot.slane %v1378, 2
  %v1389 = vsel %vm442, %v1387, %v1388
  %v1390 = vrot.slane %v1376, 2
  %v1391 = vrot.slane %v1379, 2
  %v1392 = vsel %vm442, %v1390, %v1391
  %v1393 = vrot.slane %v1377, 2
  %v1394 = vrot.slane %v1380, 2
  %v1395 = vsel %vm442, %v1393, %v1394
  %v1399 = vadd.f32 %v1213, %v1389
  %v1400 = vadd.f32 %v1214, %v1392
  %v1401 = vadd.f32 %v1215, %v1395
  %v1402 = vmul.f32 %v1026, %v1255
  %v1403 = vmul.f32 %v1027, %v1259
  %v1404 = vmul.f32 %v1028, %v1263
  %v1405 = vmul.f32 %v1029, %v1255
  %v1406 = vmul.f32 %v1030, %v1259
  %v1407 = vmul.f32 %v1031, %v1263
  %v1414 = vrot.slane %v1402, 2
  %v1415 = vrot.slane %v1405, 2
  %v1416 = vsel %vm442, %v1414, %v1415
  %v1417 = vrot.slane %v1403, 2
  %v1418 = vrot.slane %v1406, 2
  %v1419 = vsel %vm442, %v1417, %v1418
  %v1420 = vrot.slane %v1404, 2
  %v1421 = vrot.slane %v1407, 2
  %v1422 = vsel %vm442, %v1420, %v1421
  %v1426 = vadd.f32 %v1228, %v1416
  %v1427 = vadd.f32 %v1229, %v1419
  %v1428 = vadd.f32 %v1230, %v1422
  %v1429 = vld [vmem:[%s1113] sm:$0xfc]
  %v1430 = vld [vmem:[%s1113 + $0x8] sm:$0xfc]
  %v1431 = vld [vmem:[%s1113 + $0x10] sm:$0xfc]
  %v1432 = vld [vmem:[%s1113 + $0x18] sm:$0x1]
  %v1433 = vld [vmem:[%s1113 + $0x20] sm:$0x1]
  %v1434 = vld [vmem:[%s1113 + $0x28] sm:$0x1]
  %v1435 = vmul.f32 %v1429, %v1255
  %v1436 = vmul.f32 %v1430, %v1259
  %v1437 = vmul.f32 %v1431, %v1263
  %v1438 = vmul.f32 %v1432, %v1255
  %v1439 = vmul.f32 %v1433, %v1259
  %v1440 = vmul.f32 %v1434, %v1263
  %v1447 = vrot.slane %v1435, 2
  %v1448 = vrot.slane %v1438, 2
  %v1449 = vsel %vm442, %v1447, %v1448
  %v1450 = vrot.slane %v1436, 2
  %v1451 = vrot.slane %v1439, 2
  %v1452 = vsel %vm442, %v1450, %v1451
  %v1453 = vrot.slane %v1437, 2
  %v1454 = vrot.slane %v1440, 2
  %v1455 = vsel %vm442, %v1453, %v1454
  %v1459 = vadd.f32 %v1246, %v1449
  %v1460 = vadd.f32 %v1247, %v1452
  %v1461 = vadd.f32 %v1248, %v1455
  %v1462 = vmul.f32 %v1291, %v1291
  %v1463 = vmul.f32 %v1292, %v1292
  %v1464 = vmul.f32 %v1293, %v1293
  %v1465 = vadd.f32 %v1291, %v1318
  %v1466 = vadd.f32 %v1292, %v1319
  %v1467 = vadd.f32 %v1293, %v1320
  %v1468 = vmul.f32 %v1318, %v1318
  %v1469 = vmul.f32 %v1319, %v1319
  %v1470 = vmul.f32 %v1320, %v1320
  %v1471 = vadd.f32 %v1462, %v1468
  %v1472 = vadd.f32 %v1463, %v1469
  %v1473 = vadd.f32 %v1464, %v1470
  %v1474 = vadd.f32 %v1465, %v1345
  %v1475 = vadd.f32 %v1466, %v1346
  %v1476 = vadd.f32 %v1467, %v1347
  %v1477 = vmul.f32 %v1345, %v1345
  %v1478 = vmul.f32 %v1346, %v1346
  %v1479 = vmul.f32 %v1347, %v1347
  %v1480 = vadd.f32 %v1471, %v1477
  %v1481 = vadd.f32 %v1472, %v1478
  %v1482 = vadd.f32 %v1473, %v1479
  %v1483 = vadd.f32 %v1474, %v1372
  %v1484 = vadd.f32 %v1475, %v1373
  %v1485 = vadd.f32 %v1476, %v1374
  %v1486 = vmul.f32 %v1372, %v1372
  %v1487 = vmul.f32 %v1373, %v1373
  %v1488 = vmul.f32 %v1374, %v1374
  %v1489 = vadd.f32 %v1480, %v1486
  %v1490 = vadd.f32 %v1481, %v1487
  %v1491 = vadd.f32 %v1482, %v1488
  %v1492 = vadd.f32 %v1483, %v1399
  %v1493 = vadd.f32 %v1484, %v1400
  %v1494 = vadd.f32 %v1485, %v1401
  %v1495 = vmul.f32 %v1399, %v1399
  %v1496 = vmul.f32 %v1400, %v1400
  %v1497 = vmul.f32 %v1401, %v1401
  %v1498 = vadd.f32 %v1489, %v1495
  %v1499 = vadd.f32 %v1490, %v1496
  %v1500 = vadd.f32 %v1491, %v1497
  %v1501 = vadd.f32 %v1492, %v1426
  %v1502 = vadd.f32 %v1493, %v1427
  %v1503 = vadd.f32 %v1494, %v1428
  %v1504 = vmul.f32 %v1426, %v1426
  %v1505 = vmul.f32 %v1427, %v1427
  %v1506 = vmul.f32 %v1428, %v1428
  %v1507 = vadd.f32 %v1498, %v1504
  %v1508 = vadd.f32 %v1499, %v1505
  %v1509 = vadd.f32 %v1500, %v1506
  %v1510 = vadd.f32 %v1501, %v1459
  %v1511 = vadd.f32 %v1502, %v1460
  %v1512 = vadd.f32 %v1503, %v1461
  %v1513 = vmul.f32 %v1459, %v1459
  %v1514 = vmul.f32 %v1460, %v1460
  %v1515 = vmul.f32 %v1461, %v1461
  %v1516 = vadd.f32 %v1507, %v1513
  %v1517 = vadd.f32 %v1508, %v1514
  %v1518 = vadd.f32 %v1509, %v1515
  %vm1519 = vcmask 1046528
  %v1520 = vsel %vm1519, %v1510, 0.0
  %v1521 = vrot.slane %v1520, 4
  %v1522 = vadd.f32 %v1520, %v1521
  %v1523 = vrot.slane %v1522, 2
  %v1524 = vadd.f32 %v1522, %v1523
  %v1525 = vrot.slane %v1524, 1
  %v1526 = vadd.f32 %v1524, %v1525
  %v1527 = vsel %vm1519, %v1511, 0.0
  %v1528 = vrot.slane %v1527, 4
  %v1529 = vadd.f32 %v1527, %v1528
  %v1530 = vrot.slane %v1529, 2
  %v1531 = vadd.f32 %v1529, %v1530
  %v1532 = vrot.slane %v1531, 1
  %v1533 = vadd.f32 %v1531, %v1532
  %v1534 = vsel %vm1519, %v1512, 0.0
  %v1535 = vrot.slane %v1534, 4
  %v1536 = vadd.f32 %v1534, %v1535
  %v1537 = vrot.slane %v1536, 2
  %v1538 = vadd.f32 %v1536, %v1537
  %v1539 = vrot.slane %v1538, 1
  %v1540 = vadd.f32 %v1538, %v1539
  %v1541 = vsel %vm1519, %v1516, 0.0
  %v1542 = vrot.slane %v1541, 4
  %v1543 = vadd.f32 %v1541, %v1542
  %v1544 = vrot.slane %v1543, 2
  %v1545 = vadd.f32 %v1543, %v1544
  %v1546 = vrot.slane %v1545, 1
  %v1547 = vadd.f32 %v1545, %v1546
  %v1548 = vsel %vm1519, %v1517, 0.0
  %v1549 = vrot.slane %v1548, 4
  %v1550 = vadd.f32 %v1548, %v1549
  %v1551 = vrot.slane %v1550, 2
  %v1552 = vadd.f32 %v1550, %v1551
  %v1553 = vrot.slane %v1552, 1
  %v1554 = vadd.f32 %v1552, %v1553
  %v1555 = vsel %vm1519, %v1518, 0.0
  %v1556 = vrot.slane %v1555, 4
  %v1557 = vadd.f32 %v1555, %v1556
  %v1558 = vrot.slane %v1557, 2
  %v1559 = vadd.f32 %v1557, %v1558
  %v1560 = vrot.slane %v1559, 1
  %v1561 = vadd.f32 %v1559, %v1560
  %v1562 = vmul.f32 %v1526, 0.020408163
  %v1563 = vmul.f32 %v1533, 0.020408163
  %v1564 = vmul.f32 %v1540, 0.020408163
  %v1565 = vmul.f32 %v1547, 0.020408163
  %v1566 = vmul.f32 %v1554, 0.020408163
  %v1567 = vmul.f32 %v1561, 0.020408163
  %v1568 = vmul.f32 %v1562, %v1562
  %v1569 = vmul.f32 %v1563, %v1563
  %v1570 = vmul.f32 %v1564, %v1564
  %v1571 = vsub.f32 %v1565, %v1568
  %v1572 = vsub.f32 %v1566, %v1569
  %v1573 = vsub.f32 %v1567, %v1570
  %v1574 = vadd.f32 %v1571, 1e-05
  %v1575 = vadd.f32 %v1572, 1e-05
  %v1576 = vadd.f32 %v1573, 1e-05
  %v1577 = vrsqrt.pop %v1574
  %v1578 = vrsqrt.pop %v1575
  %v1579 = vrsqrt.pop %v1576
  %v1580 = vld [vmem:[%s2] sm:$0x7]
  %v1584 = vcombine.low %v1577, %v1578
  %v1586 = vunpack.c.l.s4 1966171168
  %v1587 = vunpack.c.0.s8 %v1586
  %v1588 = vlaneseq
  %v1589 = vshrl.u32 %v1588, 7
  %v1590 = vsub.s32 %v1587, %v1589
  %v1591 = vrot.slane %v1584, %v1590
  %v1593 = vunpack.c.l.s4 1966171168
  %v1594 = vunpack.c.0.s8 %v1593
  %v1595 = vlaneseq
  %v1596 = vshrl.u32 %v1595, 7
  %v1597 = vsub.s32 %v1594, %v1596
  %v1598 = vrot.slane %v1579, %v1597
  %v1599 = vcombine.low %v1591, %v1598
  %v1601 = vunpack.c.l.s4 1966171168
  %v1602 = vunpack.c.0.s8 %v1601
  %v1603 = vlaneseq
  %v1604 = vshrl.u32 %v1603, 7
  %v1605 = vsub.s32 %v1602, %v1604
  %v1606 = vrot.slane %v1599, %v1605
  %v1608 = vmul.f32 %v1580, %v1606
  %v1609 = vld [vmem:[%s3] sm:$0x7]
  %v1611 = vlaneseq
  %v1612 = vshrl.u32 %v1611, 7
  %v1613 = vsub.s32 0, %v1612
  %v1614 = vrot.slane %v1608, %v1613
  %v1615 = vlaneseq
  %v1616 = vshrl.u32 %v1615, 7
  %v1617 = vsub.s32 1, %v1616
  %v1618 = vrot.slane %v1608, %v1617
  %v1619 = vlaneseq
  %v1620 = vshrl.u32 %v1619, 7
  %v1621 = vsub.s32 2, %v1620
  %v1622 = vrot.slane %v1608, %v1621
  %v1626 = vmul.f32 %v1562, %v1614
  %v1627 = vmul.f32 %v1563, %v1618
  %v1628 = vmul.f32 %v1564, %v1622
  %v1632 = vcombine.low %v1626, %v1627
  %v1634 = vunpack.c.l.s4 1966171168
  %v1635 = vunpack.c.0.s8 %v1634
  %v1636 = vlaneseq
  %v1637 = vshrl.u32 %v1636, 7
  %v1638 = vsub.s32 %v1635, %v1637
  %v1639 = vrot.slane %v1632, %v1638
  %v1641 = vunpack.c.l.s4 1966171168
  %v1642 = vunpack.c.0.s8 %v1641
  %v1643 = vlaneseq
  %v1644 = vshrl.u32 %v1643, 7
  %v1645 = vsub.s32 %v1642, %v1644
  %v1646 = vrot.slane %v1628, %v1645
  %v1647 = vcombine.low %v1639, %v1646
  %v1649 = vunpack.c.l.s4 1966171168
  %v1650 = vunpack.c.0.s8 %v1649
  %v1651 = vlaneseq
  %v1652 = vshrl.u32 %v1651, 7
  %v1653 = vsub.s32 %v1650, %v1652
  %v1654 = vrot.slane %v1647, %v1653
  %v1656 = vsub.f32 %v1609, %v1654
  %v1658 = vlaneseq
  %v1659 = vshrl.u32 %v1658, 7
  %v1660 = vsub.s32 0, %v1659
  %v1661 = vrot.slane %v1656, %v1660
  %v1662 = vlaneseq
  %v1663 = vshrl.u32 %v1662, 7
  %v1664 = vsub.s32 1, %v1663
  %v1665 = vrot.slane %v1656, %v1664
  %v1666 = vlaneseq
  %v1667 = vshrl.u32 %v1666, 7
  %v1668 = vsub.s32 2, %v1667
  %v1669 = vrot.slane %v1656, %v1668
  %v1673 = vmul.f32 %v1291, %v1614
  %v1674 = vmul.f32 %v1292, %v1618
  %v1675 = vmul.f32 %v1293, %v1622
  %v1676 = vadd.f32 %v1673, %v1661
  %v1677 = vadd.f32 %v1674, %v1665
  %v1678 = vadd.f32 %v1675, %v1669
  %1679 = vst [vmem:[%s4] sm:$0x7f] %v1676
  %1680 = vst [vmem:[%s4 + $0x8] sm:$0x7f] %v1677
  %1681 = vst [vmem:[%s4 + $0x10] sm:$0x7f] %v1678
  %v1682 = vmul.f32 %v1318, %v1614
  %v1683 = vmul.f32 %v1319, %v1618
  %v1684 = vmul.f32 %v1320, %v1622
  %v1685 = vadd.f32 %v1682, %v1661
  %v1686 = vadd.f32 %v1683, %v1665
  %v1687 = vadd.f32 %v1684, %v1669
  %s1688 = scalar_lea.vmem %s4, 72
  %1689 = vst [vmem:[%s1688] sm:$0x7f] %v1685
  %1690 = vst [vmem:[%s1688 + $0x8] sm:$0x7f] %v1686
  %1691 = vst [vmem:[%s1688 + $0x10] sm:$0x7f] %v1687
  %v1692 = vmul.f32 %v1345, %v1614
  %v1693 = vmul.f32 %v1346, %v1618
  %v1694 = vmul.f32 %v1347, %v1622
  %v1695 = vadd.f32 %v1692, %v1661
  %v1696 = vadd.f32 %v1693, %v1665
  %v1697 = vadd.f32 %v1694, %v1669
  %s1698 = scalar_lea.vmem %s4, 144
  %1699 = vst [vmem:[%s1698] sm:$0x7f] %v1695
  %1700 = vst [vmem:[%s1698 + $0x8] sm:$0x7f] %v1696
  %1701 = vst [vmem:[%s1698 + $0x10] sm:$0x7f] %v1697
  %v1702 = vmul.f32 %v1372, %v1614
  %v1703 = vmul.f32 %v1373, %v1618
  %v1704 = vmul.f32 %v1374, %v1622
  %v1705 = vadd.f32 %v1702, %v1661
  %v1706 = vadd.f32 %v1703, %v1665
  %v1707 = vadd.f32 %v1704, %v1669
  %s1708 = scalar_lea.vmem %s4, 216
  %1709 = vst [vmem:[%s1708] sm:$0x7f] %v1705
  %1710 = vst [vmem:[%s1708 + $0x8] sm:$0x7f] %v1706
  %1711 = vst [vmem:[%s1708 + $0x10] sm:$0x7f] %v1707
  %v1712 = vmul.f32 %v1399, %v1614
  %v1713 = vmul.f32 %v1400, %v1618
  %v1714 = vmul.f32 %v1401, %v1622
  %v1715 = vadd.f32 %v1712, %v1661
  %v1716 = vadd.f32 %v1713, %v1665
  %v1717 = vadd.f32 %v1714, %v1669
  %s1718 = scalar_lea.vmem %s4, 288
  %1719 = vst [vmem:[%s1718] sm:$0x7f] %v1715
  %1720 = vst [vmem:[%s1718 + $0x8] sm:$0x7f] %v1716
  %1721 = vst [vmem:[%s1718 + $0x10] sm:$0x7f] %v1717
  %v1722 = vmul.f32 %v1426, %v1614
  %v1723 = vmul.f32 %v1427, %v1618
  %v1724 = vmul.f32 %v1428, %v1622
  %v1725 = vadd.f32 %v1722, %v1661
  %v1726 = vadd.f32 %v1723, %v1665
  %v1727 = vadd.f32 %v1724, %v1669
  %s1728 = scalar_lea.vmem %s4, 360
  %1729 = vst [vmem:[%s1728] sm:$0x7f] %v1725
  %1730 = vst [vmem:[%s1728 + $0x8] sm:$0x7f] %v1726
  %1731 = vst [vmem:[%s1728 + $0x10] sm:$0x7f] %v1727
  %v1732 = vmul.f32 %v1459, %v1614
  %v1733 = vmul.f32 %v1460, %v1618
  %v1734 = vmul.f32 %v1461, %v1622
  %v1735 = vadd.f32 %v1732, %v1661
  %v1736 = vadd.f32 %v1733, %v1665
  %v1737 = vadd.f32 %v1734, %v1669
  %s1738 = scalar_lea.vmem %s4, 432
  %1739 = vst [vmem:[%s1738] sm:$0x7f] %v1735
  %1740 = vst [vmem:[%s1738 + $0x8] sm:$0x7f] %v1736
  %1741 = vst [vmem:[%s1738 + $0x10] sm:$0x7f] %v1737
  %v1742 = vld [vmem:[%s0 + $0x18] sm:$0x7f]
  %v1743 = vld [vmem:[%s0 + $0x20] sm:$0x7f]
  %v1744 = vld [vmem:[%s0 + $0x28] sm:$0x7f]
  %v1745 = vld [vmem:[%s0 + $0x60] sm:$0x7f]
  %v1746 = vld [vmem:[%s0 + $0x68] sm:$0x7f]
  %v1747 = vld [vmem:[%s0 + $0x70] sm:$0x7f]
  %v1748 = vld [vmem:[%s0 + $0xa8] sm:$0x7f]
  %v1749 = vld [vmem:[%s0 + $0xb0] sm:$0x7f]
  %v1750 = vld [vmem:[%s0 + $0xb8] sm:$0x7f]
  %v1751 = vld [vmem:[%s0 + $0xf0] sm:$0x7f]
  %v1752 = vld [vmem:[%s0 + $0xf8] sm:$0x7f]
  %v1753 = vld [vmem:[%s0 + $0x100] sm:$0x7f]
  %v1754 = vld [vmem:[%s0 + $0x138] sm:$0x7f]
  %v1755 = vld [vmem:[%s0 + $0x140] sm:$0x7f]
  %v1756 = vld [vmem:[%s0 + $0x148] sm:$0x7f]
  %v1757 = vld [vmem:[%s0 + $0x180] sm:$0x7f]
  %v1758 = vld [vmem:[%s0 + $0x188] sm:$0x7f]
  %v1759 = vld [vmem:[%s0 + $0x190] sm:$0x7f]
  %v1760 = vld [vmem:[%s0 + $0x1c8] sm:$0x7f]
  %v1761 = vld [vmem:[%s0 + $0x1d0] sm:$0x7f]
  %v1762 = vld [vmem:[%s0 + $0x1d8] sm:$0x7f]
  %v1784 = vrot.slane %v1742, 7
  %v1785 = vrot.slane %v1743, 7
  %v1786 = vrot.slane %v1744, 7
  %v1787 = vrot.slane %v1745, 7
  %v1788 = vrot.slane %v1746, 7
  %v1789 = vrot.slane %v1747, 7
  %v1790 = vrot.slane %v1748, 7
  %v1791 = vrot.slane %v1749, 7
  %v1792 = vrot.slane %v1750, 7
  %v1793 = vrot.slane %v1751, 7
  %v1794 = vrot.slane %v1752, 7
  %v1795 = vrot.slane %v1753, 7
  %v1796 = vrot.slane %v1754, 7
  %v1797 = vrot.slane %v1755, 7
  %v1798 = vrot.slane %v1756, 7
  %v1799 = vrot.slane %v1757, 7
  %v1800 = vrot.slane %v1758, 7
  %v1801 = vrot.slane %v1759, 7
  %v1802 = vrot.slane %v1760, 7
  %v1803 = vrot.slane %v1761, 7
  %v1804 = vrot.slane %v1762, 7
  %1826 = vst [vmem:[%s155] sm:$0xfe] %v1784
  %1827 = vst [vmem:[%s155 + $0x8] sm:$0xfe] %v1785
  %1828 = vst [vmem:[%s155 + $0x10] sm:$0xfe] %v1786
  %1829 = vst [vmem:[%s155 + $0x30] sm:$0xfe] %v1787
  %1830 = vst [vmem:[%s155 + $0x38] sm:$0xfe] %v1788
  %1831 = vst [vmem:[%s155 + $0x40] sm:$0xfe] %v1789
  %1832 = vst [vmem:[%s155 + $0x60] sm:$0xfe] %v1790
  %1833 = vst [vmem:[%s155 + $0x68] sm:$0xfe] %v1791
  %1834 = vst [vmem:[%s155 + $0x70] sm:$0xfe] %v1792
  %1835 = vst [vmem:[%s155 + $0x90] sm:$0xfe] %v1793
  %1836 = vst [vmem:[%s155 + $0x98] sm:$0xfe] %v1794
  %1837 = vst [vmem:[%s155 + $0xa0] sm:$0xfe] %v1795
  %1838 = vst [vmem:[%s155 + $0xc0] sm:$0xfe] %v1796
  %1839 = vst [vmem:[%s155 + $0xc8] sm:$0xfe] %v1797
  %1840 = vst [vmem:[%s155 + $0xd0] sm:$0xfe] %v1798
  %1841 = vst [vmem:[%s155 + $0xf0] sm:$0xfe] %v1799
  %1842 = vst [vmem:[%s155 + $0xf8] sm:$0xfe] %v1800
  %1843 = vst [vmem:[%s155 + $0x100] sm:$0xfe] %v1801
  %1844 = vst [vmem:[%s155 + $0x120] sm:$0xfe] %v1802
  %1845 = vst [vmem:[%s155 + $0x128] sm:$0xfe] %v1803
  %1846 = vst [vmem:[%s155 + $0x130] sm:$0xfe] %v1804
  %s1847 = scalar_lea.vmem %s1, 24
  %v1848 = vld [vmem:[%s1847] ss:$8 sm:$0x7]
  %v1850 = vlaneseq
  %v1851 = vshrl.u32 %v1850, 7
  %v1852 = vsub.s32 0, %v1851
  %v1853 = vrot.slane %v1848, %v1852
  %v1854 = vlaneseq
  %v1855 = vshrl.u32 %v1854, 7
  %v1856 = vsub.s32 1, %v1855
  %v1857 = vrot.slane %v1848, %v1856
  %v1858 = vlaneseq
  %v1859 = vshrl.u32 %v1858, 7
  %v1860 = vsub.s32 2, %v1859
  %v1861 = vrot.slane %v1848, %v1860
  %v1865 = vld [vmem:[#allocation2] sm:$0x7f]
  %v1866 = vld [vmem:[#allocation2 + $0x8] sm:$0x7f]
  %v1867 = vld [vmem:[#allocation2 + $0x10] sm:$0x7f]
  %v1868 = vmul.f32 %v1865, %v1853
  %v1869 = vmul.f32 %v1866, %v1857
  %v1870 = vmul.f32 %v1867, %v1861
  %v1871 = vadd.f32 %v1868, 0.0
  %v1872 = vadd.f32 %v1869, 0.0
  %v1873 = vadd.f32 %v1870, 0.0
  %v1874 = vld [vmem:[%s155] sm:$0x7f]
  %v1875 = vld [vmem:[%s155 + $0x8] sm:$0x7f]
  %v1876 = vld [vmem:[%s155 + $0x10] sm:$0x7f]
  %v1877 = vmul.f32 %v1874, %v1853
  %v1878 = vmul.f32 %v1875, %v1857
  %v1879 = vmul.f32 %v1876, %v1861
  %v1880 = vadd.f32 %v1877, 0.0
  %v1881 = vadd.f32 %v1878, 0.0
  %v1882 = vadd.f32 %v1879, 0.0
  %v1883 = vld [vmem:[%s212] sm:$0x7f]
  %v1884 = vld [vmem:[%s212 + $0x8] sm:$0x7f]
  %v1885 = vld [vmem:[%s212 + $0x10] sm:$0x7f]
  %v1886 = vmul.f32 %v1883, %v1853
  %v1887 = vmul.f32 %v1884, %v1857
  %v1888 = vmul.f32 %v1885, %v1861
  %v1889 = vadd.f32 %v1886, 0.0
  %v1890 = vadd.f32 %v1887, 0.0
  %v1891 = vadd.f32 %v1888, 0.0
  %v1892 = vld [vmem:[%s222] sm:$0x7f]
  %v1893 = vld [vmem:[%s222 + $0x8] sm:$0x7f]
  %v1894 = vld [vmem:[%s222 + $0x10] sm:$0x7f]
  %v1895 = vmul.f32 %v1892, %v1853
  %v1896 = vmul.f32 %v1893, %v1857
  %v1897 = vmul.f32 %v1894, %v1861
  %v1898 = vadd.f32 %v1895, 0.0
  %v1899 = vadd.f32 %v1896, 0.0
  %v1900 = vadd.f32 %v1897, 0.0
  %v1901 = vld [vmem:[%s232] sm:$0x7f]
  %v1902 = vld [vmem:[%s232 + $0x8] sm:$0x7f]
  %v1903 = vld [vmem:[%s232 + $0x10] sm:$0x7f]
  %v1904 = vmul.f32 %v1901, %v1853
  %v1905 = vmul.f32 %v1902, %v1857
  %v1906 = vmul.f32 %v1903, %v1861
  %v1907 = vadd.f32 %v1904, 0.0
  %v1908 = vadd.f32 %v1905, 0.0
  %v1909 = vadd.f32 %v1906, 0.0
  %v1910 = vld [vmem:[%s242] sm:$0x7f]
  %v1911 = vld [vmem:[%s242 + $0x8] sm:$0x7f]
  %v1912 = vld [vmem:[%s242 + $0x10] sm:$0x7f]
  %v1913 = vmul.f32 %v1910, %v1853
  %v1914 = vmul.f32 %v1911, %v1857
  %v1915 = vmul.f32 %v1912, %v1861
  %v1916 = vadd.f32 %v1913, 0.0
  %v1917 = vadd.f32 %v1914, 0.0
  %v1918 = vadd.f32 %v1915, 0.0
  %v1919 = vld [vmem:[%s252] sm:$0x7f]
  %v1920 = vld [vmem:[%s252 + $0x8] sm:$0x7f]
  %v1921 = vld [vmem:[%s252 + $0x10] sm:$0x7f]
  %v1922 = vmul.f32 %v1919, %v1853
  %v1923 = vmul.f32 %v1920, %v1857
  %v1924 = vmul.f32 %v1921, %v1861
  %v1925 = vadd.f32 %v1922, 0.0
  %v1926 = vadd.f32 %v1923, 0.0
  %v1927 = vadd.f32 %v1924, 0.0
  %s1928 = scalar_lea.vmem %s1, 25
  %v1929 = vld [vmem:[%s1928] ss:$8 sm:$0x7]
  %v1931 = vlaneseq
  %v1932 = vshrl.u32 %v1931, 7
  %v1933 = vsub.s32 0, %v1932
  %v1934 = vrot.slane %v1929, %v1933
  %v1935 = vlaneseq
  %v1936 = vshrl.u32 %v1935, 7
  %v1937 = vsub.s32 1, %v1936
  %v1938 = vrot.slane %v1929, %v1937
  %v1939 = vlaneseq
  %v1940 = vshrl.u32 %v1939, 7
  %v1941 = vsub.s32 2, %v1940
  %v1942 = vrot.slane %v1929, %v1941
  %v1946 = vld [vmem:[#allocation2] sm:$0xfe]
  %v1947 = vld [vmem:[#allocation2 + $0x8] sm:$0xfe]
  %v1948 = vld [vmem:[#allocation2 + $0x10] sm:$0xfe]
  %v1949 = vmul.f32 %v1946, %v1934
  %v1950 = vmul.f32 %v1947, %v1938
  %v1951 = vmul.f32 %v1948, %v1942
  %v1955 = vrot.slane %v1949, 1
  %v1956 = vrot.slane %v1950, 1
  %v1957 = vrot.slane %v1951, 1
  %v1961 = vadd.f32 %v1871, %v1955
  %v1962 = vadd.f32 %v1872, %v1956
  %v1963 = vadd.f32 %v1873, %v1957
  %v1964 = vld [vmem:[%s155] sm:$0xfe]
  %v1965 = vld [vmem:[%s155 + $0x8] sm:$0xfe]
  %v1966 = vld [vmem:[%s155 + $0x10] sm:$0xfe]
  %v1967 = vmul.f32 %v1964, %v1934
  %v1968 = vmul.f32 %v1965, %v1938
  %v1969 = vmul.f32 %v1966, %v1942
  %v1973 = vrot.slane %v1967, 1
  %v1974 = vrot.slane %v1968, 1
  %v1975 = vrot.slane %v1969, 1
  %v1979 = vadd.f32 %v1880, %v1973
  %v1980 = vadd.f32 %v1881, %v1974
  %v1981 = vadd.f32 %v1882, %v1975
  %v1982 = vld [vmem:[%s212] sm:$0xfe]
  %v1983 = vld [vmem:[%s212 + $0x8] sm:$0xfe]
  %v1984 = vld [vmem:[%s212 + $0x10] sm:$0xfe]
  %v1985 = vmul.f32 %v1982, %v1934
  %v1986 = vmul.f32 %v1983, %v1938
  %v1987 = vmul.f32 %v1984, %v1942
  %v1991 = vrot.slane %v1985, 1
  %v1992 = vrot.slane %v1986, 1
  %v1993 = vrot.slane %v1987, 1
  %v1997 = vadd.f32 %v1889, %v1991
  %v1998 = vadd.f32 %v1890, %v1992
  %v1999 = vadd.f32 %v1891, %v1993
  %v2000 = vld [vmem:[%s222] sm:$0xfe]
  %v2001 = vld [vmem:[%s222 + $0x8] sm:$0xfe]
  %v2002 = vld [vmem:[%s222 + $0x10] sm:$0xfe]
  %v2003 = vmul.f32 %v2000, %v1934
  %v2004 = vmul.f32 %v2001, %v1938
  %v2005 = vmul.f32 %v2002, %v1942
  %v2009 = vrot.slane %v2003, 1
  %v2010 = vrot.slane %v2004, 1
  %v2011 = vrot.slane %v2005, 1
  %v2015 = vadd.f32 %v1898, %v2009
  %v2016 = vadd.f32 %v1899, %v2010
  %v2017 = vadd.f32 %v1900, %v2011
  %v2018 = vld [vmem:[%s232] sm:$0xfe]
  %v2019 = vld [vmem:[%s232 + $0x8] sm:$0xfe]
  %v2020 = vld [vmem:[%s232 + $0x10] sm:$0xfe]
  %v2021 = vmul.f32 %v2018, %v1934
  %v2022 = vmul.f32 %v2019, %v1938
  %v2023 = vmul.f32 %v2020, %v1942
  %v2027 = vrot.slane %v2021, 1
  %v2028 = vrot.slane %v2022, 1
  %v2029 = vrot.slane %v2023, 1
  %v2033 = vadd.f32 %v1907, %v2027
  %v2034 = vadd.f32 %v1908, %v2028
  %v2035 = vadd.f32 %v1909, %v2029
  %v2036 = vld [vmem:[%s242] sm:$0xfe]
  %v2037 = vld [vmem:[%s242 + $0x8] sm:$0xfe]
  %v2038 = vld [vmem:[%s242 + $0x10] sm:$0xfe]
  %v2039 = vmul.f32 %v2036, %v1934
  %v2040 = vmul.f32 %v2037, %v1938
  %v2041 = vmul.f32 %v2038, %v1942
  %v2045 = vrot.slane %v2039, 1
  %v2046 = vrot.slane %v2040, 1
  %v2047 = vrot.slane %v2041, 1
  %v2051 = vadd.f32 %v1916, %v2045
  %v2052 = vadd.f32 %v1917, %v2046
  %v2053 = vadd.f32 %v1918, %v2047
  %v2054 = vld [vmem:[%s252] sm:$0xfe]
  %v2055 = vld [vmem:[%s252 + $0x8] sm:$0xfe]
  %v2056 = vld [vmem:[%s252 + $0x10] sm:$0xfe]
  %v2057 = vmul.f32 %v2054, %v1934
  %v2058 = vmul.f32 %v2055, %v1938
  %v2059 = vmul.f32 %v2056, %v1942
  %v2063 = vrot.slane %v2057, 1
  %v2064 = vrot.slane %v2058, 1
  %v2065 = vrot.slane %v2059, 1
  %v2069 = vadd.f32 %v1925, %v2063
  %v2070 = vadd.f32 %v1926, %v2064
  %v2071 = vadd.f32 %v1927, %v2065
  %s2072 = scalar_lea.vmem %s1, 26
  %v2073 = vld [vmem:[%s2072] ss:$8 sm:$0x7]
  %v2075 = vlaneseq
  %v2076 = vshrl.u32 %v2075, 7
  %v2077 = vsub.s32 0, %v2076
  %v2078 = vrot.slane %v2073, %v2077
  %v2079 = vlaneseq
  %v2080 = vshrl.u32 %v2079, 7
  %v2081 = vsub.s32 1, %v2080
  %v2082 = vrot.slane %v2073, %v2081
  %v2083 = vlaneseq
  %v2084 = vshrl.u32 %v2083, 7
  %v2085 = vsub.s32 2, %v2084
  %v2086 = vrot.slane %v2073, %v2085
  %v2090 = vld [vmem:[#allocation2] sm:$0xfc]
  %v2091 = vld [vmem:[#allocation2 + $0x8] sm:$0xfc]
  %v2092 = vld [vmem:[#allocation2 + $0x10] sm:$0xfc]
  %v2093 = vld [vmem:[#allocation2 + $0x18] sm:$0x1]
  %v2094 = vld [vmem:[#allocation2 + $0x20] sm:$0x1]
  %v2095 = vld [vmem:[#allocation2 + $0x28] sm:$0x1]
  %v2096 = vmul.f32 %v2090, %v2078
  %v2097 = vmul.f32 %v2091, %v2082
  %v2098 = vmul.f32 %v2092, %v2086
  %v2099 = vmul.f32 %v2093, %v2078
  %v2100 = vmul.f32 %v2094, %v2082
  %v2101 = vmul.f32 %v2095, %v2086
  %v2108 = vrot.slane %v2096, 2
  %v2109 = vrot.slane %v2099, 2
  %v2110 = vsel %vm442, %v2108, %v2109
  %v2111 = vrot.slane %v2097, 2
  %v2112 = vrot.slane %v2100, 2
  %v2113 = vsel %vm442, %v2111, %v2112
  %v2114 = vrot.slane %v2098, 2
  %v2115 = vrot.slane %v2101, 2
  %v2116 = vsel %vm442, %v2114, %v2115
  %v2120 = vadd.f32 %v1961, %v2110
  %v2121 = vadd.f32 %v1962, %v2113
  %v2122 = vadd.f32 %v1963, %v2116
  %v2123 = vld [vmem:[%s155] sm:$0xfc]
  %v2124 = vld [vmem:[%s155 + $0x8] sm:$0xfc]
  %v2125 = vld [vmem:[%s155 + $0x10] sm:$0xfc]
  %v2126 = vld [vmem:[%s155 + $0x18] sm:$0x1]
  %v2127 = vld [vmem:[%s155 + $0x20] sm:$0x1]
  %v2128 = vld [vmem:[%s155 + $0x28] sm:$0x1]
  %v2129 = vmul.f32 %v2123, %v2078
  %v2130 = vmul.f32 %v2124, %v2082
  %v2131 = vmul.f32 %v2125, %v2086
  %v2132 = vmul.f32 %v2126, %v2078
  %v2133 = vmul.f32 %v2127, %v2082
  %v2134 = vmul.f32 %v2128, %v2086
  %v2141 = vrot.slane %v2129, 2
  %v2142 = vrot.slane %v2132, 2
  %v2143 = vsel %vm442, %v2141, %v2142
  %v2144 = vrot.slane %v2130, 2
  %v2145 = vrot.slane %v2133, 2
  %v2146 = vsel %vm442, %v2144, %v2145
  %v2147 = vrot.slane %v2131, 2
  %v2148 = vrot.slane %v2134, 2
  %v2149 = vsel %vm442, %v2147, %v2148
  %v2153 = vadd.f32 %v1979, %v2143
  %v2154 = vadd.f32 %v1980, %v2146
  %v2155 = vadd.f32 %v1981, %v2149
  %v2156 = vld [vmem:[%s212] sm:$0xfc]
  %v2157 = vld [vmem:[%s212 + $0x8] sm:$0xfc]
  %v2158 = vld [vmem:[%s212 + $0x10] sm:$0xfc]
  %v2159 = vld [vmem:[%s212 + $0x18] sm:$0x1]
  %v2160 = vld [vmem:[%s212 + $0x20] sm:$0x1]
  %v2161 = vld [vmem:[%s212 + $0x28] sm:$0x1]
  %v2162 = vmul.f32 %v2156, %v2078
  %v2163 = vmul.f32 %v2157, %v2082
  %v2164 = vmul.f32 %v2158, %v2086
  %v2165 = vmul.f32 %v2159, %v2078
  %v2166 = vmul.f32 %v2160, %v2082
  %v2167 = vmul.f32 %v2161, %v2086
  %v2174 = vrot.slane %v2162, 2
  %v2175 = vrot.slane %v2165, 2
  %v2176 = vsel %vm442, %v2174, %v2175
  %v2177 = vrot.slane %v2163, 2
  %v2178 = vrot.slane %v2166, 2
  %v2179 = vsel %vm442, %v2177, %v2178
  %v2180 = vrot.slane %v2164, 2
  %v2181 = vrot.slane %v2167, 2
  %v2182 = vsel %vm442, %v2180, %v2181
  %v2186 = vadd.f32 %v1997, %v2176
  %v2187 = vadd.f32 %v1998, %v2179
  %v2188 = vadd.f32 %v1999, %v2182
  %v2189 = vld [vmem:[%s222] sm:$0xfc]
  %v2190 = vld [vmem:[%s222 + $0x8] sm:$0xfc]
  %v2191 = vld [vmem:[%s222 + $0x10] sm:$0xfc]
  %v2192 = vld [vmem:[%s222 + $0x18] sm:$0x1]
  %v2193 = vld [vmem:[%s222 + $0x20] sm:$0x1]
  %v2194 = vld [vmem:[%s222 + $0x28] sm:$0x1]
  %v2195 = vmul.f32 %v2189, %v2078
  %v2196 = vmul.f32 %v2190, %v2082
  %v2197 = vmul.f32 %v2191, %v2086
  %v2198 = vmul.f32 %v2192, %v2078
  %v2199 = vmul.f32 %v2193, %v2082
  %v2200 = vmul.f32 %v2194, %v2086
  %v2207 = vrot.slane %v2195, 2
  %v2208 = vrot.slane %v2198, 2
  %v2209 = vsel %vm442, %v2207, %v2208
  %v2210 = vrot.slane %v2196, 2
  %v2211 = vrot.slane %v2199, 2
  %v2212 = vsel %vm442, %v2210, %v2211
  %v2213 = vrot.slane %v2197, 2
  %v2214 = vrot.slane %v2200, 2
  %v2215 = vsel %vm442, %v2213, %v2214
  %v2219 = vadd.f32 %v2015, %v2209
  %v2220 = vadd.f32 %v2016, %v2212
  %v2221 = vadd.f32 %v2017, %v2215
  %v2222 = vld [vmem:[%s232] sm:$0xfc]
  %v2223 = vld [vmem:[%s232 + $0x8] sm:$0xfc]
  %v2224 = vld [vmem:[%s232 + $0x10] sm:$0xfc]
  %v2225 = vld [vmem:[%s232 + $0x18] sm:$0x1]
  %v2226 = vld [vmem:[%s232 + $0x20] sm:$0x1]
  %v2227 = vld [vmem:[%s232 + $0x28] sm:$0x1]
  %v2228 = vmul.f32 %v2222, %v2078
  %v2229 = vmul.f32 %v2223, %v2082
  %v2230 = vmul.f32 %v2224, %v2086
  %v2231 = vmul.f32 %v2225, %v2078
  %v2232 = vmul.f32 %v2226, %v2082
  %v2233 = vmul.f32 %v2227, %v2086
  %v2240 = vrot.slane %v2228, 2
  %v2241 = vrot.slane %v2231, 2
  %v2242 = vsel %vm442, %v2240, %v2241
  %v2243 = vrot.slane %v2229, 2
  %v2244 = vrot.slane %v2232, 2
  %v2245 = vsel %vm442, %v2243, %v2244
  %v2246 = vrot.slane %v2230, 2
  %v2247 = vrot.slane %v2233, 2
  %v2248 = vsel %vm442, %v2246, %v2247
  %v2252 = vadd.f32 %v2033, %v2242
  %v2253 = vadd.f32 %v2034, %v2245
  %v2254 = vadd.f32 %v2035, %v2248
  %v2255 = vld [vmem:[%s242] sm:$0xfc]
  %v2256 = vld [vmem:[%s242 + $0x8] sm:$0xfc]
  %v2257 = vld [vmem:[%s242 + $0x10] sm:$0xfc]
  %v2258 = vld [vmem:[%s242 + $0x18] sm:$0x1]
  %v2259 = vld [vmem:[%s242 + $0x20] sm:$0x1]
  %v2260 = vld [vmem:[%s242 + $0x28] sm:$0x1]
  %v2261 = vmul.f32 %v2255, %v2078
  %v2262 = vmul.f32 %v2256, %v2082
  %v2263 = vmul.f32 %v2257, %v2086
  %v2264 = vmul.f32 %v2258, %v2078
  %v2265 = vmul.f32 %v2259, %v2082
  %v2266 = vmul.f32 %v2260, %v2086
  %v2273 = vrot.slane %v2261, 2
  %v2274 = vrot.slane %v2264, 2
  %v2275 = vsel %vm442, %v2273, %v2274
  %v2276 = vrot.slane %v2262, 2
  %v2277 = vrot.slane %v2265, 2
  %v2278 = vsel %vm442, %v2276, %v2277
  %v2279 = vrot.slane %v2263, 2
  %v2280 = vrot.slane %v2266, 2
  %v2281 = vsel %vm442, %v2279, %v2280
  %v2285 = vadd.f32 %v2051, %v2275
  %v2286 = vadd.f32 %v2052, %v2278
  %v2287 = vadd.f32 %v2053, %v2281
  %v2288 = vld [vmem:[%s252] sm:$0xfc]
  %v2289 = vld [vmem:[%s252 + $0x8] sm:$0xfc]
  %v2290 = vld [vmem:[%s252 + $0x10] sm:$0xfc]
  %v2291 = vld [vmem:[%s252 + $0x18] sm:$0x1]
  %v2292 = vld [vmem:[%s252 + $0x20] sm:$0x1]
  %v2293 = vld [vmem:[%s252 + $0x28] sm:$0x1]
  %v2294 = vmul.f32 %v2288, %v2078
  %v2295 = vmul.f32 %v2289, %v2082
  %v2296 = vmul.f32 %v2290, %v2086
  %v2297 = vmul.f32 %v2291, %v2078
  %v2298 = vmul.f32 %v2292, %v2082
  %v2299 = vmul.f32 %v2293, %v2086
  %v2306 = vrot.slane %v2294, 2
  %v2307 = vrot.slane %v2297, 2
  %v2308 = vsel %vm442, %v2306, %v2307
  %v2309 = vrot.slane %v2295, 2
  %v2310 = vrot.slane %v2298, 2
  %v2311 = vsel %vm442, %v2309, %v2310
  %v2312 = vrot.slane %v2296, 2
  %v2313 = vrot.slane %v2299, 2
  %v2314 = vsel %vm442, %v2312, %v2313
  %v2318 = vadd.f32 %v2069, %v2308
  %v2319 = vadd.f32 %v2070, %v2311
  %v2320 = vadd.f32 %v2071, %v2314
  %s2321 = scalar_lea.vmem %s1, 27
  %v2322 = vld [vmem:[%s2321] ss:$8 sm:$0x7]
  %v2324 = vlaneseq
  %v2325 = vshrl.u32 %v2324, 7
  %v2326 = vsub.s32 0, %v2325
  %v2327 = vrot.slane %v2322, %v2326
  %v2328 = vlaneseq
  %v2329 = vshrl.u32 %v2328, 7
  %v2330 = vsub.s32 1, %v2329
  %v2331 = vrot.slane %v2322, %v2330
  %v2332 = vlaneseq
  %v2333 = vshrl.u32 %v2332, 7
  %v2334 = vsub.s32 2, %v2333
  %v2335 = vrot.slane %v2322, %v2334
  %v2339 = vmul.f32 %v1874, %v2327
  %v2340 = vmul.f32 %v1875, %v2331
  %v2341 = vmul.f32 %v1876, %v2335
  %v2342 = vadd.f32 %v2120, %v2339
  %v2343 = vadd.f32 %v2121, %v2340
  %v2344 = vadd.f32 %v2122, %v2341
  %v2345 = vmul.f32 %v1883, %v2327
  %v2346 = vmul.f32 %v1884, %v2331
  %v2347 = vmul.f32 %v1885, %v2335
  %v2348 = vadd.f32 %v2153, %v2345
  %v2349 = vadd.f32 %v2154, %v2346
  %v2350 = vadd.f32 %v2155, %v2347
  %v2351 = vmul.f32 %v1892, %v2327
  %v2352 = vmul.f32 %v1893, %v2331
  %v2353 = vmul.f32 %v1894, %v2335
  %v2354 = vadd.f32 %v2186, %v2351
  %v2355 = vadd.f32 %v2187, %v2352
  %v2356 = vadd.f32 %v2188, %v2353
  %v2357 = vmul.f32 %v1901, %v2327
  %v2358 = vmul.f32 %v1902, %v2331
  %v2359 = vmul.f32 %v1903, %v2335
  %v2360 = vadd.f32 %v2219, %v2357
  %v2361 = vadd.f32 %v2220, %v2358
  %v2362 = vadd.f32 %v2221, %v2359
  %v2363 = vmul.f32 %v1910, %v2327
  %v2364 = vmul.f32 %v1911, %v2331
  %v2365 = vmul.f32 %v1912, %v2335
  %v2366 = vadd.f32 %v2252, %v2363
  %v2367 = vadd.f32 %v2253, %v2364
  %v2368 = vadd.f32 %v2254, %v2365
  %v2369 = vmul.f32 %v1919, %v2327
  %v2370 = vmul.f32 %v1920, %v2331
  %v2371 = vmul.f32 %v1921, %v2335
  %v2372 = vadd.f32 %v2285, %v2369
  %v2373 = vadd.f32 %v2286, %v2370
  %v2374 = vadd.f32 %v2287, %v2371
  %v2375 = vld [vmem:[%s710] sm:$0x7f]
  %v2376 = vld [vmem:[%s710 + $0x8] sm:$0x7f]
  %v2377 = vld [vmem:[%s710 + $0x10] sm:$0x7f]
  %v2378 = vmul.f32 %v2375, %v2327
  %v2379 = vmul.f32 %v2376, %v2331
  %v2380 = vmul.f32 %v2377, %v2335
  %v2381 = vadd.f32 %v2318, %v2378
  %v2382 = vadd.f32 %v2319, %v2379
  %v2383 = vadd.f32 %v2320, %v2380
  %s2384 = scalar_lea.vmem %s1, 28
  %v2385 = vld [vmem:[%s2384] ss:$8 sm:$0x7]
  %v2387 = vlaneseq
  %v2388 = vshrl.u32 %v2387, 7
  %v2389 = vsub.s32 0, %v2388
  %v2390 = vrot.slane %v2385, %v2389
  %v2391 = vlaneseq
  %v2392 = vshrl.u32 %v2391, 7
  %v2393 = vsub.s32 1, %v2392
  %v2394 = vrot.slane %v2385, %v2393
  %v2395 = vlaneseq
  %v2396 = vshrl.u32 %v2395, 7
  %v2397 = vsub.s32 2, %v2396
  %v2398 = vrot.slane %v2385, %v2397
  %v2402 = vmul.f32 %v1964, %v2390
  %v2403 = vmul.f32 %v1965, %v2394
  %v2404 = vmul.f32 %v1966, %v2398
  %v2408 = vrot.slane %v2402, 1
  %v2409 = vrot.slane %v2403, 1
  %v2410 = vrot.slane %v2404, 1
  %v2414 = vadd.f32 %v2342, %v2408
  %v2415 = vadd.f32 %v2343, %v2409
  %v2416 = vadd.f32 %v2344, %v2410
  %v2417 = vmul.f32 %v1982, %v2390
  %v2418 = vmul.f32 %v1983, %v2394
  %v2419 = vmul.f32 %v1984, %v2398
  %v2423 = vrot.slane %v2417, 1
  %v2424 = vrot.slane %v2418, 1
  %v2425 = vrot.slane %v2419, 1
  %v2429 = vadd.f32 %v2348, %v2423
  %v2430 = vadd.f32 %v2349, %v2424
  %v2431 = vadd.f32 %v2350, %v2425
  %v2432 = vmul.f32 %v2000, %v2390
  %v2433 = vmul.f32 %v2001, %v2394
  %v2434 = vmul.f32 %v2002, %v2398
  %v2438 = vrot.slane %v2432, 1
  %v2439 = vrot.slane %v2433, 1
  %v2440 = vrot.slane %v2434, 1
  %v2444 = vadd.f32 %v2354, %v2438
  %v2445 = vadd.f32 %v2355, %v2439
  %v2446 = vadd.f32 %v2356, %v2440
  %v2447 = vmul.f32 %v2018, %v2390
  %v2448 = vmul.f32 %v2019, %v2394
  %v2449 = vmul.f32 %v2020, %v2398
  %v2453 = vrot.slane %v2447, 1
  %v2454 = vrot.slane %v2448, 1
  %v2455 = vrot.slane %v2449, 1
  %v2459 = vadd.f32 %v2360, %v2453
  %v2460 = vadd.f32 %v2361, %v2454
  %v2461 = vadd.f32 %v2362, %v2455
  %v2462 = vmul.f32 %v2036, %v2390
  %v2463 = vmul.f32 %v2037, %v2394
  %v2464 = vmul.f32 %v2038, %v2398
  %v2468 = vrot.slane %v2462, 1
  %v2469 = vrot.slane %v2463, 1
  %v2470 = vrot.slane %v2464, 1
  %v2474 = vadd.f32 %v2366, %v2468
  %v2475 = vadd.f32 %v2367, %v2469
  %v2476 = vadd.f32 %v2368, %v2470
  %v2477 = vmul.f32 %v2054, %v2390
  %v2478 = vmul.f32 %v2055, %v2394
  %v2479 = vmul.f32 %v2056, %v2398
  %v2483 = vrot.slane %v2477, 1
  %v2484 = vrot.slane %v2478, 1
  %v2485 = vrot.slane %v2479, 1
  %v2489 = vadd.f32 %v2372, %v2483
  %v2490 = vadd.f32 %v2373, %v2484
  %v2491 = vadd.f32 %v2374, %v2485
  %v2492 = vld [vmem:[%s710] sm:$0xfe]
  %v2493 = vld [vmem:[%s710 + $0x8] sm:$0xfe]
  %v2494 = vld [vmem:[%s710 + $0x10] sm:$0xfe]
  %v2495 = vmul.f32 %v2492, %v2390
  %v2496 = vmul.f32 %v2493, %v2394
  %v2497 = vmul.f32 %v2494, %v2398
  %v2501 = vrot.slane %v2495, 1
  %v2502 = vrot.slane %v2496, 1
  %v2503 = vrot.slane %v2497, 1
  %v2507 = vadd.f32 %v2381, %v2501
  %v2508 = vadd.f32 %v2382, %v2502
  %v2509 = vadd.f32 %v2383, %v2503
  %s2510 = scalar_lea.vmem %s1, 29
  %v2511 = vld [vmem:[%s2510] ss:$8 sm:$0x7]
  %v2513 = vlaneseq
  %v2514 = vshrl.u32 %v2513, 7
  %v2515 = vsub.s32 0, %v2514
  %v2516 = vrot.slane %v2511, %v2515
  %v2517 = vlaneseq
  %v2518 = vshrl.u32 %v2517, 7
  %v2519 = vsub.s32 1, %v2518
  %v2520 = vrot.slane %v2511, %v2519
  %v2521 = vlaneseq
  %v2522 = vshrl.u32 %v2521, 7
  %v2523 = vsub.s32 2, %v2522
  %v2524 = vrot.slane %v2511, %v2523
  %v2528 = vmul.f32 %v2123, %v2516
  %v2529 = vmul.f32 %v2124, %v2520
  %v2530 = vmul.f32 %v2125, %v2524
  %v2531 = vmul.f32 %v2126, %v2516
  %v2532 = vmul.f32 %v2127, %v2520
  %v2533 = vmul.f32 %v2128, %v2524
  %v2540 = vrot.slane %v2528, 2
  %v2541 = vrot.slane %v2531, 2
  %v2542 = vsel %vm442, %v2540, %v2541
  %v2543 = vrot.slane %v2529, 2
  %v2544 = vrot.slane %v2532, 2
  %v2545 = vsel %vm442, %v2543, %v2544
  %v2546 = vrot.slane %v2530, 2
  %v2547 = vrot.slane %v2533, 2
  %v2548 = vsel %vm442, %v2546, %v2547
  %v2552 = vadd.f32 %v2414, %v2542
  %v2553 = vadd.f32 %v2415, %v2545
  %v2554 = vadd.f32 %v2416, %v2548
  %v2555 = vmul.f32 %v2156, %v2516
  %v2556 = vmul.f32 %v2157, %v2520
  %v2557 = vmul.f32 %v2158, %v2524
  %v2558 = vmul.f32 %v2159, %v2516
  %v2559 = vmul.f32 %v2160, %v2520
  %v2560 = vmul.f32 %v2161, %v2524
  %v2567 = vrot.slane %v2555, 2
  %v2568 = vrot.slane %v2558, 2
  %v2569 = vsel %vm442, %v2567, %v2568
  %v2570 = vrot.slane %v2556, 2
  %v2571 = vrot.slane %v2559, 2
  %v2572 = vsel %vm442, %v2570, %v2571
  %v2573 = vrot.slane %v2557, 2
  %v2574 = vrot.slane %v2560, 2
  %v2575 = vsel %vm442, %v2573, %v2574
  %v2579 = vadd.f32 %v2429, %v2569
  %v2580 = vadd.f32 %v2430, %v2572
  %v2581 = vadd.f32 %v2431, %v2575
  %v2582 = vmul.f32 %v2189, %v2516
  %v2583 = vmul.f32 %v2190, %v2520
  %v2584 = vmul.f32 %v2191, %v2524
  %v2585 = vmul.f32 %v2192, %v2516
  %v2586 = vmul.f32 %v2193, %v2520
  %v2587 = vmul.f32 %v2194, %v2524
  %v2594 = vrot.slane %v2582, 2
  %v2595 = vrot.slane %v2585, 2
  %v2596 = vsel %vm442, %v2594, %v2595
  %v2597 = vrot.slane %v2583, 2
  %v2598 = vrot.slane %v2586, 2
  %v2599 = vsel %vm442, %v2597, %v2598
  %v2600 = vrot.slane %v2584, 2
  %v2601 = vrot.slane %v2587, 2
  %v2602 = vsel %vm442, %v2600, %v2601
  %v2606 = vadd.f32 %v2444, %v2596
  %v2607 = vadd.f32 %v2445, %v2599
  %v2608 = vadd.f32 %v2446, %v2602
  %v2609 = vmul.f32 %v2222, %v2516
  %v2610 = vmul.f32 %v2223, %v2520
  %v2611 = vmul.f32 %v2224, %v2524
  %v2612 = vmul.f32 %v2225, %v2516
  %v2613 = vmul.f32 %v2226, %v2520
  %v2614 = vmul.f32 %v2227, %v2524
  %v2621 = vrot.slane %v2609, 2
  %v2622 = vrot.slane %v2612, 2
  %v2623 = vsel %vm442, %v2621, %v2622
  %v2624 = vrot.slane %v2610, 2
  %v2625 = vrot.slane %v2613, 2
  %v2626 = vsel %vm442, %v2624, %v2625
  %v2627 = vrot.slane %v2611, 2
  %v2628 = vrot.slane %v2614, 2
  %v2629 = vsel %vm442, %v2627, %v2628
  %v2633 = vadd.f32 %v2459, %v2623
  %v2634 = vadd.f32 %v2460, %v2626
  %v2635 = vadd.f32 %v2461, %v2629
  %v2636 = vmul.f32 %v2255, %v2516
  %v2637 = vmul.f32 %v2256, %v2520
  %v2638 = vmul.f32 %v2257, %v2524
  %v2639 = vmul.f32 %v2258, %v2516
  %v2640 = vmul.f32 %v2259, %v2520
  %v2641 = vmul.f32 %v2260, %v2524
  %v2648 = vrot.slane %v2636, 2
  %v2649 = vrot.slane %v2639, 2
  %v2650 = vsel %vm442, %v2648, %v2649
  %v2651 = vrot.slane %v2637, 2
  %v2652 = vrot.slane %v2640, 2
  %v2653 = vsel %vm442, %v2651, %v2652
  %v2654 = vrot.slane %v2638, 2
  %v2655 = vrot.slane %v2641, 2
  %v2656 = vsel %vm442, %v2654, %v2655
  %v2660 = vadd.f32 %v2474, %v2650
  %v2661 = vadd.f32 %v2475, %v2653
  %v2662 = vadd.f32 %v2476, %v2656
  %v2663 = vmul.f32 %v2288, %v2516
  %v2664 = vmul.f32 %v2289, %v2520
  %v2665 = vmul.f32 %v2290, %v2524
  %v2666 = vmul.f32 %v2291, %v2516
  %v2667 = vmul.f32 %v2292, %v2520
  %v2668 = vmul.f32 %v2293, %v2524
  %v2675 = vrot.slane %v2663, 2
  %v2676 = vrot.slane %v2666, 2
  %v2677 = vsel %vm442, %v2675, %v2676
  %v2678 = vrot.slane %v2664, 2
  %v2679 = vrot.slane %v2667, 2
  %v2680 = vsel %vm442, %v2678, %v2679
  %v2681 = vrot.slane %v2665, 2
  %v2682 = vrot.slane %v2668, 2
  %v2683 = vsel %vm442, %v2681, %v2682
  %v2687 = vadd.f32 %v2489, %v2677
  %v2688 = vadd.f32 %v2490, %v2680
  %v2689 = vadd.f32 %v2491, %v2683
  %v2690 = vld [vmem:[%s710] sm:$0xfc]
  %v2691 = vld [vmem:[%s710 + $0x8] sm:$0xfc]
  %v2692 = vld [vmem:[%s710 + $0x10] sm:$0xfc]
  %v2693 = vld [vmem:[%s710 + $0x18] sm:$0x1]
  %v2694 = vld [vmem:[%s710 + $0x20] sm:$0x1]
  %v2695 = vld [vmem:[%s710 + $0x28] sm:$0x1]
  %v2696 = vmul.f32 %v2690, %v2516
  %v2697 = vmul.f32 %v2691, %v2520
  %v2698 = vmul.f32 %v2692, %v2524
  %v2699 = vmul.f32 %v2693, %v2516
  %v2700 = vmul.f32 %v2694, %v2520
  %v2701 = vmul.f32 %v2695, %v2524
  %v2708 = vrot.slane %v2696, 2
  %v2709 = vrot.slane %v2699, 2
  %v2710 = vsel %vm442, %v2708, %v2709
  %v2711 = vrot.slane %v2697, 2
  %v2712 = vrot.slane %v2700, 2
  %v2713 = vsel %vm442, %v2711, %v2712
  %v2714 = vrot.slane %v2698, 2
  %v2715 = vrot.slane %v2701, 2
  %v2716 = vsel %vm442, %v2714, %v2715
  %v2720 = vadd.f32 %v2507, %v2710
  %v2721 = vadd.f32 %v2508, %v2713
  %v2722 = vadd.f32 %v2509, %v2716
  %s2723 = scalar_lea.vmem %s1, 30
  %v2724 = vld [vmem:[%s2723] ss:$8 sm:$0x7]
  %v2726 = vlaneseq
  %v2727 = vshrl.u32 %v2726, 7
  %v2728 = vsub.s32 0, %v2727
  %v2729 = vrot.slane %v2724, %v2728
  %v2730 = vlaneseq
  %v2731 = vshrl.u32 %v2730, 7
  %v2732 = vsub.s32 1, %v2731
  %v2733 = vrot.slane %v2724, %v2732
  %v2734 = vlaneseq
  %v2735 = vshrl.u32 %v2734, 7
  %v2736 = vsub.s32 2, %v2735
  %v2737 = vrot.slane %v2724, %v2736
  %v2741 = vmul.f32 %v1883, %v2729
  %v2742 = vmul.f32 %v1884, %v2733
  %v2743 = vmul.f32 %v1885, %v2737
  %v2744 = vadd.f32 %v2552, %v2741
  %v2745 = vadd.f32 %v2553, %v2742
  %v2746 = vadd.f32 %v2554, %v2743
  %v2747 = vmul.f32 %v1892, %v2729
  %v2748 = vmul.f32 %v1893, %v2733
  %v2749 = vmul.f32 %v1894, %v2737
  %v2750 = vadd.f32 %v2579, %v2747
  %v2751 = vadd.f32 %v2580, %v2748
  %v2752 = vadd.f32 %v2581, %v2749
  %v2753 = vmul.f32 %v1901, %v2729
  %v2754 = vmul.f32 %v1902, %v2733
  %v2755 = vmul.f32 %v1903, %v2737
  %v2756 = vadd.f32 %v2606, %v2753
  %v2757 = vadd.f32 %v2607, %v2754
  %v2758 = vadd.f32 %v2608, %v2755
  %v2759 = vmul.f32 %v1910, %v2729
  %v2760 = vmul.f32 %v1911, %v2733
  %v2761 = vmul.f32 %v1912, %v2737
  %v2762 = vadd.f32 %v2633, %v2759
  %v2763 = vadd.f32 %v2634, %v2760
  %v2764 = vadd.f32 %v2635, %v2761
  %v2765 = vmul.f32 %v1919, %v2729
  %v2766 = vmul.f32 %v1920, %v2733
  %v2767 = vmul.f32 %v1921, %v2737
  %v2768 = vadd.f32 %v2660, %v2765
  %v2769 = vadd.f32 %v2661, %v2766
  %v2770 = vadd.f32 %v2662, %v2767
  %v2771 = vmul.f32 %v2375, %v2729
  %v2772 = vmul.f32 %v2376, %v2733
  %v2773 = vmul.f32 %v2377, %v2737
  %v2774 = vadd.f32 %v2687, %v2771
  %v2775 = vadd.f32 %v2688, %v2772
  %v2776 = vadd.f32 %v2689, %v2773
  %v2777 = vld [vmem:[%s1113] sm:$0x7f]
  %v2778 = vld [vmem:[%s1113 + $0x8] sm:$0x7f]
  %v2779 = vld [vmem:[%s1113 + $0x10] sm:$0x7f]
  %v2780 = vmul.f32 %v2777, %v2729
  %v2781 = vmul.f32 %v2778, %v2733
  %v2782 = vmul.f32 %v2779, %v2737
  %v2783 = vadd.f32 %v2720, %v2780
  %v2784 = vadd.f32 %v2721, %v2781
  %v2785 = vadd.f32 %v2722, %v2782
  %s2786 = scalar_lea.vmem %s1, 31
  %v2787 = vld [vmem:[%s2786] ss:$8 sm:$0x7]
  %v2789 = vlaneseq
  %v2790 = vshrl.u32 %v2789, 7
  %v2791 = vsub.s32 0, %v2790
  %v2792 = vrot.slane %v2787, %v2791
  %v2793 = vlaneseq
  %v2794 = vshrl.u32 %v2793, 7
  %v2795 = vsub.s32 1, %v2794
  %v2796 = vrot.slane %v2787, %v2795
  %v2797 = vlaneseq
  %v2798 = vshrl.u32 %v2797, 7
  %v2799 = vsub.s32 2, %v2798
  %v2800 = vrot.slane %v2787, %v2799
  %v2804 = vmul.f32 %v1982, %v2792
  %v2805 = vmul.f32 %v1983, %v2796
  %v2806 = vmul.f32 %v1984, %v2800
  %v2810 = vrot.slane %v2804, 1
  %v2811 = vrot.slane %v2805, 1
  %v2812 = vrot.slane %v2806, 1
  %v2816 = vadd.f32 %v2744, %v2810
  %v2817 = vadd.f32 %v2745, %v2811
  %v2818 = vadd.f32 %v2746, %v2812
  %v2819 = vmul.f32 %v2000, %v2792
  %v2820 = vmul.f32 %v2001, %v2796
  %v2821 = vmul.f32 %v2002, %v2800
  %v2825 = vrot.slane %v2819, 1
  %v2826 = vrot.slane %v2820, 1
  %v2827 = vrot.slane %v2821, 1
  %v2831 = vadd.f32 %v2750, %v2825
  %v2832 = vadd.f32 %v2751, %v2826
  %v2833 = vadd.f32 %v2752, %v2827
  %v2834 = vmul.f32 %v2018, %v2792
  %v2835 = vmul.f32 %v2019, %v2796
  %v2836 = vmul.f32 %v2020, %v2800
  %v2840 = vrot.slane %v2834, 1
  %v2841 = vrot.slane %v2835, 1
  %v2842 = vrot.slane %v2836, 1
  %v2846 = vadd.f32 %v2756, %v2840
  %v2847 = vadd.f32 %v2757, %v2841
  %v2848 = vadd.f32 %v2758, %v2842
  %v2849 = vmul.f32 %v2036, %v2792
  %v2850 = vmul.f32 %v2037, %v2796
  %v2851 = vmul.f32 %v2038, %v2800
  %v2855 = vrot.slane %v2849, 1
  %v2856 = vrot.slane %v2850, 1
  %v2857 = vrot.slane %v2851, 1
  %v2861 = vadd.f32 %v2762, %v2855
  %v2862 = vadd.f32 %v2763, %v2856
  %v2863 = vadd.f32 %v2764, %v2857
  %v2864 = vmul.f32 %v2054, %v2792
  %v2865 = vmul.f32 %v2055, %v2796
  %v2866 = vmul.f32 %v2056, %v2800
  %v2870 = vrot.slane %v2864, 1
  %v2871 = vrot.slane %v2865, 1
  %v2872 = vrot.slane %v2866, 1
  %v2876 = vadd.f32 %v2768, %v2870
  %v2877 = vadd.f32 %v2769, %v2871
  %v2878 = vadd.f32 %v2770, %v2872
  %v2879 = vmul.f32 %v2492, %v2792
  %v2880 = vmul.f32 %v2493, %v2796
  %v2881 = vmul.f32 %v2494, %v2800
  %v2885 = vrot.slane %v2879, 1
  %v2886 = vrot.slane %v2880, 1
  %v2887 = vrot.slane %v2881, 1
  %v2891 = vadd.f32 %v2774, %v2885
  %v2892 = vadd.f32 %v2775, %v2886
  %v2893 = vadd.f32 %v2776, %v2887
  %v2894 = vld [vmem:[%s1113] sm:$0xfe]
  %v2895 = vld [vmem:[%s1113 + $0x8] sm:$0xfe]
  %v2896 = vld [vmem:[%s1113 + $0x10] sm:$0xfe]
  %v2897 = vmul.f32 %v2894, %v2792
  %v2898 = vmul.f32 %v2895, %v2796
  %v2899 = vmul.f32 %v2896, %v2800
  %v2903 = vrot.slane %v2897, 1
  %v2904 = vrot.slane %v2898, 1
  %v2905 = vrot.slane %v2899, 1
  %v2909 = vadd.f32 %v2783, %v2903
  %v2910 = vadd.f32 %v2784, %v2904
  %v2911 = vadd.f32 %v2785, %v2905
  %s2912 = scalar_lea.vmem %s1, 96
  %v2913 = vld [vmem:[%s2912] ss:$8 sm:$0x7]
  %v2915 = vlaneseq
  %v2916 = vshrl.u32 %v2915, 7
  %v2917 = vsub.s32 0, %v2916
  %v2918 = vrot.slane %v2913, %v2917
  %v2919 = vlaneseq
  %v2920 = vshrl.u32 %v2919, 7
  %v2921 = vsub.s32 1, %v2920
  %v2922 = vrot.slane %v2913, %v2921
  %v2923 = vlaneseq
  %v2924 = vshrl.u32 %v2923, 7
  %v2925 = vsub.s32 2, %v2924
  %v2926 = vrot.slane %v2913, %v2925
  %v2930 = vmul.f32 %v2156, %v2918
  %v2931 = vmul.f32 %v2157, %v2922
  %v2932 = vmul.f32 %v2158, %v2926
  %v2933 = vmul.f32 %v2159, %v2918
  %v2934 = vmul.f32 %v2160, %v2922
  %v2935 = vmul.f32 %v2161, %v2926
  %v2942 = vrot.slane %v2930, 2
  %v2943 = vrot.slane %v2933, 2
  %v2944 = vsel %vm442, %v2942, %v2943
  %v2945 = vrot.slane %v2931, 2
  %v2946 = vrot.slane %v2934, 2
  %v2947 = vsel %vm442, %v2945, %v2946
  %v2948 = vrot.slane %v2932, 2
  %v2949 = vrot.slane %v2935, 2
  %v2950 = vsel %vm442, %v2948, %v2949
  %v2954 = vadd.f32 %v2816, %v2944
  %v2955 = vadd.f32 %v2817, %v2947
  %v2956 = vadd.f32 %v2818, %v2950
  %v2957 = vmul.f32 %v2189, %v2918
  %v2958 = vmul.f32 %v2190, %v2922
  %v2959 = vmul.f32 %v2191, %v2926
  %v2960 = vmul.f32 %v2192, %v2918
  %v2961 = vmul.f32 %v2193, %v2922
  %v2962 = vmul.f32 %v2194, %v2926
  %v2969 = vrot.slane %v2957, 2
  %v2970 = vrot.slane %v2960, 2
  %v2971 = vsel %vm442, %v2969, %v2970
  %v2972 = vrot.slane %v2958, 2
  %v2973 = vrot.slane %v2961, 2
  %v2974 = vsel %vm442, %v2972, %v2973
  %v2975 = vrot.slane %v2959, 2
  %v2976 = vrot.slane %v2962, 2
  %v2977 = vsel %vm442, %v2975, %v2976
  %v2981 = vadd.f32 %v2831, %v2971
  %v2982 = vadd.f32 %v2832, %v2974
  %v2983 = vadd.f32 %v2833, %v2977
  %v2984 = vmul.f32 %v2222, %v2918
  %v2985 = vmul.f32 %v2223, %v2922
  %v2986 = vmul.f32 %v2224, %v2926
  %v2987 = vmul.f32 %v2225, %v2918
  %v2988 = vmul.f32 %v2226, %v2922
  %v2989 = vmul.f32 %v2227, %v2926
  %v2996 = vrot.slane %v2984, 2
  %v2997 = vrot.slane %v2987, 2
  %v2998 = vsel %vm442, %v2996, %v2997
  %v2999 = vrot.slane %v2985, 2
  %v3000 = vrot.slane %v2988, 2
  %v3001 = vsel %vm442, %v2999, %v3000
  %v3002 = vrot.slane %v2986, 2
  %v3003 = vrot.slane %v2989, 2
  %v3004 = vsel %vm442, %v3002, %v3003
  %v3008 = vadd.f32 %v2846, %v2998
  %v3009 = vadd.f32 %v2847, %v3001
  %v3010 = vadd.f32 %v2848, %v3004
  %v3011 = vmul.f32 %v2255, %v2918
  %v3012 = vmul.f32 %v2256, %v2922
  %v3013 = vmul.f32 %v2257, %v2926
  %v3014 = vmul.f32 %v2258, %v2918
  %v3015 = vmul.f32 %v2259, %v2922
  %v3016 = vmul.f32 %v2260, %v2926
  %v3023 = vrot.slane %v3011, 2
  %v3024 = vrot.slane %v3014, 2
  %v3025 = vsel %vm442, %v3023, %v3024
  %v3026 = vrot.slane %v3012, 2
  %v3027 = vrot.slane %v3015, 2
  %v3028 = vsel %vm442, %v3026, %v3027
  %v3029 = vrot.slane %v3013, 2
  %v3030 = vrot.slane %v3016, 2
  %v3031 = vsel %vm442, %v3029, %v3030
  %v3035 = vadd.f32 %v2861, %v3025
  %v3036 = vadd.f32 %v2862, %v3028
  %v3037 = vadd.f32 %v2863, %v3031
  %v3038 = vmul.f32 %v2288, %v2918
  %v3039 = vmul.f32 %v2289, %v2922
  %v3040 = vmul.f32 %v2290, %v2926
  %v3041 = vmul.f32 %v2291, %v2918
  %v3042 = vmul.f32 %v2292, %v2922
  %v3043 = vmul.f32 %v2293, %v2926
  %v3050 = vrot.slane %v3038, 2
  %v3051 = vrot.slane %v3041, 2
  %v3052 = vsel %vm442, %v3050, %v3051
  %v3053 = vrot.slane %v3039, 2
  %v3054 = vrot.slane %v3042, 2
  %v3055 = vsel %vm442, %v3053, %v3054
  %v3056 = vrot.slane %v3040, 2
  %v3057 = vrot.slane %v3043, 2
  %v3058 = vsel %vm442, %v3056, %v3057
  %v3062 = vadd.f32 %v2876, %v3052
  %v3063 = vadd.f32 %v2877, %v3055
  %v3064 = vadd.f32 %v2878, %v3058
  %v3065 = vmul.f32 %v2690, %v2918
  %v3066 = vmul.f32 %v2691, %v2922
  %v3067 = vmul.f32 %v2692, %v2926
  %v3068 = vmul.f32 %v2693, %v2918
  %v3069 = vmul.f32 %v2694, %v2922
  %v3070 = vmul.f32 %v2695, %v2926
  %v3077 = vrot.slane %v3065, 2
  %v3078 = vrot.slane %v3068, 2
  %v3079 = vsel %vm442, %v3077, %v3078
  %v3080 = vrot.slane %v3066, 2
  %v3081 = vrot.slane %v3069, 2
  %v3082 = vsel %vm442, %v3080, %v3081
  %v3083 = vrot.slane %v3067, 2
  %v3084 = vrot.slane %v3070, 2
  %v3085 = vsel %vm442, %v3083, %v3084
  %v3089 = vadd.f32 %v2891, %v3079
  %v3090 = vadd.f32 %v2892, %v3082
  %v3091 = vadd.f32 %v2893, %v3085
  %v3092 = vld [vmem:[%s1113] sm:$0xfc]
  %v3093 = vld [vmem:[%s1113 + $0x8] sm:$0xfc]
  %v3094 = vld [vmem:[%s1113 + $0x10] sm:$0xfc]
  %v3095 = vld [vmem:[%s1113 + $0x18] sm:$0x1]
  %v3096 = vld [vmem:[%s1113 + $0x20] sm:$0x1]
  %v3097 = vld [vmem:[%s1113 + $0x28] sm:$0x1]
  %v3098 = vmul.f32 %v3092, %v2918
  %v3099 = vmul.f32 %v3093, %v2922
  %v3100 = vmul.f32 %v3094, %v2926
  %v3101 = vmul.f32 %v3095, %v2918
  %v3102 = vmul.f32 %v3096, %v2922
  %v3103 = vmul.f32 %v3097, %v2926
  %v3110 = vrot.slane %v3098, 2
  %v3111 = vrot.slane %v3101, 2
  %v3112 = vsel %vm442, %v3110, %v3111
  %v3113 = vrot.slane %v3099, 2
  %v3114 = vrot.slane %v3102, 2
  %v3115 = vsel %vm442, %v3113, %v3114
  %v3116 = vrot.slane %v3100, 2
  %v3117 = vrot.slane %v3103, 2
  %v3118 = vsel %vm442, %v3116, %v3117
  %v3122 = vadd.f32 %v2909, %v3112
  %v3123 = vadd.f32 %v2910, %v3115
  %v3124 = vadd.f32 %v2911, %v3118
  %v3125 = vmul.f32 %v2954, %v2954
  %v3126 = vmul.f32 %v2955, %v2955
  %v3127 = vmul.f32 %v2956, %v2956
  %v3128 = vadd.f32 %v2954, %v2981
  %v3129 = vadd.f32 %v2955, %v2982
  %v3130 = vadd.f32 %v2956, %v2983
  %v3131 = vmul.f32 %v2981, %v2981
  %v3132 = vmul.f32 %v2982, %v2982
  %v3133 = vmul.f32 %v2983, %v2983
  %v3134 = vadd.f32 %v3125, %v3131
  %v3135 = vadd.f32 %v3126, %v3132
  %v3136 = vadd.f32 %v3127, %v3133
  %v3137 = vadd.f32 %v3128, %v3008
  %v3138 = vadd.f32 %v3129, %v3009
  %v3139 = vadd.f32 %v3130, %v3010
  %v3140 = vmul.f32 %v3008, %v3008
  %v3141 = vmul.f32 %v3009, %v3009
  %v3142 = vmul.f32 %v3010, %v3010
  %v3143 = vadd.f32 %v3134, %v3140
  %v3144 = vadd.f32 %v3135, %v3141
  %v3145 = vadd.f32 %v3136, %v3142
  %v3146 = vadd.f32 %v3137, %v3035
  %v3147 = vadd.f32 %v3138, %v3036
  %v3148 = vadd.f32 %v3139, %v3037
  %v3149 = vmul.f32 %v3035, %v3035
  %v3150 = vmul.f32 %v3036, %v3036
  %v3151 = vmul.f32 %v3037, %v3037
  %v3152 = vadd.f32 %v3143, %v3149
  %v3153 = vadd.f32 %v3144, %v3150
  %v3154 = vadd.f32 %v3145, %v3151
  %v3155 = vadd.f32 %v3146, %v3062
  %v3156 = vadd.f32 %v3147, %v3063
  %v3157 = vadd.f32 %v3148, %v3064
  %v3158 = vmul.f32 %v3062, %v3062
  %v3159 = vmul.f32 %v3063, %v3063
  %v3160 = vmul.f32 %v3064, %v3064
  %v3161 = vadd.f32 %v3152, %v3158
  %v3162 = vadd.f32 %v3153, %v3159
  %v3163 = vadd.f32 %v3154, %v3160
  %v3164 = vadd.f32 %v3155, %v3089
  %v3165 = vadd.f32 %v3156, %v3090
  %v3166 = vadd.f32 %v3157, %v3091
  %v3167 = vmul.f32 %v3089, %v3089
  %v3168 = vmul.f32 %v3090, %v3090
  %v3169 = vmul.f32 %v3091, %v3091
  %v3170 = vadd.f32 %v3161, %v3167
  %v3171 = vadd.f32 %v3162, %v3168
  %v3172 = vadd.f32 %v3163, %v3169
  %v3173 = vadd.f32 %v3164, %v3122
  %v3174 = vadd.f32 %v3165, %v3123
  %v3175 = vadd.f32 %v3166, %v3124
  %v3176 = vmul.f32 %v3122, %v3122
  %v3177 = vmul.f32 %v3123, %v3123
  %v3178 = vmul.f32 %v3124, %v3124
  %v3179 = vadd.f32 %v3170, %v3176
  %v3180 = vadd.f32 %v3171, %v3177
  %v3181 = vadd.f32 %v3172, %v3178
  %v3182 = vsel %vm1519, %v3173, 0.0
  %v3183 = vrot.slane %v3182, 4
  %v3184 = vadd.f32 %v3182, %v3183
  %v3185 = vrot.slane %v3184, 2
  %v3186 = vadd.f32 %v3184, %v3185
  %v3187 = vrot.slane %v3186, 1
  %v3188 = vadd.f32 %v3186, %v3187
  %v3189 = vsel %vm1519, %v3174, 0.0
  %v3190 = vrot.slane %v3189, 4
  %v3191 = vadd.f32 %v3189, %v3190
  %v3192 = vrot.slane %v3191, 2
  %v3193 = vadd.f32 %v3191, %v3192
  %v3194 = vrot.slane %v3193, 1
  %v3195 = vadd.f32 %v3193, %v3194
  %v3196 = vsel %vm1519, %v3175, 0.0
  %v3197 = vrot.slane %v3196, 4
  %v3198 = vadd.f32 %v3196, %v3197
  %v3199 = vrot.slane %v3198, 2
  %v3200 = vadd.f32 %v3198, %v3199
  %v3201 = vrot.slane %v3200, 1
  %v3202 = vadd.f32 %v3200, %v3201
  %v3203 = vsel %vm1519, %v3179, 0.0
  %v3204 = vrot.slane %v3203, 4
  %v3205 = vadd.f32 %v3203, %v3204
  %v3206 = vrot.slane %v3205, 2
  %v3207 = vadd.f32 %v3205, %v3206
  %v3208 = vrot.slane %v3207, 1
  %v3209 = vadd.f32 %v3207, %v3208
  %v3210 = vsel %vm1519, %v3180, 0.0
  %v3211 = vrot.slane %v3210, 4
  %v3212 = vadd.f32 %v3210, %v3211
  %v3213 = vrot.slane %v3212, 2
  %v3214 = vadd.f32 %v3212, %v3213
  %v3215 = vrot.slane %v3214, 1
  %v3216 = vadd.f32 %v3214, %v3215
  %v3217 = vsel %vm1519, %v3181, 0.0
  %v3218 = vrot.slane %v3217, 4
  %v3219 = vadd.f32 %v3217, %v3218
  %v3220 = vrot.slane %v3219, 2
  %v3221 = vadd.f32 %v3219, %v3220
  %v3222 = vrot.slane %v3221, 1
  %v3223 = vadd.f32 %v3221, %v3222
  %v3224 = vmul.f32 %v3188, 0.020408163
  %v3225 = vmul.f32 %v3195, 0.020408163
  %v3226 = vmul.f32 %v3202, 0.020408163
  %v3227 = vmul.f32 %v3209, 0.020408163
  %v3228 = vmul.f32 %v3216, 0.020408163
  %v3229 = vmul.f32 %v3223, 0.020408163
  %v3230 = vmul.f32 %v3224, %v3224
  %v3231 = vmul.f32 %v3225, %v3225
  %v3232 = vmul.f32 %v3226, %v3226
  %v3233 = vsub.f32 %v3227, %v3230
  %v3234 = vsub.f32 %v3228, %v3231
  %v3235 = vsub.f32 %v3229, %v3232
  %v3236 = vadd.f32 %v3233, 1e-05
  %v3237 = vadd.f32 %v3234, 1e-05
  %v3238 = vadd.f32 %v3235, 1e-05
  %v3239 = vrsqrt.pop %v3236
  %v3240 = vrsqrt.pop %v3237
  %v3241 = vrsqrt.pop %v3238
  %v3242 = vld [vmem:[%s2 + $0x3] sm:$0x7]
  %v3246 = vcombine.low %v3239, %v3240
  %v3248 = vunpack.c.l.s4 1966171168
  %v3249 = vunpack.c.0.s8 %v3248
  %v3250 = vlaneseq
  %v3251 = vshrl.u32 %v3250, 7
  %v3252 = vsub.s32 %v3249, %v3251
  %v3253 = vrot.slane %v3246, %v3252
  %v3255 = vunpack.c.l.s4 1966171168
  %v3256 = vunpack.c.0.s8 %v3255
  %v3257 = vlaneseq
  %v3258 = vshrl.u32 %v3257, 7
  %v3259 = vsub.s32 %v3256, %v3258
  %v3260 = vrot.slane %v3241, %v3259
  %v3261 = vcombine.low %v3253, %v3260
  %v3263 = vunpack.c.l.s4 1966171168
  %v3264 = vunpack.c.0.s8 %v3263
  %v3265 = vlaneseq
  %v3266 = vshrl.u32 %v3265, 7
  %v3267 = vsub.s32 %v3264, %v3266
  %v3268 = vrot.slane %v3261, %v3267
  %v3270 = vmul.f32 %v3242, %v3268
  %v3271 = vld [vmem:[%s3 + $0x3] sm:$0x7]
  %v3273 = vlaneseq
  %v3274 = vshrl.u32 %v3273, 7
  %v3275 = vsub.s32 0, %v3274
  %v3276 = vrot.slane %v3270, %v3275
  %v3277 = vlaneseq
  %v3278 = vshrl.u32 %v3277, 7
  %v3279 = vsub.s32 1, %v3278
  %v3280 = vrot.slane %v3270, %v3279
  %v3281 = vlaneseq
  %v3282 = vshrl.u32 %v3281, 7
  %v3283 = vsub.s32 2, %v3282
  %v3284 = vrot.slane %v3270, %v3283
  %v3288 = vmul.f32 %v3224, %v3276
  %v3289 = vmul.f32 %v3225, %v3280
  %v3290 = vmul.f32 %v3226, %v3284
  %v3294 = vcombine.low %v3288, %v3289
  %v3296 = vunpack.c.l.s4 1966171168
  %v3297 = vunpack.c.0.s8 %v3296
  %v3298 = vlaneseq
  %v3299 = vshrl.u32 %v3298, 7
  %v3300 = vsub.s32 %v3297, %v3299
  %v3301 = vrot.slane %v3294, %v3300
  %v3303 = vunpack.c.l.s4 1966171168
  %v3304 = vunpack.c.0.s8 %v3303
  %v3305 = vlaneseq
  %v3306 = vshrl.u32 %v3305, 7
  %v3307 = vsub.s32 %v3304, %v3306
  %v3308 = vrot.slane %v3290, %v3307
  %v3309 = vcombine.low %v3301, %v3308
  %v3311 = vunpack.c.l.s4 1966171168
  %v3312 = vunpack.c.0.s8 %v3311
  %v3313 = vlaneseq
  %v3314 = vshrl.u32 %v3313, 7
  %v3315 = vsub.s32 %v3312, %v3314
  %v3316 = vrot.slane %v3309, %v3315
  %v3318 = vsub.f32 %v3271, %v3316
  %v3320 = vlaneseq
  %v3321 = vshrl.u32 %v3320, 7
  %v3322 = vsub.s32 0, %v3321
  %v3323 = vrot.slane %v3318, %v3322
  %v3324 = vlaneseq
  %v3325 = vshrl.u32 %v3324, 7
  %v3326 = vsub.s32 1, %v3325
  %v3327 = vrot.slane %v3318, %v3326
  %v3328 = vlaneseq
  %v3329 = vshrl.u32 %v3328, 7
  %v3330 = vsub.s32 2, %v3329
  %v3331 = vrot.slane %v3318, %v3330
  %v3335 = vmul.f32 %v2954, %v3276
  %v3336 = vmul.f32 %v2955, %v3280
  %v3337 = vmul.f32 %v2956, %v3284
  %v3338 = vadd.f32 %v3335, %v3323
  %v3339 = vadd.f32 %v3336, %v3327
  %v3340 = vadd.f32 %v3337, %v3331
  %3341 = vst [vmem:[%s4 + $0x18] sm:$0x7f] %v3338
  %3342 = vst [vmem:[%s4 + $0x20] sm:$0x7f] %v3339
  %3343 = vst [vmem:[%s4 + $0x28] sm:$0x7f] %v3340
  %v3344 = vmul.f32 %v2981, %v3276
  %v3345 = vmul.f32 %v2982, %v3280
  %v3346 = vmul.f32 %v2983, %v3284
  %v3347 = vadd.f32 %v3344, %v3323
  %v3348 = vadd.f32 %v3345, %v3327
  %v3349 = vadd.f32 %v3346, %v3331
  %3350 = vst [vmem:[%s1688 + $0x18] sm:$0x7f] %v3347
  %3351 = vst [vmem:[%s1688 + $0x20] sm:$0x7f] %v3348
  %3352 = vst [vmem:[%s1688 + $0x28] sm:$0x7f] %v3349
  %v3353 = vmul.f32 %v3008, %v3276
  %v3354 = vmul.f32 %v3009, %v3280
  %v3355 = vmul.f32 %v3010, %v3284
  %v3356 = vadd.f32 %v3353, %v3323
  %v3357 = vadd.f32 %v3354, %v3327
  %v3358 = vadd.f32 %v3355, %v3331
  %3359 = vst [vmem:[%s1698 + $0x18] sm:$0x7f] %v3356
  %3360 = vst [vmem:[%s1698 + $0x20] sm:$0x7f] %v3357
  %3361 = vst [vmem:[%s1698 + $0x28] sm:$0x7f] %v3358
  %v3362 = vmul.f32 %v3035, %v3276
  %v3363 = vmul.f32 %v3036, %v3280
  %v3364 = vmul.f32 %v3037, %v3284
  %v3365 = vadd.f32 %v3362, %v3323
  %v3366 = vadd.f32 %v3363, %v3327
  %v3367 = vadd.f32 %v3364, %v3331
  %3368 = vst [vmem:[%s1708 + $0x18] sm:$0x7f] %v3365
  %3369 = vst [vmem:[%s1708 + $0x20] sm:$0x7f] %v3366
  %3370 = vst [vmem:[%s1708 + $0x28] sm:$0x7f] %v3367
  %v3371 = vmul.f32 %v3062, %v3276
  %v3372 = vmul.f32 %v3063, %v3280
  %v3373 = vmul.f32 %v3064, %v3284
  %v3374 = vadd.f32 %v3371, %v3323
  %v3375 = vadd.f32 %v3372, %v3327
  %v3376 = vadd.f32 %v3373, %v3331
  %3377 = vst [vmem:[%s1718 + $0x18] sm:$0x7f] %v3374
  %3378 = vst [vmem:[%s1718 + $0x20] sm:$0x7f] %v3375
  %3379 = vst [vmem:[%s1718 + $0x28] sm:$0x7f] %v3376
  %v3380 = vmul.f32 %v3089, %v3276
  %v3381 = vmul.f32 %v3090, %v3280
  %v3382 = vmul.f32 %v3091, %v3284
  %v3383 = vadd.f32 %v3380, %v3323
  %v3384 = vadd.f32 %v3381, %v3327
  %v3385 = vadd.f32 %v3382, %v3331
  %3386 = vst [vmem:[%s1728 + $0x18] sm:$0x7f] %v3383
  %3387 = vst [vmem:[%s1728 + $0x20] sm:$0x7f] %v3384
  %3388 = vst [vmem:[%s1728 + $0x28] sm:$0x7f] %v3385
  %v3389 = vmul.f32 %v3122, %v3276
  %v3390 = vmul.f32 %v3123, %v3280
  %v3391 = vmul.f32 %v3124, %v3284
  %v3392 = vadd.f32 %v3389, %v3323
  %v3393 = vadd.f32 %v3390, %v3327
  %v3394 = vadd.f32 %v3391, %v3331
  %3395 = vst [vmem:[%s1738 + $0x18] sm:$0x7f] %v3392
  %3396 = vst [vmem:[%s1738 + $0x20] sm:$0x7f] %v3393
  %3397 = vst [vmem:[%s1738 + $0x28] sm:$0x7f] %v3394
  %v3398 = vld [vmem:[%s0 + $0x30] sm:$0x7f]
  %v3399 = vld [vmem:[%s0 + $0x38] sm:$0x7f]
  %v3400 = vld [vmem:[%s0 + $0x40] sm:$0x7f]
  %v3401 = vld [vmem:[%s0 + $0x78] sm:$0x7f]
  %v3402 = vld [vmem:[%s0 + $0x80] sm:$0x7f]
  %v3403 = vld [vmem:[%s0 + $0x88] sm:$0x7f]
  %v3404 = vld [vmem:[%s0 + $0xc0] sm:$0x7f]
  %v3405 = vld [vmem:[%s0 + $0xc8] sm:$0x7f]
  %v3406 = vld [vmem:[%s0 + $0xd0] sm:$0x7f]
  %v3407 = vld [vmem:[%s0 + $0x108] sm:$0x7f]
  %v3408 = vld [vmem:[%s0 + $0x110] sm:$0x7f]
  %v3409 = vld [vmem:[%s0 + $0x118] sm:$0x7f]
  %v3410 = vld [vmem:[%s0 + $0x150] sm:$0x7f]
  %v3411 = vld [vmem:[%s0 + $0x158] sm:$0x7f]
  %v3412 = vld [vmem:[%s0 + $0x160] sm:$0x7f]
  %v3413 = vld [vmem:[%s0 + $0x198] sm:$0x7f]
  %v3414 = vld [vmem:[%s0 + $0x1a0] sm:$0x7f]
  %v3415 = vld [vmem:[%s0 + $0x1a8] sm:$0x7f]
  %v3416 = vld [vmem:[%s0 + $0x1e0] sm:$0x7f]
  %v3417 = vld [vmem:[%s0 + $0x1e8] sm:$0x7f]
  %v3418 = vld [vmem:[%s0 + $0x1f0] sm:$0x7f]
  %v3440 = vrot.slane %v3398, 7
  %v3441 = vrot.slane %v3399, 7
  %v3442 = vrot.slane %v3400, 7
  %v3443 = vrot.slane %v3401, 7
  %v3444 = vrot.slane %v3402, 7
  %v3445 = vrot.slane %v3403, 7
  %v3446 = vrot.slane %v3404, 7
  %v3447 = vrot.slane %v3405, 7
  %v3448 = vrot.slane %v3406, 7
  %v3449 = vrot.slane %v3407, 7
  %v3450 = vrot.slane %v3408, 7
  %v3451 = vrot.slane %v3409, 7
  %v3452 = vrot.slane %v3410, 7
  %v3453 = vrot.slane %v3411, 7
  %v3454 = vrot.slane %v3412, 7
  %v3455 = vrot.slane %v3413, 7
  %v3456 = vrot.slane %v3414, 7
  %v3457 = vrot.slane %v3415, 7
  %v3458 = vrot.slane %v3416, 7
  %v3459 = vrot.slane %v3417, 7
  %v3460 = vrot.slane %v3418, 7
  %3482 = vst [vmem:[%s155] sm:$0xfe] %v3440
  %3483 = vst [vmem:[%s155 + $0x8] sm:$0xfe] %v3441
  %3484 = vst [vmem:[%s155 + $0x10] sm:$0xfe] %v3442
  %3485 = vst [vmem:[%s155 + $0x30] sm:$0xfe] %v3443
  %3486 = vst [vmem:[%s155 + $0x38] sm:$0xfe] %v3444
  %3487 = vst [vmem:[%s155 + $0x40] sm:$0xfe] %v3445
  %3488 = vst [vmem:[%s155 + $0x60] sm:$0xfe] %v3446
  %3489 = vst [vmem:[%s155 + $0x68] sm:$0xfe] %v3447
  %3490 = vst [vmem:[%s155 + $0x70] sm:$0xfe] %v3448
  %3491 = vst [vmem:[%s155 + $0x90] sm:$0xfe] %v3449
  %3492 = vst [vmem:[%s155 + $0x98] sm:$0xfe] %v3450
  %3493 = vst [vmem:[%s155 + $0xa0] sm:$0xfe] %v3451
  %3494 = vst [vmem:[%s155 + $0xc0] sm:$0xfe] %v3452
  %3495 = vst [vmem:[%s155 + $0xc8] sm:$0xfe] %v3453
  %3496 = vst [vmem:[%s155 + $0xd0] sm:$0xfe] %v3454
  %3497 = vst [vmem:[%s155 + $0xf0] sm:$0xfe] %v3455
  %3498 = vst [vmem:[%s155 + $0xf8] sm:$0xfe] %v3456
  %3499 = vst [vmem:[%s155 + $0x100] sm:$0xfe] %v3457
  %3500 = vst [vmem:[%s155 + $0x120] sm:$0xfe] %v3458
  %3501 = vst [vmem:[%s155 + $0x128] sm:$0xfe] %v3459
  %3502 = vst [vmem:[%s155 + $0x130] sm:$0xfe] %v3460
  %s3503 = scalar_lea.vmem %s1, 48
  %v3504 = vld [vmem:[%s3503] ss:$8 sm:$0x7]
  %v3506 = vlaneseq
  %v3507 = vshrl.u32 %v3506, 7
  %v3508 = vsub.s32 0, %v3507
  %v3509 = vrot.slane %v3504, %v3508
  %v3510 = vlaneseq
  %v3511 = vshrl.u32 %v3510, 7
  %v3512 = vsub.s32 1, %v3511
  %v3513 = vrot.slane %v3504, %v3512
  %v3514 = vlaneseq
  %v3515 = vshrl.u32 %v3514, 7
  %v3516 = vsub.s32 2, %v3515
  %v3517 = vrot.slane %v3504, %v3516
  %v3521 = vld [vmem:[#allocation2] sm:$0x7f]
  %v3522 = vld [vmem:[#allocation2 + $0x8] sm:$0x7f]
  %v3523 = vld [vmem:[#allocation2 + $0x10] sm:$0x7f]
  %v3524 = vmul.f32 %v3521, %v3509
  %v3525 = vmul.f32 %v3522, %v3513
  %v3526 = vmul.f32 %v3523, %v3517
  %v3527 = vadd.f32 %v3524, 0.0
  %v3528 = vadd.f32 %v3525, 0.0
  %v3529 = vadd.f32 %v3526, 0.0
  %v3530 = vld [vmem:[%s155] sm:$0x7f]
  %v3531 = vld [vmem:[%s155 + $0x8] sm:$0x7f]
  %v3532 = vld [vmem:[%s155 + $0x10] sm:$0x7f]
  %v3533 = vmul.f32 %v3530, %v3509
  %v3534 = vmul.f32 %v3531, %v3513
  %v3535 = vmul.f32 %v3532, %v3517
  %v3536 = vadd.f32 %v3533, 0.0
  %v3537 = vadd.f32 %v3534, 0.0
  %v3538 = vadd.f32 %v3535, 0.0
  %v3539 = vld [vmem:[%s212] sm:$0x7f]
  %v3540 = vld [vmem:[%s212 + $0x8] sm:$0x7f]
  %v3541 = vld [vmem:[%s212 + $0x10] sm:$0x7f]
  %v3542 = vmul.f32 %v3539, %v3509
  %v3543 = vmul.f32 %v3540, %v3513
  %v3544 = vmul.f32 %v3541, %v3517
  %v3545 = vadd.f32 %v3542, 0.0
  %v3546 = vadd.f32 %v3543, 0.0
  %v3547 = vadd.f32 %v3544, 0.0
  %v3548 = vld [vmem:[%s222] sm:$0x7f]
  %v3549 = vld [vmem:[%s222 + $0x8] sm:$0x7f]
  %v3550 = vld [vmem:[%s222 + $0x10] sm:$0x7f]
  %v3551 = vmul.f32 %v3548, %v3509
  %v3552 = vmul.f32 %v3549, %v3513
  %v3553 = vmul.f32 %v3550, %v3517
  %v3554 = vadd.f32 %v3551, 0.0
  %v3555 = vadd.f32 %v3552, 0.0
  %v3556 = vadd.f32 %v3553, 0.0
  %v3557 = vld [vmem:[%s232] sm:$0x7f]
  %v3558 = vld [vmem:[%s232 + $0x8] sm:$0x7f]
  %v3559 = vld [vmem:[%s232 + $0x10] sm:$0x7f]
  %v3560 = vmul.f32 %v3557, %v3509
  %v3561 = vmul.f32 %v3558, %v3513
  %v3562 = vmul.f32 %v3559, %v3517
  %v3563 = vadd.f32 %v3560, 0.0
  %v3564 = vadd.f32 %v3561, 0.0
  %v3565 = vadd.f32 %v3562, 0.0
  %v3566 = vld [vmem:[%s242] sm:$0x7f]
  %v3567 = vld [vmem:[%s242 + $0x8] sm:$0x7f]
  %v3568 = vld [vmem:[%s242 + $0x10] sm:$0x7f]
  %v3569 = vmul.f32 %v3566, %v3509
  %v3570 = vmul.f32 %v3567, %v3513
  %v3571 = vmul.f32 %v3568, %v3517
  %v3572 = vadd.f32 %v3569, 0.0
  %v3573 = vadd.f32 %v3570, 0.0
  %v3574 = vadd.f32 %v3571, 0.0
  %v3575 = vld [vmem:[%s252] sm:$0x7f]
  %v3576 = vld [vmem:[%s252 + $0x8] sm:$0x7f]
  %v3577 = vld [vmem:[%s252 + $0x10] sm:$0x7f]
  %v3578 = vmul.f32 %v3575, %v3509
  %v3579 = vmul.f32 %v3576, %v3513
  %v3580 = vmul.f32 %v3577, %v3517
  %v3581 = vadd.f32 %v3578, 0.0
  %v3582 = vadd.f32 %v3579, 0.0
  %v3583 = vadd.f32 %v3580, 0.0
  %s3584 = scalar_lea.vmem %s1, 49
  %v3585 = vld [vmem:[%s3584] ss:$8 sm:$0x7]
  %v3587 = vlaneseq
  %v3588 = vshrl.u32 %v3587, 7
  %v3589 = vsub.s32 0, %v3588
  %v3590 = vrot.slane %v3585, %v3589
  %v3591 = vlaneseq
  %v3592 = vshrl.u32 %v3591, 7
  %v3593 = vsub.s32 1, %v3592
  %v3594 = vrot.slane %v3585, %v3593
  %v3595 = vlaneseq
  %v3596 = vshrl.u32 %v3595, 7
  %v3597 = vsub.s32 2, %v3596
  %v3598 = vrot.slane %v3585, %v3597
  %v3602 = vld [vmem:[#allocation2] sm:$0xfe]
  %v3603 = vld [vmem:[#allocation2 + $0x8] sm:$0xfe]
  %v3604 = vld [vmem:[#allocation2 + $0x10] sm:$0xfe]
  %v3605 = vmul.f32 %v3602, %v3590
  %v3606 = vmul.f32 %v3603, %v3594
  %v3607 = vmul.f32 %v3604, %v3598
  %v3611 = vrot.slane %v3605, 1
  %v3612 = vrot.slane %v3606, 1
  %v3613 = vrot.slane %v3607, 1
  %v3617 = vadd.f32 %v3527, %v3611
  %v3618 = vadd.f32 %v3528, %v3612
  %v3619 = vadd.f32 %v3529, %v3613
  %v3620 = vld [vmem:[%s155] sm:$0xfe]
  %v3621 = vld [vmem:[%s155 + $0x8] sm:$0xfe]
  %v3622 = vld [vmem:[%s155 + $0x10] sm:$0xfe]
  %v3623 = vmul.f32 %v3620, %v3590
  %v3624 = vmul.f32 %v3621, %v3594
  %v3625 = vmul.f32 %v3622, %v3598
  %v3629 = vrot.slane %v3623, 1
  %v3630 = vrot.slane %v3624, 1
  %v3631 = vrot.slane %v3625, 1
  %v3635 = vadd.f32 %v3536, %v3629
  %v3636 = vadd.f32 %v3537, %v3630
  %v3637 = vadd.f32 %v3538, %v3631
  %v3638 = vld [vmem:[%s212] sm:$0xfe]
  %v3639 = vld [vmem:[%s212 + $0x8] sm:$0xfe]
  %v3640 = vld [vmem:[%s212 + $0x10] sm:$0xfe]
  %v3641 = vmul.f32 %v3638, %v3590
  %v3642 = vmul.f32 %v3639, %v3594
  %v3643 = vmul.f32 %v3640, %v3598
  %v3647 = vrot.slane %v3641, 1
  %v3648 = vrot.slane %v3642, 1
  %v3649 = vrot.slane %v3643, 1
  %v3653 = vadd.f32 %v3545, %v3647
  %v3654 = vadd.f32 %v3546, %v3648
  %v3655 = vadd.f32 %v3547, %v3649
  %v3656 = vld [vmem:[%s222] sm:$0xfe]
  %v3657 = vld [vmem:[%s222 + $0x8] sm:$0xfe]
  %v3658 = vld [vmem:[%s222 + $0x10] sm:$0xfe]
  %v3659 = vmul.f32 %v3656, %v3590
  %v3660 = vmul.f32 %v3657, %v3594
  %v3661 = vmul.f32 %v3658, %v3598
  %v3665 = vrot.slane %v3659, 1
  %v3666 = vrot.slane %v3660, 1
  %v3667 = vrot.slane %v3661, 1
  %v3671 = vadd.f32 %v3554, %v3665
  %v3672 = vadd.f32 %v3555, %v3666
  %v3673 = vadd.f32 %v3556, %v3667
  %v3674 = vld [vmem:[%s232] sm:$0xfe]
  %v3675 = vld [vmem:[%s232 + $0x8] sm:$0xfe]
  %v3676 = vld [vmem:[%s232 + $0x10] sm:$0xfe]
  %v3677 = vmul.f32 %v3674, %v3590
  %v3678 = vmul.f32 %v3675, %v3594
  %v3679 = vmul.f32 %v3676, %v3598
  %v3683 = vrot.slane %v3677, 1
  %v3684 = vrot.slane %v3678, 1
  %v3685 = vrot.slane %v3679, 1
  %v3689 = vadd.f32 %v3563, %v3683
  %v3690 = vadd.f32 %v3564, %v3684
  %v3691 = vadd.f32 %v3565, %v3685
  %v3692 = vld [vmem:[%s242] sm:$0xfe]
  %v3693 = vld [vmem:[%s242 + $0x8] sm:$0xfe]
  %v3694 = vld [vmem:[%s242 + $0x10] sm:$0xfe]
  %v3695 = vmul.f32 %v3692, %v3590
  %v3696 = vmul.f32 %v3693, %v3594
  %v3697 = vmul.f32 %v3694, %v3598
  %v3701 = vrot.slane %v3695, 1
  %v3702 = vrot.slane %v3696, 1
  %v3703 = vrot.slane %v3697, 1
  %v3707 = vadd.f32 %v3572, %v3701
  %v3708 = vadd.f32 %v3573, %v3702
  %v3709 = vadd.f32 %v3574, %v3703
  %v3710 = vld [vmem:[%s252] sm:$0xfe]
  %v3711 = vld [vmem:[%s252 + $0x8] sm:$0xfe]
  %v3712 = vld [vmem:[%s252 + $0x10] sm:$0xfe]
  %v3713 = vmul.f32 %v3710, %v3590
  %v3714 = vmul.f32 %v3711, %v3594
  %v3715 = vmul.f32 %v3712, %v3598
  %v3719 = vrot.slane %v3713, 1
  %v3720 = vrot.slane %v3714, 1
  %v3721 = vrot.slane %v3715, 1
  %v3725 = vadd.f32 %v3581, %v3719
  %v3726 = vadd.f32 %v3582, %v3720
  %v3727 = vadd.f32 %v3583, %v3721
  %s3728 = scalar_lea.vmem %s1, 50
  %v3729 = vld [vmem:[%s3728] ss:$8 sm:$0x7]
  %v3731 = vlaneseq
  %v3732 = vshrl.u32 %v3731, 7
  %v3733 = vsub.s32 0, %v3732
  %v3734 = vrot.slane %v3729, %v3733
  %v3735 = vlaneseq
  %v3736 = vshrl.u32 %v3735, 7
  %v3737 = vsub.s32 1, %v3736
  %v3738 = vrot.slane %v3729, %v3737
  %v3739 = vlaneseq
  %v3740 = vshrl.u32 %v3739, 7
  %v3741 = vsub.s32 2, %v3740
  %v3742 = vrot.slane %v3729, %v3741
  %v3746 = vld [vmem:[#allocation2] sm:$0xfc]
  %v3747 = vld [vmem:[#allocation2 + $0x8] sm:$0xfc]
  %v3748 = vld [vmem:[#allocation2 + $0x10] sm:$0xfc]
  %v3749 = vld [vmem:[#allocation2 + $0x18] sm:$0x1]
  %v3750 = vld [vmem:[#allocation2 + $0x20] sm:$0x1]
  %v3751 = vld [vmem:[#allocation2 + $0x28] sm:$0x1]
  %v3752 = vmul.f32 %v3746, %v3734
  %v3753 = vmul.f32 %v3747, %v3738
  %v3754 = vmul.f32 %v3748, %v3742
  %v3755 = vmul.f32 %v3749, %v3734
  %v3756 = vmul.f32 %v3750, %v3738
  %v3757 = vmul.f32 %v3751, %v3742
  %v3764 = vrot.slane %v3752, 2
  %v3765 = vrot.slane %v3755, 2
  %v3766 = vsel %vm442, %v3764, %v3765
  %v3767 = vrot.slane %v3753, 2
  %v3768 = vrot.slane %v3756, 2
  %v3769 = vsel %vm442, %v3767, %v3768
  %v3770 = vrot.slane %v3754, 2
  %v3771 = vrot.slane %v3757, 2
  %v3772 = vsel %vm442, %v3770, %v3771
  %v3776 = vadd.f32 %v3617, %v3766
  %v3777 = vadd.f32 %v3618, %v3769
  %v3778 = vadd.f32 %v3619, %v3772
  %v3779 = vld [vmem:[%s155] sm:$0xfc]
  %v3780 = vld [vmem:[%s155 + $0x8] sm:$0xfc]
  %v3781 = vld [vmem:[%s155 + $0x10] sm:$0xfc]
  %v3782 = vld [vmem:[%s155 + $0x18] sm:$0x1]
  %v3783 = vld [vmem:[%s155 + $0x20] sm:$0x1]
  %v3784 = vld [vmem:[%s155 + $0x28] sm:$0x1]
  %v3785 = vmul.f32 %v3779, %v3734
  %v3786 = vmul.f32 %v3780, %v3738
  %v3787 = vmul.f32 %v3781, %v3742
  %v3788 = vmul.f32 %v3782, %v3734
  %v3789 = vmul.f32 %v3783, %v3738
  %v3790 = vmul.f32 %v3784, %v3742
  %v3797 = vrot.slane %v3785, 2
  %v3798 = vrot.slane %v3788, 2
  %v3799 = vsel %vm442, %v3797, %v3798
  %v3800 = vrot.slane %v3786, 2
  %v3801 = vrot.slane %v3789, 2
  %v3802 = vsel %vm442, %v3800, %v3801
  %v3803 = vrot.slane %v3787, 2
  %v3804 = vrot.slane %v3790, 2
  %v3805 = vsel %vm442, %v3803, %v3804
  %v3809 = vadd.f32 %v3635, %v3799
  %v3810 = vadd.f32 %v3636, %v3802
  %v3811 = vadd.f32 %v3637, %v3805
  %v3812 = vld [vmem:[%s212] sm:$0xfc]
  %v3813 = vld [vmem:[%s212 + $0x8] sm:$0xfc]
  %v3814 = vld [vmem:[%s212 + $0x10] sm:$0xfc]
  %v3815 = vld [vmem:[%s212 + $0x18] sm:$0x1]
  %v3816 = vld [vmem:[%s212 + $0x20] sm:$0x1]
  %v3817 = vld [vmem:[%s212 + $0x28] sm:$0x1]
  %v3818 = vmul.f32 %v3812, %v3734
  %v3819 = vmul.f32 %v3813, %v3738
  %v3820 = vmul.f32 %v3814, %v3742
  %v3821 = vmul.f32 %v3815, %v3734
  %v3822 = vmul.f32 %v3816, %v3738
  %v3823 = vmul.f32 %v3817, %v3742
  %v3830 = vrot.slane %v3818, 2
  %v3831 = vrot.slane %v3821, 2
  %v3832 = vsel %vm442, %v3830, %v3831
  %v3833 = vrot.slane %v3819, 2
  %v3834 = vrot.slane %v3822, 2
  %v3835 = vsel %vm442, %v3833, %v3834
  %v3836 = vrot.slane %v3820, 2
  %v3837 = vrot.slane %v3823, 2
  %v3838 = vsel %vm442, %v3836, %v3837
  %v3842 = vadd.f32 %v3653, %v3832
  %v3843 = vadd.f32 %v3654, %v3835
  %v3844 = vadd.f32 %v3655, %v3838
  %v3845 = vld [vmem:[%s222] sm:$0xfc]
  %v3846 = vld [vmem:[%s222 + $0x8] sm:$0xfc]
  %v3847 = vld [vmem:[%s222 + $0x10] sm:$0xfc]
  %v3848 = vld [vmem:[%s222 + $0x18] sm:$0x1]
  %v3849 = vld [vmem:[%s222 + $0x20] sm:$0x1]
  %v3850 = vld [vmem:[%s222 + $0x28] sm:$0x1]
  %v3851 = vmul.f32 %v3845, %v3734
  %v3852 = vmul.f32 %v3846, %v3738
  %v3853 = vmul.f32 %v3847, %v3742
  %v3854 = vmul.f32 %v3848, %v3734
  %v3855 = vmul.f32 %v3849, %v3738
  %v3856 = vmul.f32 %v3850, %v3742
  %v3863 = vrot.slane %v3851, 2
  %v3864 = vrot.slane %v3854, 2
  %v3865 = vsel %vm442, %v3863, %v3864
  %v3866 = vrot.slane %v3852, 2
  %v3867 = vrot.slane %v3855, 2
  %v3868 = vsel %vm442, %v3866, %v3867
  %v3869 = vrot.slane %v3853, 2
  %v3870 = vrot.slane %v3856, 2
  %v3871 = vsel %vm442, %v3869, %v3870
  %v3875 = vadd.f32 %v3671, %v3865
  %v3876 = vadd.f32 %v3672, %v3868
  %v3877 = vadd.f32 %v3673, %v3871
  %v3878 = vld [vmem:[%s232] sm:$0xfc]
  %v3879 = vld [vmem:[%s232 + $0x8] sm:$0xfc]
  %v3880 = vld [vmem:[%s232 + $0x10] sm:$0xfc]
  %v3881 = vld [vmem:[%s232 + $0x18] sm:$0x1]
  %v3882 = vld [vmem:[%s232 + $0x20] sm:$0x1]
  %v3883 = vld [vmem:[%s232 + $0x28] sm:$0x1]
  %v3884 = vmul.f32 %v3878, %v3734
  %v3885 = vmul.f32 %v3879, %v3738
  %v3886 = vmul.f32 %v3880, %v3742
  %v3887 = vmul.f32 %v3881, %v3734
  %v3888 = vmul.f32 %v3882, %v3738
  %v3889 = vmul.f32 %v3883, %v3742
  %v3896 = vrot.slane %v3884, 2
  %v3897 = vrot.slane %v3887, 2
  %v3898 = vsel %vm442, %v3896, %v3897
  %v3899 = vrot.slane %v3885, 2
  %v3900 = vrot.slane %v3888, 2
  %v3901 = vsel %vm442, %v3899, %v3900
  %v3902 = vrot.slane %v3886, 2
  %v3903 = vrot.slane %v3889, 2
  %v3904 = vsel %vm442, %v3902, %v3903
  %v3908 = vadd.f32 %v3689, %v3898
  %v3909 = vadd.f32 %v3690, %v3901
  %v3910 = vadd.f32 %v3691, %v3904
  %v3911 = vld [vmem:[%s242] sm:$0xfc]
  %v3912 = vld [vmem:[%s242 + $0x8] sm:$0xfc]
  %v3913 = vld [vmem:[%s242 + $0x10] sm:$0xfc]
  %v3914 = vld [vmem:[%s242 + $0x18] sm:$0x1]
  %v3915 = vld [vmem:[%s242 + $0x20] sm:$0x1]
  %v3916 = vld [vmem:[%s242 + $0x28] sm:$0x1]
  %v3917 = vmul.f32 %v3911, %v3734
  %v3918 = vmul.f32 %v3912, %v3738
  %v3919 = vmul.f32 %v3913, %v3742
  %v3920 = vmul.f32 %v3914, %v3734
  %v3921 = vmul.f32 %v3915, %v3738
  %v3922 = vmul.f32 %v3916, %v3742
  %v3929 = vrot.slane %v3917, 2
  %v3930 = vrot.slane %v3920, 2
  %v3931 = vsel %vm442, %v3929, %v3930
  %v3932 = vrot.slane %v3918, 2
  %v3933 = vrot.slane %v3921, 2
  %v3934 = vsel %vm442, %v3932, %v3933
  %v3935 = vrot.slane %v3919, 2
  %v3936 = vrot.slane %v3922, 2
  %v3937 = vsel %vm442, %v3935, %v3936
  %v3941 = vadd.f32 %v3707, %v3931
  %v3942 = vadd.f32 %v3708, %v3934
  %v3943 = vadd.f32 %v3709, %v3937
  %v3944 = vld [vmem:[%s252] sm:$0xfc]
  %v3945 = vld [vmem:[%s252 + $0x8] sm:$0xfc]
  %v3946 = vld [vmem:[%s252 + $0x10] sm:$0xfc]
  %v3947 = vld [vmem:[%s252 + $0x18] sm:$0x1]
  %v3948 = vld [vmem:[%s252 + $0x20] sm:$0x1]
  %v3949 = vld [vmem:[%s252 + $0x28] sm:$0x1]
  %v3950 = vmul.f32 %v3944, %v3734
  %v3951 = vmul.f32 %v3945, %v3738
  %v3952 = vmul.f32 %v3946, %v3742
  %v3953 = vmul.f32 %v3947, %v3734
  %v3954 = vmul.f32 %v3948, %v3738
  %v3955 = vmul.f32 %v3949, %v3742
  %v3962 = vrot.slane %v3950, 2
  %v3963 = vrot.slane %v3953, 2
  %v3964 = vsel %vm442, %v3962, %v3963
  %v3965 = vrot.slane %v3951, 2
  %v3966 = vrot.slane %v3954, 2
  %v3967 = vsel %vm442, %v3965, %v3966
  %v3968 = vrot.slane %v3952, 2
  %v3969 = vrot.slane %v3955, 2
  %v3970 = vsel %vm442, %v3968, %v3969
  %v3974 = vadd.f32 %v3725, %v3964
  %v3975 = vadd.f32 %v3726, %v3967
  %v3976 = vadd.f32 %v3727, %v3970
  %s3977 = scalar_lea.vmem %s1, 51
  %v3978 = vld [vmem:[%s3977] ss:$8 sm:$0x7]
  %v3980 = vlaneseq
  %v3981 = vshrl.u32 %v3980, 7
  %v3982 = vsub.s32 0, %v3981
  %v3983 = vrot.slane %v3978, %v3982
  %v3984 = vlaneseq
  %v3985 = vshrl.u32 %v3984, 7
  %v3986 = vsub.s32 1, %v3985
  %v3987 = vrot.slane %v3978, %v3986
  %v3988 = vlaneseq
  %v3989 = vshrl.u32 %v3988, 7
  %v3990 = vsub.s32 2, %v3989
  %v3991 = vrot.slane %v3978, %v3990
  %v3995 = vmul.f32 %v3530, %v3983
  %v3996 = vmul.f32 %v3531, %v3987
  %v3997 = vmul.f32 %v3532, %v3991
  %v3998 = vadd.f32 %v3776, %v3995
  %v3999 = vadd.f32 %v3777, %v3996
  %v4000 = vadd.f32 %v3778, %v3997
  %v4001 = vmul.f32 %v3539, %v3983
  %v4002 = vmul.f32 %v3540, %v3987
  %v4003 = vmul.f32 %v3541, %v3991
  %v4004 = vadd.f32 %v3809, %v4001
  %v4005 = vadd.f32 %v3810, %v4002
  %v4006 = vadd.f32 %v3811, %v4003
  %v4007 = vmul.f32 %v3548, %v3983
  %v4008 = vmul.f32 %v3549, %v3987
  %v4009 = vmul.f32 %v3550, %v3991
  %v4010 = vadd.f32 %v3842, %v4007
  %v4011 = vadd.f32 %v3843, %v4008
  %v4012 = vadd.f32 %v3844, %v4009
  %v4013 = vmul.f32 %v3557, %v3983
  %v4014 = vmul.f32 %v3558, %v3987
  %v4015 = vmul.f32 %v3559, %v3991
  %v4016 = vadd.f32 %v3875, %v4013
  %v4017 = vadd.f32 %v3876, %v4014
  %v4018 = vadd.f32 %v3877, %v4015
  %v4019 = vmul.f32 %v3566, %v3983
  %v4020 = vmul.f32 %v3567, %v3987
  %v4021 = vmul.f32 %v3568, %v3991
  %v4022 = vadd.f32 %v3908, %v4019
  %v4023 = vadd.f32 %v3909, %v4020
  %v4024 = vadd.f32 %v3910, %v4021
  %v4025 = vmul.f32 %v3575, %v3983
  %v4026 = vmul.f32 %v3576, %v3987
  %v4027 = vmul.f32 %v3577, %v3991
  %v4028 = vadd.f32 %v3941, %v4025
  %v4029 = vadd.f32 %v3942, %v4026
  %v4030 = vadd.f32 %v3943, %v4027
  %v4031 = vld [vmem:[%s710] sm:$0x7f]
  %v4032 = vld [vmem:[%s710 + $0x8] sm:$0x7f]
  %v4033 = vld [vmem:[%s710 + $0x10] sm:$0x7f]
  %v4034 = vmul.f32 %v4031, %v3983
  %v4035 = vmul.f32 %v4032, %v3987
  %v4036 = vmul.f32 %v4033, %v3991
  %v4037 = vadd.f32 %v3974, %v4034
  %v4038 = vadd.f32 %v3975, %v4035
  %v4039 = vadd.f32 %v3976, %v4036
  %s4040 = scalar_lea.vmem %s1, 52
  %v4041 = vld [vmem:[%s4040] ss:$8 sm:$0x7]
  %v4043 = vlaneseq
  %v4044 = vshrl.u32 %v4043, 7
  %v4045 = vsub.s32 0, %v4044
  %v4046 = vrot.slane %v4041, %v4045
  %v4047 = vlaneseq
  %v4048 = vshrl.u32 %v4047, 7
  %v4049 = vsub.s32 1, %v4048
  %v4050 = vrot.slane %v4041, %v4049
  %v4051 = vlaneseq
  %v4052 = vshrl.u32 %v4051, 7
  %v4053 = vsub.s32 2, %v4052
  %v4054 = vrot.slane %v4041, %v4053
  %v4058 = vmul.f32 %v3620, %v4046
  %v4059 = vmul.f32 %v3621, %v4050
  %v4060 = vmul.f32 %v3622, %v4054
  %v4064 = vrot.slane %v4058, 1
  %v4065 = vrot.slane %v4059, 1
  %v4066 = vrot.slane %v4060, 1
  %v4070 = vadd.f32 %v3998, %v4064
  %v4071 = vadd.f32 %v3999, %v4065
  %v4072 = vadd.f32 %v4000, %v4066
  %v4073 = vmul.f32 %v3638, %v4046
  %v4074 = vmul.f32 %v3639, %v4050
  %v4075 = vmul.f32 %v3640, %v4054
  %v4079 = vrot.slane %v4073, 1
  %v4080 = vrot.slane %v4074, 1
  %v4081 = vrot.slane %v4075, 1
  %v4085 = vadd.f32 %v4004, %v4079
  %v4086 = vadd.f32 %v4005, %v4080
  %v4087 = vadd.f32 %v4006, %v4081
  %v4088 = vmul.f32 %v3656, %v4046
  %v4089 = vmul.f32 %v3657, %v4050
  %v4090 = vmul.f32 %v3658, %v4054
  %v4094 = vrot.slane %v4088, 1
  %v4095 = vrot.slane %v4089, 1
  %v4096 = vrot.slane %v4090, 1
  %v4100 = vadd.f32 %v4010, %v4094
  %v4101 = vadd.f32 %v4011, %v4095
  %v4102 = vadd.f32 %v4012, %v4096
  %v4103 = vmul.f32 %v3674, %v4046
  %v4104 = vmul.f32 %v3675, %v4050
  %v4105 = vmul.f32 %v3676, %v4054
  %v4109 = vrot.slane %v4103, 1
  %v4110 = vrot.slane %v4104, 1
  %v4111 = vrot.slane %v4105, 1
  %v4115 = vadd.f32 %v4016, %v4109
  %v4116 = vadd.f32 %v4017, %v4110
  %v4117 = vadd.f32 %v4018, %v4111
  %v4118 = vmul.f32 %v3692, %v4046
  %v4119 = vmul.f32 %v3693, %v4050
  %v4120 = vmul.f32 %v3694, %v4054
  %v4124 = vrot.slane %v4118, 1
  %v4125 = vrot.slane %v4119, 1
  %v4126 = vrot.slane %v4120, 1
  %v4130 = vadd.f32 %v4022, %v4124
  %v4131 = vadd.f32 %v4023, %v4125
  %v4132 = vadd.f32 %v4024, %v4126
  %v4133 = vmul.f32 %v3710, %v4046
  %v4134 = vmul.f32 %v3711, %v4050
  %v4135 = vmul.f32 %v3712, %v4054
  %v4139 = vrot.slane %v4133, 1
  %v4140 = vrot.slane %v4134, 1
  %v4141 = vrot.slane %v4135, 1
  %v4145 = vadd.f32 %v4028, %v4139
  %v4146 = vadd.f32 %v4029, %v4140
  %v4147 = vadd.f32 %v4030, %v4141
  %v4148 = vld [vmem:[%s710] sm:$0xfe]
  %v4149 = vld [vmem:[%s710 + $0x8] sm:$0xfe]
  %v4150 = vld [vmem:[%s710 + $0x10] sm:$0xfe]
  %v4151 = vmul.f32 %v4148, %v4046
  %v4152 = vmul.f32 %v4149, %v4050
  %v4153 = vmul.f32 %v4150, %v4054
  %v4157 = vrot.slane %v4151, 1
  %v4158 = vrot.slane %v4152, 1
  %v4159 = vrot.slane %v4153, 1
  %v4163 = vadd.f32 %v4037, %v4157
  %v4164 = vadd.f32 %v4038, %v4158
  %v4165 = vadd.f32 %v4039, %v4159
  %s4166 = scalar_lea.vmem %s1, 53
  %v4167 = vld [vmem:[%s4166] ss:$8 sm:$0x7]
  %v4169 = vlaneseq
  %v4170 = vshrl.u32 %v4169, 7
  %v4171 = vsub.s32 0, %v4170
  %v4172 = vrot.slane %v4167, %v4171
  %v4173 = vlaneseq
  %v4174 = vshrl.u32 %v4173, 7
  %v4175 = vsub.s32 1, %v4174
  %v4176 = vrot.slane %v4167, %v4175
  %v4177 = vlaneseq
  %v4178 = vshrl.u32 %v4177, 7
  %v4179 = vsub.s32 2, %v4178
  %v4180 = vrot.slane %v4167, %v4179
  %v4184 = vmul.f32 %v3779, %v4172
  %v4185 = vmul.f32 %v3780, %v4176
  %v4186 = vmul.f32 %v3781, %v4180
  %v4187 = vmul.f32 %v3782, %v4172
  %v4188 = vmul.f32 %v3783, %v4176
  %v4189 = vmul.f32 %v3784, %v4180
  %v4196 = vrot.slane %v4184, 2
  %v4197 = vrot.slane %v4187, 2
  %v4198 = vsel %vm442, %v4196, %v4197
  %v4199 = vrot.slane %v4185, 2
  %v4200 = vrot.slane %v4188, 2
  %v4201 = vsel %vm442, %v4199, %v4200
  %v4202 = vrot.slane %v4186, 2
  %v4203 = vrot.slane %v4189, 2
  %v4204 = vsel %vm442, %v4202, %v4203
  %v4208 = vadd.f32 %v4070, %v4198
  %v4209 = vadd.f32 %v4071, %v4201
  %v4210 = vadd.f32 %v4072, %v4204
  %v4211 = vmul.f32 %v3812, %v4172
  %v4212 = vmul.f32 %v3813, %v4176
  %v4213 = vmul.f32 %v3814, %v4180
  %v4214 = vmul.f32 %v3815, %v4172
  %v4215 = vmul.f32 %v3816, %v4176
  %v4216 = vmul.f32 %v3817, %v4180
  %v4223 = vrot.slane %v4211, 2
  %v4224 = vrot.slane %v4214, 2
  %v4225 = vsel %vm442, %v4223, %v4224
  %v4226 = vrot.slane %v4212, 2
  %v4227 = vrot.slane %v4215, 2
  %v4228 = vsel %vm442, %v4226, %v4227
  %v4229 = vrot.slane %v4213, 2
  %v4230 = vrot.slane %v4216, 2
  %v4231 = vsel %vm442, %v4229, %v4230
  %v4235 = vadd.f32 %v4085, %v4225
  %v4236 = vadd.f32 %v4086, %v4228
  %v4237 = vadd.f32 %v4087, %v4231
  %v4238 = vmul.f32 %v3845, %v4172
  %v4239 = vmul.f32 %v3846, %v4176
  %v4240 = vmul.f32 %v3847, %v4180
  %v4241 = vmul.f32 %v3848, %v4172
  %v4242 = vmul.f32 %v3849, %v4176
  %v4243 = vmul.f32 %v3850, %v4180
  %v4250 = vrot.slane %v4238, 2
  %v4251 = vrot.slane %v4241, 2
  %v4252 = vsel %vm442, %v4250, %v4251
  %v4253 = vrot.slane %v4239, 2
  %v4254 = vrot.slane %v4242, 2
  %v4255 = vsel %vm442, %v4253, %v4254
  %v4256 = vrot.slane %v4240, 2
  %v4257 = vrot.slane %v4243, 2
  %v4258 = vsel %vm442, %v4256, %v4257
  %v4262 = vadd.f32 %v4100, %v4252
  %v4263 = vadd.f32 %v4101, %v4255
  %v4264 = vadd.f32 %v4102, %v4258
  %v4265 = vmul.f32 %v3878, %v4172
  %v4266 = vmul.f32 %v3879, %v4176
  %v4267 = vmul.f32 %v3880, %v4180
  %v4268 = vmul.f32 %v3881, %v4172
  %v4269 = vmul.f32 %v3882, %v4176
  %v4270 = vmul.f32 %v3883, %v4180
  %v4277 = vrot.slane %v4265, 2
  %v4278 = vrot.slane %v4268, 2
  %v4279 = vsel %vm442, %v4277, %v4278
  %v4280 = vrot.slane %v4266, 2
  %v4281 = vrot.slane %v4269, 2
  %v4282 = vsel %vm442, %v4280, %v4281
  %v4283 = vrot.slane %v4267, 2
  %v4284 = vrot.slane %v4270, 2
  %v4285 = vsel %vm442, %v4283, %v4284
  %v4289 = vadd.f32 %v4115, %v4279
  %v4290 = vadd.f32 %v4116, %v4282
  %v4291 = vadd.f32 %v4117, %v4285
  %v4292 = vmul.f32 %v3911, %v4172
  %v4293 = vmul.f32 %v3912, %v4176
  %v4294 = vmul.f32 %v3913, %v4180
  %v4295 = vmul.f32 %v3914, %v4172
  %v4296 = vmul.f32 %v3915, %v4176
  %v4297 = vmul.f32 %v3916, %v4180
  %v4304 = vrot.slane %v4292, 2
  %v4305 = vrot.slane %v4295, 2
  %v4306 = vsel %vm442, %v4304, %v4305
  %v4307 = vrot.slane %v4293, 2
  %v4308 = vrot.slane %v4296, 2
  %v4309 = vsel %vm442, %v4307, %v4308
  %v4310 = vrot.slane %v4294, 2
  %v4311 = vrot.slane %v4297, 2
  %v4312 = vsel %vm442, %v4310, %v4311
  %v4316 = vadd.f32 %v4130, %v4306
  %v4317 = vadd.f32 %v4131, %v4309
  %v4318 = vadd.f32 %v4132, %v4312
  %v4319 = vmul.f32 %v3944, %v4172
  %v4320 = vmul.f32 %v3945, %v4176
  %v4321 = vmul.f32 %v3946, %v4180
  %v4322 = vmul.f32 %v3947, %v4172
  %v4323 = vmul.f32 %v3948, %v4176
  %v4324 = vmul.f32 %v3949, %v4180
  %v4331 = vrot.slane %v4319, 2
  %v4332 = vrot.slane %v4322, 2
  %v4333 = vsel %vm442, %v4331, %v4332
  %v4334 = vrot.slane %v4320, 2
  %v4335 = vrot.slane %v4323, 2
  %v4336 = vsel %vm442, %v4334, %v4335
  %v4337 = vrot.slane %v4321, 2
  %v4338 = vrot.slane %v4324, 2
  %v4339 = vsel %vm442, %v4337, %v4338
  %v4343 = vadd.f32 %v4145, %v4333
  %v4344 = vadd.f32 %v4146, %v4336
  %v4345 = vadd.f32 %v4147, %v4339
  %v4346 = vld [vmem:[%s710] sm:$0xfc]
  %v4347 = vld [vmem:[%s710 + $0x8] sm:$0xfc]
  %v4348 = vld [vmem:[%s710 + $0x10] sm:$0xfc]
  %v4349 = vld [vmem:[%s710 + $0x18] sm:$0x1]
  %v4350 = vld [vmem:[%s710 + $0x20] sm:$0x1]
  %v4351 = vld [vmem:[%s710 + $0x28] sm:$0x1]
  %v4352 = vmul.f32 %v4346, %v4172
  %v4353 = vmul.f32 %v4347, %v4176
  %v4354 = vmul.f32 %v4348, %v4180
  %v4355 = vmul.f32 %v4349, %v4172
  %v4356 = vmul.f32 %v4350, %v4176
  %v4357 = vmul.f32 %v4351, %v4180
  %v4364 = vrot.slane %v4352, 2
  %v4365 = vrot.slane %v4355, 2
  %v4366 = vsel %vm442, %v4364, %v4365
  %v4367 = vrot.slane %v4353, 2
  %v4368 = vrot.slane %v4356, 2
  %v4369 = vsel %vm442, %v4367, %v4368
  %v4370 = vrot.slane %v4354, 2
  %v4371 = vrot.slane %v4357, 2
  %v4372 = vsel %vm442, %v4370, %v4371
  %v4376 = vadd.f32 %v4163, %v4366
  %v4377 = vadd.f32 %v4164, %v4369
  %v4378 = vadd.f32 %v4165, %v4372
  %s4379 = scalar_lea.vmem %s1, 54
  %v4380 = vld [vmem:[%s4379] ss:$8 sm:$0x7]
  %v4382 = vlaneseq
  %v4383 = vshrl.u32 %v4382, 7
  %v4384 = vsub.s32 0, %v4383
  %v4385 = vrot.slane %v4380, %v4384
  %v4386 = vlaneseq
  %v4387 = vshrl.u32 %v4386, 7
  %v4388 = vsub.s32 1, %v4387
  %v4389 = vrot.slane %v4380, %v4388
  %v4390 = vlaneseq
  %v4391 = vshrl.u32 %v4390, 7
  %v4392 = vsub.s32 2, %v4391
  %v4393 = vrot.slane %v4380, %v4392
  %v4397 = vmul.f32 %v3539, %v4385
  %v4398 = vmul.f32 %v3540, %v4389
  %v4399 = vmul.f32 %v3541, %v4393
  %v4400 = vadd.f32 %v4208, %v4397
  %v4401 = vadd.f32 %v4209, %v4398
  %v4402 = vadd.f32 %v4210, %v4399
  %v4403 = vmul.f32 %v3548, %v4385
  %v4404 = vmul.f32 %v3549, %v4389
  %v4405 = vmul.f32 %v3550, %v4393
  %v4406 = vadd.f32 %v4235, %v4403
  %v4407 = vadd.f32 %v4236, %v4404
  %v4408 = vadd.f32 %v4237, %v4405
  %v4409 = vmul.f32 %v3557, %v4385
  %v4410 = vmul.f32 %v3558, %v4389
  %v4411 = vmul.f32 %v3559, %v4393
  %v4412 = vadd.f32 %v4262, %v4409
  %v4413 = vadd.f32 %v4263, %v4410
  %v4414 = vadd.f32 %v4264, %v4411
  %v4415 = vmul.f32 %v3566, %v4385
  %v4416 = vmul.f32 %v3567, %v4389
  %v4417 = vmul.f32 %v3568, %v4393
  %v4418 = vadd.f32 %v4289, %v4415
  %v4419 = vadd.f32 %v4290, %v4416
  %v4420 = vadd.f32 %v4291, %v4417
  %v4421 = vmul.f32 %v3575, %v4385
  %v4422 = vmul.f32 %v3576, %v4389
  %v4423 = vmul.f32 %v3577, %v4393
  %v4424 = vadd.f32 %v4316, %v4421
  %v4425 = vadd.f32 %v4317, %v4422
  %v4426 = vadd.f32 %v4318, %v4423
  %v4427 = vmul.f32 %v4031, %v4385
  %v4428 = vmul.f32 %v4032, %v4389
  %v4429 = vmul.f32 %v4033, %v4393
  %v4430 = vadd.f32 %v4343, %v4427
  %v4431 = vadd.f32 %v4344, %v4428
  %v4432 = vadd.f32 %v4345, %v4429
  %v4433 = vld [vmem:[%s1113] sm:$0x7f]
  %v4434 = vld [vmem:[%s1113 + $0x8] sm:$0x7f]
  %v4435 = vld [vmem:[%s1113 + $0x10] sm:$0x7f]
  %v4436 = vmul.f32 %v4433, %v4385
  %v4437 = vmul.f32 %v4434, %v4389
  %v4438 = vmul.f32 %v4435, %v4393
  %v4439 = vadd.f32 %v4376, %v4436
  %v4440 = vadd.f32 %v4377, %v4437
  %v4441 = vadd.f32 %v4378, %v4438
  %s4442 = scalar_lea.vmem %s1, 55
  %v4443 = vld [vmem:[%s4442] ss:$8 sm:$0x7]
  %v4445 = vlaneseq
  %v4446 = vshrl.u32 %v4445, 7
  %v4447 = vsub.s32 0, %v4446
  %v4448 = vrot.slane %v4443, %v4447
  %v4449 = vlaneseq
  %v4450 = vshrl.u32 %v4449, 7
  %v4451 = vsub.s32 1, %v4450
  %v4452 = vrot.slane %v4443, %v4451
  %v4453 = vlaneseq
  %v4454 = vshrl.u32 %v4453, 7
  %v4455 = vsub.s32 2, %v4454
  %v4456 = vrot.slane %v4443, %v4455
  %v4460 = vmul.f32 %v3638, %v4448
  %v4461 = vmul.f32 %v3639, %v4452
  %v4462 = vmul.f32 %v3640, %v4456
  %v4466 = vrot.slane %v4460, 1
  %v4467 = vrot.slane %v4461, 1
  %v4468 = vrot.slane %v4462, 1
  %v4472 = vadd.f32 %v4400, %v4466
  %v4473 = vadd.f32 %v4401, %v4467
  %v4474 = vadd.f32 %v4402, %v4468
  %v4475 = vmul.f32 %v3656, %v4448
  %v4476 = vmul.f32 %v3657, %v4452
  %v4477 = vmul.f32 %v3658, %v4456
  %v4481 = vrot.slane %v4475, 1
  %v4482 = vrot.slane %v4476, 1
  %v4483 = vrot.slane %v4477, 1
  %v4487 = vadd.f32 %v4406, %v4481
  %v4488 = vadd.f32 %v4407, %v4482
  %v4489 = vadd.f32 %v4408, %v4483
  %v4490 = vmul.f32 %v3674, %v4448
  %v4491 = vmul.f32 %v3675, %v4452
  %v4492 = vmul.f32 %v3676, %v4456
  %v4496 = vrot.slane %v4490, 1
  %v4497 = vrot.slane %v4491, 1
  %v4498 = vrot.slane %v4492, 1
  %v4502 = vadd.f32 %v4412, %v4496
  %v4503 = vadd.f32 %v4413, %v4497
  %v4504 = vadd.f32 %v4414, %v4498
  %v4505 = vmul.f32 %v3692, %v4448
  %v4506 = vmul.f32 %v3693, %v4452
  %v4507 = vmul.f32 %v3694, %v4456
  %v4511 = vrot.slane %v4505, 1
  %v4512 = vrot.slane %v4506, 1
  %v4513 = vrot.slane %v4507, 1
  %v4517 = vadd.f32 %v4418, %v4511
  %v4518 = vadd.f32 %v4419, %v4512
  %v4519 = vadd.f32 %v4420, %v4513
  %v4520 = vmul.f32 %v3710, %v4448
  %v4521 = vmul.f32 %v3711, %v4452
  %v4522 = vmul.f32 %v3712, %v4456
  %v4526 = vrot.slane %v4520, 1
  %v4527 = vrot.slane %v4521, 1
  %v4528 = vrot.slane %v4522, 1
  %v4532 = vadd.f32 %v4424, %v4526
  %v4533 = vadd.f32 %v4425, %v4527
  %v4534 = vadd.f32 %v4426, %v4528
  %v4535 = vmul.f32 %v4148, %v4448
  %v4536 = vmul.f32 %v4149, %v4452
  %v4537 = vmul.f32 %v4150, %v4456
  %v4541 = vrot.slane %v4535, 1
  %v4542 = vrot.slane %v4536, 1
  %v4543 = vrot.slane %v4537, 1
  %v4547 = vadd.f32 %v4430, %v4541
  %v4548 = vadd.f32 %v4431, %v4542
  %v4549 = vadd.f32 %v4432, %v4543
  %v4550 = vld [vmem:[%s1113] sm:$0xfe]
  %v4551 = vld [vmem:[%s1113 + $0x8] sm:$0xfe]
  %v4552 = vld [vmem:[%s1113 + $0x10] sm:$0xfe]
  %v4553 = vmul.f32 %v4550, %v4448
  %v4554 = vmul.f32 %v4551, %v4452
  %v4555 = vmul.f32 %v4552, %v4456
  %v4559 = vrot.slane %v4553, 1
  %v4560 = vrot.slane %v4554, 1
  %v4561 = vrot.slane %v4555, 1
  %v4565 = vadd.f32 %v4439, %v4559
  %v4566 = vadd.f32 %v4440, %v4560
  %v4567 = vadd.f32 %v4441, %v4561
  %s4568 = scalar_lea.vmem %s1, 120
  %v4569 = vld [vmem:[%s4568] ss:$8 sm:$0x7]
  %v4571 = vlaneseq
  %v4572 = vshrl.u32 %v4571, 7
  %v4573 = vsub.s32 0, %v4572
  %v4574 = vrot.slane %v4569, %v4573
  %v4575 = vlaneseq
  %v4576 = vshrl.u32 %v4575, 7
  %v4577 = vsub.s32 1, %v4576
  %v4578 = vrot.slane %v4569, %v4577
  %v4579 = vlaneseq
  %v4580 = vshrl.u32 %v4579, 7
  %v4581 = vsub.s32 2, %v4580
  %v4582 = vrot.slane %v4569, %v4581
  %v4586 = vmul.f32 %v3812, %v4574
  %v4587 = vmul.f32 %v3813, %v4578
  %v4588 = vmul.f32 %v3814, %v4582
  %v4589 = vmul.f32 %v3815, %v4574
  %v4590 = vmul.f32 %v3816, %v4578
  %v4591 = vmul.f32 %v3817, %v4582
  %v4598 = vrot.slane %v4586, 2
  %v4599 = vrot.slane %v4589, 2
  %v4600 = vsel %vm442, %v4598, %v4599
  %v4601 = vrot.slane %v4587, 2
  %v4602 = vrot.slane %v4590, 2
  %v4603 = vsel %vm442, %v4601, %v4602
  %v4604 = vrot.slane %v4588, 2
  %v4605 = vrot.slane %v4591, 2
  %v4606 = vsel %vm442, %v4604, %v4605
  %v4610 = vadd.f32 %v4472, %v4600
  %v4611 = vadd.f32 %v4473, %v4603
  %v4612 = vadd.f32 %v4474, %v4606
  %v4613 = vmul.f32 %v3845, %v4574
  %v4614 = vmul.f32 %v3846, %v4578
  %v4615 = vmul.f32 %v3847, %v4582
  %v4616 = vmul.f32 %v3848, %v4574
  %v4617 = vmul.f32 %v3849, %v4578
  %v4618 = vmul.f32 %v3850, %v4582
  %v4625 = vrot.slane %v4613, 2
  %v4626 = vrot.slane %v4616, 2
  %v4627 = vsel %vm442, %v4625, %v4626
  %v4628 = vrot.slane %v4614, 2
  %v4629 = vrot.slane %v4617, 2
  %v4630 = vsel %vm442, %v4628, %v4629
  %v4631 = vrot.slane %v4615, 2
  %v4632 = vrot.slane %v4618, 2
  %v4633 = vsel %vm442, %v4631, %v4632
  %v4637 = vadd.f32 %v4487, %v4627
  %v4638 = vadd.f32 %v4488, %v4630
  %v4639 = vadd.f32 %v4489, %v4633
  %v4640 = vmul.f32 %v3878, %v4574
  %v4641 = vmul.f32 %v3879, %v4578
  %v4642 = vmul.f32 %v3880, %v4582
  %v4643 = vmul.f32 %v3881, %v4574
  %v4644 = vmul.f32 %v3882, %v4578
  %v4645 = vmul.f32 %v3883, %v4582
  %v4652 = vrot.slane %v4640, 2
  %v4653 = vrot.slane %v4643, 2
  %v4654 = vsel %vm442, %v4652, %v4653
  %v4655 = vrot.slane %v4641, 2
  %v4656 = vrot.slane %v4644, 2
  %v4657 = vsel %vm442, %v4655, %v4656
  %v4658 = vrot.slane %v4642, 2
  %v4659 = vrot.slane %v4645, 2
  %v4660 = vsel %vm442, %v4658, %v4659
  %v4664 = vadd.f32 %v4502, %v4654
  %v4665 = vadd.f32 %v4503, %v4657
  %v4666 = vadd.f32 %v4504, %v4660
  %v4667 = vmul.f32 %v3911, %v4574
  %v4668 = vmul.f32 %v3912, %v4578
  %v4669 = vmul.f32 %v3913, %v4582
  %v4670 = vmul.f32 %v3914, %v4574
  %v4671 = vmul.f32 %v3915, %v4578
  %v4672 = vmul.f32 %v3916, %v4582
  %v4679 = vrot.slane %v4667, 2
  %v4680 = vrot.slane %v4670, 2
  %v4681 = vsel %vm442, %v4679, %v4680
  %v4682 = vrot.slane %v4668, 2
  %v4683 = vrot.slane %v4671, 2
  %v4684 = vsel %vm442, %v4682, %v4683
  %v4685 = vrot.slane %v4669, 2
  %v4686 = vrot.slane %v4672, 2
  %v4687 = vsel %vm442, %v4685, %v4686
  %v4691 = vadd.f32 %v4517, %v4681
  %v4692 = vadd.f32 %v4518, %v4684
  %v4693 = vadd.f32 %v4519, %v4687
  %v4694 = vmul.f32 %v3944, %v4574
  %v4695 = vmul.f32 %v3945, %v4578
  %v4696 = vmul.f32 %v3946, %v4582
  %v4697 = vmul.f32 %v3947, %v4574
  %v4698 = vmul.f32 %v3948, %v4578
  %v4699 = vmul.f32 %v3949, %v4582
  %v4706 = vrot.slane %v4694, 2
  %v4707 = vrot.slane %v4697, 2
  %v4708 = vsel %vm442, %v4706, %v4707
  %v4709 = vrot.slane %v4695, 2
  %v4710 = vrot.slane %v4698, 2
  %v4711 = vsel %vm442, %v4709, %v4710
  %v4712 = vrot.slane %v4696, 2
  %v4713 = vrot.slane %v4699, 2
  %v4714 = vsel %vm442, %v4712, %v4713
  %v4718 = vadd.f32 %v4532, %v4708
  %v4719 = vadd.f32 %v4533, %v4711
  %v4720 = vadd.f32 %v4534, %v4714
  %v4721 = vmul.f32 %v4346, %v4574
  %v4722 = vmul.f32 %v4347, %v4578
  %v4723 = vmul.f32 %v4348, %v4582
  %v4724 = vmul.f32 %v4349, %v4574
  %v4725 = vmul.f32 %v4350, %v4578
  %v4726 = vmul.f32 %v4351, %v4582
  %v4733 = vrot.slane %v4721, 2
  %v4734 = vrot.slane %v4724, 2
  %v4735 = vsel %vm442, %v4733, %v4734
  %v4736 = vrot.slane %v4722, 2
  %v4737 = vrot.slane %v4725, 2
  %v4738 = vsel %vm442, %v4736, %v4737
  %v4739 = vrot.slane %v4723, 2
  %v4740 = vrot.slane %v4726, 2
  %v4741 = vsel %vm442, %v4739, %v4740
  %v4745 = vadd.f32 %v4547, %v4735
  %v4746 = vadd.f32 %v4548, %v4738
  %v4747 = vadd.f32 %v4549, %v4741
  %v4748 = vld [vmem:[%s1113] sm:$0xfc]
  %v4749 = vld [vmem:[%s1113 + $0x8] sm:$0xfc]
  %v4750 = vld [vmem:[%s1113 + $0x10] sm:$0xfc]
  %v4751 = vld [vmem:[%s1113 + $0x18] sm:$0x1]
  %v4752 = vld [vmem:[%s1113 + $0x20] sm:$0x1]
  %v4753 = vld [vmem:[%s1113 + $0x28] sm:$0x1]
  %v4754 = vmul.f32 %v4748, %v4574
  %v4755 = vmul.f32 %v4749, %v4578
  %v4756 = vmul.f32 %v4750, %v4582
  %v4757 = vmul.f32 %v4751, %v4574
  %v4758 = vmul.f32 %v4752, %v4578
  %v4759 = vmul.f32 %v4753, %v4582
  %v4766 = vrot.slane %v4754, 2
  %v4767 = vrot.slane %v4757, 2
  %v4768 = vsel %vm442, %v4766, %v4767
  %v4769 = vrot.slane %v4755, 2
  %v4770 = vrot.slane %v4758, 2
  %v4771 = vsel %vm442, %v4769, %v4770
  %v4772 = vrot.slane %v4756, 2
  %v4773 = vrot.slane %v4759, 2
  %v4774 = vsel %vm442, %v4772, %v4773
  %v4778 = vadd.f32 %v4565, %v4768
  %v4779 = vadd.f32 %v4566, %v4771
  %v4780 = vadd.f32 %v4567, %v4774
  %v4781 = vmul.f32 %v4610, %v4610
  %v4782 = vmul.f32 %v4611, %v4611
  %v4783 = vmul.f32 %v4612, %v4612
  %v4784 = vadd.f32 %v4610, %v4637
  %v4785 = vadd.f32 %v4611, %v4638
  %v4786 = vadd.f32 %v4612, %v4639
  %v4787 = vmul.f32 %v4637, %v4637
  %v4788 = vmul.f32 %v4638, %v4638
  %v4789 = vmul.f32 %v4639, %v4639
  %v4790 = vadd.f32 %v4781, %v4787
  %v4791 = vadd.f32 %v4782, %v4788
  %v4792 = vadd.f32 %v4783, %v4789
  %v4793 = vadd.f32 %v4784, %v4664
  %v4794 = vadd.f32 %v4785, %v4665
  %v4795 = vadd.f32 %v4786, %v4666
  %v4796 = vmul.f32 %v4664, %v4664
  %v4797 = vmul.f32 %v4665, %v4665
  %v4798 = vmul.f32 %v4666, %v4666
  %v4799 = vadd.f32 %v4790, %v4796
  %v4800 = vadd.f32 %v4791, %v4797
  %v4801 = vadd.f32 %v4792, %v4798
  %v4802 = vadd.f32 %v4793, %v4691
  %v4803 = vadd.f32 %v4794, %v4692
  %v4804 = vadd.f32 %v4795, %v4693
  %v4805 = vmul.f32 %v4691, %v4691
  %v4806 = vmul.f32 %v4692, %v4692
  %v4807 = vmul.f32 %v4693, %v4693
  %v4808 = vadd.f32 %v4799, %v4805
  %v4809 = vadd.f32 %v4800, %v4806
  %v4810 = vadd.f32 %v4801, %v4807
  %v4811 = vadd.f32 %v4802, %v4718
  %v4812 = vadd.f32 %v4803, %v4719
  %v4813 = vadd.f32 %v4804, %v4720
  %v4814 = vmul.f32 %v4718, %v4718
  %v4815 = vmul.f32 %v4719, %v4719
  %v4816 = vmul.f32 %v4720, %v4720
  %v4817 = vadd.f32 %v4808, %v4814
  %v4818 = vadd.f32 %v4809, %v4815
  %v4819 = vadd.f32 %v4810, %v4816
  %v4820 = vadd.f32 %v4811, %v4745
  %v4821 = vadd.f32 %v4812, %v4746
  %v4822 = vadd.f32 %v4813, %v4747
  %v4823 = vmul.f32 %v4745, %v4745
  %v4824 = vmul.f32 %v4746, %v4746
  %v4825 = vmul.f32 %v4747, %v4747
  %v4826 = vadd.f32 %v4817, %v4823
  %v4827 = vadd.f32 %v4818, %v4824
  %v4828 = vadd.f32 %v4819, %v4825
  %v4829 = vadd.f32 %v4820, %v4778
  %v4830 = vadd.f32 %v4821, %v4779
  %v4831 = vadd.f32 %v4822, %v4780
  %v4832 = vmul.f32 %v4778, %v4778
  %v4833 = vmul.f32 %v4779, %v4779
  %v4834 = vmul.f32 %v4780, %v4780
  %v4835 = vadd.f32 %v4826, %v4832
  %v4836 = vadd.f32 %v4827, %v4833
  %v4837 = vadd.f32 %v4828, %v4834
  %v4838 = vsel %vm1519, %v4829, 0.0
  %v4839 = vrot.slane %v4838, 4
  %v4840 = vadd.f32 %v4838, %v4839
  %v4841 = vrot.slane %v4840, 2
  %v4842 = vadd.f32 %v4840, %v4841
  %v4843 = vrot.slane %v4842, 1
  %v4844 = vadd.f32 %v4842, %v4843
  %v4845 = vsel %vm1519, %v4830, 0.0
  %v4846 = vrot.slane %v4845, 4
  %v4847 = vadd.f32 %v4845, %v4846
  %v4848 = vrot.slane %v4847, 2
  %v4849 = vadd.f32 %v4847, %v4848
  %v4850 = vrot.slane %v4849, 1
  %v4851 = vadd.f32 %v4849, %v4850
  %v4852 = vsel %vm1519, %v4831, 0.0
  %v4853 = vrot.slane %v4852, 4
  %v4854 = vadd.f32 %v4852, %v4853
  %v4855 = vrot.slane %v4854, 2
  %v4856 = vadd.f32 %v4854, %v4855
  %v4857 = vrot.slane %v4856, 1
  %v4858 = vadd.f32 %v4856, %v4857
  %v4859 = vsel %vm1519, %v4835, 0.0
  %v4860 = vrot.slane %v4859, 4
  %v4861 = vadd.f32 %v4859, %v4860
  %v4862 = vrot.slane %v4861, 2
  %v4863 = vadd.f32 %v4861, %v4862
  %v4864 = vrot.slane %v4863, 1
  %v4865 = vadd.f32 %v4863, %v4864
  %v4866 = vsel %vm1519, %v4836, 0.0
  %v4867 = vrot.slane %v4866, 4
  %v4868 = vadd.f32 %v4866, %v4867
  %v4869 = vrot.slane %v4868, 2
  %v4870 = vadd.f32 %v4868, %v4869
  %v4871 = vrot.slane %v4870, 1
  %v4872 = vadd.f32 %v4870, %v4871
  %v4873 = vsel %vm1519, %v4837, 0.0
  %v4874 = vrot.slane %v4873, 4
  %v4875 = vadd.f32 %v4873, %v4874
  %v4876 = vrot.slane %v4875, 2
  %v4877 = vadd.f32 %v4875, %v4876
  %v4878 = vrot.slane %v4877, 1
  %v4879 = vadd.f32 %v4877, %v4878
  %v4880 = vmul.f32 %v4844, 0.020408163
  %v4881 = vmul.f32 %v4851, 0.020408163
  %v4882 = vmul.f32 %v4858, 0.020408163
  %v4883 = vmul.f32 %v4865, 0.020408163
  %v4884 = vmul.f32 %v4872, 0.020408163
  %v4885 = vmul.f32 %v4879, 0.020408163
  %v4886 = vmul.f32 %v4880, %v4880
  %v4887 = vmul.f32 %v4881, %v4881
  %v4888 = vmul.f32 %v4882, %v4882
  %v4889 = vsub.f32 %v4883, %v4886
  %v4890 = vsub.f32 %v4884, %v4887
  %v4891 = vsub.f32 %v4885, %v4888
  %v4892 = vadd.f32 %v4889, 1e-05
  %v4893 = vadd.f32 %v4890, 1e-05
  %v4894 = vadd.f32 %v4891, 1e-05
  %v4895 = vrsqrt.pop %v4892
  %v4896 = vrsqrt.pop %v4893
  %v4897 = vrsqrt.pop %v4894
  %v4898 = vld [vmem:[%s2 + $0x6] sm:$0x7]
  %v4902 = vcombine.low %v4895, %v4896
  %v4904 = vunpack.c.l.s4 1966171168
  %v4905 = vunpack.c.0.s8 %v4904
  %v4906 = vlaneseq
  %v4907 = vshrl.u32 %v4906, 7
  %v4908 = vsub.s32 %v4905, %v4907
  %v4909 = vrot.slane %v4902, %v4908
  %v4911 = vunpack.c.l.s4 1966171168
  %v4912 = vunpack.c.0.s8 %v4911
  %v4913 = vlaneseq
  %v4914 = vshrl.u32 %v4913, 7
  %v4915 = vsub.s32 %v4912, %v4914
  %v4916 = vrot.slane %v4897, %v4915
  %v4917 = vcombine.low %v4909, %v4916
  %v4919 = vunpack.c.l.s4 1966171168
  %v4920 = vunpack.c.0.s8 %v4919
  %v4921 = vlaneseq
  %v4922 = vshrl.u32 %v4921, 7
  %v4923 = vsub.s32 %v4920, %v4922
  %v4924 = vrot.slane %v4917, %v4923
  %v4926 = vmul.f32 %v4898, %v4924
  %v4927 = vld [vmem:[%s3 + $0x6] sm:$0x7]
  %v4929 = vlaneseq
  %v4930 = vshrl.u32 %v4929, 7
  %v4931 = vsub.s32 0, %v4930
  %v4932 = vrot.slane %v4926, %v4931
  %v4933 = vlaneseq
  %v4934 = vshrl.u32 %v4933, 7
  %v4935 = vsub.s32 1, %v4934
  %v4936 = vrot.slane %v4926, %v4935
  %v4937 = vlaneseq
  %v4938 = vshrl.u32 %v4937, 7
  %v4939 = vsub.s32 2, %v4938
  %v4940 = vrot.slane %v4926, %v4939
  %v4944 = vmul.f32 %v4880, %v4932
  %v4945 = vmul.f32 %v4881, %v4936
  %v4946 = vmul.f32 %v4882, %v4940
  %v4950 = vcombine.low %v4944, %v4945
  %v4952 = vunpack.c.l.s4 1966171168
  %v4953 = vunpack.c.0.s8 %v4952
  %v4954 = vlaneseq
  %v4955 = vshrl.u32 %v4954, 7
  %v4956 = vsub.s32 %v4953, %v4955
  %v4957 = vrot.slane %v4950, %v4956
  %v4959 = vunpack.c.l.s4 1966171168
  %v4960 = vunpack.c.0.s8 %v4959
  %v4961 = vlaneseq
  %v4962 = vshrl.u32 %v4961, 7
  %v4963 = vsub.s32 %v4960, %v4962
  %v4964 = vrot.slane %v4946, %v4963
  %v4965 = vcombine.low %v4957, %v4964
  %v4967 = vunpack.c.l.s4 1966171168
  %v4968 = vunpack.c.0.s8 %v4967
  %v4969 = vlaneseq
  %v4970 = vshrl.u32 %v4969, 7
  %v4971 = vsub.s32 %v4968, %v4970
  %v4972 = vrot.slane %v4965, %v4971
  %v4974 = vsub.f32 %v4927, %v4972
  %v4976 = vlaneseq
  %v4977 = vshrl.u32 %v4976, 7
  %v4978 = vsub.s32 0, %v4977
  %v4979 = vrot.slane %v4974, %v4978
  %v4980 = vlaneseq
  %v4981 = vshrl.u32 %v4980, 7
  %v4982 = vsub.s32 1, %v4981
  %v4983 = vrot.slane %v4974, %v4982
  %v4984 = vlaneseq
  %v4985 = vshrl.u32 %v4984, 7
  %v4986 = vsub.s32 2, %v4985
  %v4987 = vrot.slane %v4974, %v4986
  %v4991 = vmul.f32 %v4610, %v4932
  %v4992 = vmul.f32 %v4611, %v4936
  %v4993 = vmul.f32 %v4612, %v4940
  %v4994 = vadd.f32 %v4991, %v4979
  %v4995 = vadd.f32 %v4992, %v4983
  %v4996 = vadd.f32 %v4993, %v4987
  %4997 = vst [vmem:[%s4 + $0x30] sm:$0x7f] %v4994
  %4998 = vst [vmem:[%s4 + $0x38] sm:$0x7f] %v4995
  %4999 = vst [vmem:[%s4 + $0x40] sm:$0x7f] %v4996
  %v5000 = vmul.f32 %v4637, %v4932
  %v5001 = vmul.f32 %v4638, %v4936
  %v5002 = vmul.f32 %v4639, %v4940
  %v5003 = vadd.f32 %v5000, %v4979
  %v5004 = vadd.f32 %v5001, %v4983
  %v5005 = vadd.f32 %v5002, %v4987
  %5006 = vst [vmem:[%s1688 + $0x30] sm:$0x7f] %v5003
  %5007 = vst [vmem:[%s1688 + $0x38] sm:$0x7f] %v5004
  %5008 = vst [vmem:[%s1688 + $0x40] sm:$0x7f] %v5005
  %v5009 = vmul.f32 %v4664, %v4932
  %v5010 = vmul.f32 %v4665, %v4936
  %v5011 = vmul.f32 %v4666, %v4940
  %v5012 = vadd.f32 %v5009, %v4979
  %v5013 = vadd.f32 %v5010, %v4983
  %v5014 = vadd.f32 %v5011, %v4987
  %5015 = vst [vmem:[%s1698 + $0x30] sm:$0x7f] %v5012
  %5016 = vst [vmem:[%s1698 + $0x38] sm:$0x7f] %v5013
  %5017 = vst [vmem:[%s1698 + $0x40] sm:$0x7f] %v5014
  %v5018 = vmul.f32 %v4691, %v4932
  %v5019 = vmul.f32 %v4692, %v4936
  %v5020 = vmul.f32 %v4693, %v4940
  %v5021 = vadd.f32 %v5018, %v4979
  %v5022 = vadd.f32 %v5019, %v4983
  %v5023 = vadd.f32 %v5020, %v4987
  %5024 = vst [vmem:[%s1708 + $0x30] sm:$0x7f] %v5021
  %5025 = vst [vmem:[%s1708 + $0x38] sm:$0x7f] %v5022
  %5026 = vst [vmem:[%s1708 + $0x40] sm:$0x7f] %v5023
  %v5027 = vmul.f32 %v4718, %v4932
  %v5028 = vmul.f32 %v4719, %v4936
  %v5029 = vmul.f32 %v4720, %v4940
  %v5030 = vadd.f32 %v5027, %v4979
  %v5031 = vadd.f32 %v5028, %v4983
  %v5032 = vadd.f32 %v5029, %v4987
  %5033 = vst [vmem:[%s1718 + $0x30] sm:$0x7f] %v5030
  %5034 = vst [vmem:[%s1718 + $0x38] sm:$0x7f] %v5031
  %5035 = vst [vmem:[%s1718 + $0x40] sm:$0x7f] %v5032
  %v5036 = vmul.f32 %v4745, %v4932
  %v5037 = vmul.f32 %v4746, %v4936
  %v5038 = vmul.f32 %v4747, %v4940
  %v5039 = vadd.f32 %v5036, %v4979
  %v5040 = vadd.f32 %v5037, %v4983
  %v5041 = vadd.f32 %v5038, %v4987
  %5042 = vst [vmem:[%s1728 + $0x30] sm:$0x7f] %v5039
  %5043 = vst [vmem:[%s1728 + $0x38] sm:$0x7f] %v5040
  %5044 = vst [vmem:[%s1728 + $0x40] sm:$0x7f] %v5041
  %v5045 = vmul.f32 %v4778, %v4932
  %v5046 = vmul.f32 %v4779, %v4936
  %v5047 = vmul.f32 %v4780, %v4940
  %v5048 = vadd.f32 %v5045, %v4979
  %v5049 = vadd.f32 %v5046, %v4983
  %v5050 = vadd.f32 %v5047, %v4987
  %5051 = vst [vmem:[%s1738 + $0x30] sm:$0x7f] %v5048
  %5052 = vst [vmem:[%s1738 + $0x38] sm:$0x7f] %v5049
  %5053 = vst [vmem:[%s1738 + $0x40] sm:$0x7f] %v5050
  // Predicated region
  $region18: #{dwconv_bn.1} parent=0 // pred_check
    _
  $region19: #{dwconv_bn.1} parent=0 // pred_check_branch
    %5055 = sbr.rel (0) target = $region21
  $region20: #{dwconv_bn.1} parent=0 // pred_region
    _
  $region21: #{dwconv_bn.1} parent=0 // pred_fallthru
    _
  // Predicated region
  $region22: #{dwconv_bn.1} parent=0 // pred_check
    _
  $region23: #{dwconv_bn.1} parent=0 // pred_check_branch
    %5057 = sbr.rel (0) target = $region25
  $region24: #{dwconv_bn.1} parent=0 // pred_region
    _
  $region25: #{dwconv_bn.1} parent=0 // pred_fallthru
    _

</llo_original>
